<compile_context>
chip_gen: v6e
topology: v6e:2x2x1
jax: 0.10.0
libtpu: 0.0.40
codegen_flags: <defaults>
</compile_context>

<pallas_src>
import jax
import jax.numpy as jnp
import numpy as np
from jax.experimental import pallas as pl
from jax.experimental.pallas import tpu as pltpu


def _round_up(x, m):
    return ((x + m - 1) // m) * m


def lstm_kernel(x_ref, w_ih_ref, w_hh_ref, b_ref, w_fc_ref, b_fc_ref,
                out_ref, h_scr, c_scr, gp_scr, hist_scr):
    """One grid step = one chunk of Tc timesteps.

    x_ref    : (Tc, B, E)   embedded inputs for this chunk (time-major)
    w_ih_ref : (E, 4H)      W_ih^T
    w_hh_ref : (H, 4H)      W_hh^T
    b_ref    : (1, 4H)      b_ih + b_hh
    w_fc_ref : (H, Op)      W_fc^T, zero-padded to lane-dense Op
    b_fc_ref : (1, Op)
    out_ref  : (Tc, B, Op)
    h_scr/c_scr : (B, H)    recurrent state, persists across chunks
    gp_scr   : (Tc, B, 4H)  precomputed input-gate contributions for the chunk
    hist_scr : (Tc, B, H)   hidden states of the chunk (for batched fc)
    """
    chunk_idx = pl.program_id(0)

    @pl.when(chunk_idx == 0)
    def _():
        h_scr[...] = jnp.zeros_like(h_scr)
        c_scr[...] = jnp.zeros_like(c_scr)

    Tc, B, E = x_ref.shape
    H = h_scr.shape[1]

    # (1) Hoisted input projection for the whole chunk: one MXU-friendly
    #     matmul (Tc*B, E) @ (E, 4H), bias added once (outside the time loop).
    x2d = x_ref[...].reshape(Tc * B, E)
    gates_in = (jnp.dot(x2d, w_ih_ref[...], preferred_element_type=jnp.float32)
                + b_ref[...])
    gp_scr[...] = gates_in.reshape(Tc, B, 4 * H)

    # Hoist the recurrent weight load out of the time loop.
    w_hh = w_hh_ref[...]

    # (2) Serial recurrence: one (B, H) @ (H, 4H) matmul + elementwise / step.
    #     PyTorch gate order [i, f, g, o]; all elementwise math stays in f32.
    def step(t, carry):
        h_prev = h_scr[...]
        c_prev = c_scr[...]
        gates = gp_scr[t] + jnp.dot(h_prev, w_hh,
                                    preferred_element_type=jnp.float32)
        i_g = jax.nn.sigmoid(gates[:, 0 * H:1 * H])
        f_g = jax.nn.sigmoid(gates[:, 1 * H:2 * H])
        g_g = jnp.tanh(gates[:, 2 * H:3 * H])
        o_g = jax.nn.sigmoid(gates[:, 3 * H:4 * H])
        c_new = f_g * c_prev + i_g * g_g
        h_new = o_g * jnp.tanh(c_new)
        c_scr[...] = c_new
        h_scr[...] = h_new
        hist_scr[t] = h_new
        return carry

    jax.lax.fori_loop(0, Tc, step, 0, unroll=(Tc <= 32))

    # (3) Batched, lane-dense output projection for the whole chunk:
    #     (Tc*B, H) @ (H, Op) with Op a multiple of 128 -> unmasked stores.
    h2d = hist_scr[...].reshape(Tc * B, H)
    logits = (jnp.dot(h2d, w_fc_ref[...], preferred_element_type=jnp.float32)
              + b_fc_ref[...])
    out_ref[...] = logits.reshape(Tc, B, out_ref.shape[-1])


def lstm_forward(token_ids, params, *, time_chunk=16):
    """token_ids: int32 [B, T].  Returns logits [B, T, O] (float32)."""
    emb = params["embedding"]          # [V, E]
    w_ih_t = params["w_ih_t"]          # [E, 4H]
    w_hh_t = params["w_hh_t"]          # [H, 4H]
    b = params["b"]                    # [1, 4H]  (= b_ih + b_hh)
    w_fc_t = params["w_fc_t"]          # [H, O]
    b_fc = params["b_fc"]              # [1, O]

    B, T = token_ids.shape
    E = emb.shape[1]
    H = w_hh_t.shape[0]
    O = w_fc_t.shape[1]

    # --- TPU-friendly padding ----------------------------------------------
    Bp = _round_up(B, 8)                       # fill vreg sublanes
    Tc = min(time_chunk, T)                    # timesteps per grid step
    Tp = _round_up(T, Tc)
    Op = _round_up(O, 128)                     # lane-dense fc output

    ids = token_ids
    if Tp != T:
        ids = jnp.pad(ids, ((0, 0), (0, Tp - T)))    # pad with token 0
    if Bp != B:
        ids = jnp.pad(ids, ((0, Bp - B), (0, 0)))    # extra batch rows (ignored)

    # Embedding gather directly into time-major [Tp, Bp, E]
    # (avoids a standalone HBM transpose pass).
    x_emb = jnp.take(emb, ids.T, axis=0).astype(jnp.float32)

    # Zero-pad the fc weight/bias columns to the lane-dense width Op.
    w_fc_p = jnp.pad(w_fc_t, ((0, 0), (0, Op - O))) if Op != O else w_fc_t
    b_fc_p = jnp.pad(b_fc, ((0, 0), (0, Op - O))) if Op != O else b_fc

    grid = (Tp // Tc,)

    grid_spec = pltpu.PrefetchScalarGridSpec(
        num_scalar_prefetch=0,
        grid=grid,
        in_specs=[
            pl.BlockSpec((Tc, Bp, E), lambda c: (c, 0, 0)),   # x chunk
            pl.BlockSpec((E, 4 * H), lambda c: (0, 0)),       # W_ih^T
            pl.BlockSpec((H, 4 * H), lambda c: (0, 0)),       # W_hh^T
            pl.BlockSpec((1, 4 * H), lambda c: (0, 0)),       # bias
            pl.BlockSpec((H, Op), lambda c: (0, 0)),          # W_fc^T (padded)
            pl.BlockSpec((1, Op), lambda c: (0, 0)),          # b_fc (padded)
        ],
        out_specs=pl.BlockSpec((Tc, Bp, Op), lambda c: (c, 0, 0)),
        scratch_shapes=[
            pltpu.VMEM((Bp, H), jnp.float32),          # h state
            pltpu.VMEM((Bp, H), jnp.float32),          # c state
            pltpu.VMEM((Tc, Bp, 4 * H), jnp.float32),  # chunk input-gate precompute
            pltpu.VMEM((Tc, Bp, H), jnp.float32),      # chunk hidden-state history
        ],
    )

    out_tbo = pl.pallas_call(
        lstm_kernel,
        out_shape=jax.ShapeDtypeStruct((Tp, Bp, Op), jnp.float32),
        grid_spec=grid_spec,
        compiler_params=pltpu.CompilerParams(
            dimension_semantics=("arbitrary",)),   # sequential recurrence
    )(x_emb, w_ih_t, w_hh_t, b, w_fc_p, b_fc_p)

    # [Tp, Bp, Op] -> [B, T, O]
    return jnp.transpose(out_tbo, (1, 0, 2))[:B, :T, :O]


def make_params(key, vocab_size, embed_dim, hidden_dim, output_dim):
    ks = jax.random.split(key, 7)
    k_lstm = 1.0 / np.sqrt(hidden_dim)
    k_fc = 1.0 / np.sqrt(hidden_dim)
    emb = jax.random.normal(ks[0], (vocab_size, embed_dim), jnp.float32)
    w_ih = jax.random.uniform(ks[1], (4 * hidden_dim, embed_dim),
                              jnp.float32, -k_lstm, k_lstm)
    w_hh = jax.random.uniform(ks[2], (4 * hidden_dim, hidden_dim),
                              jnp.float32, -k_lstm, k_lstm)
    b_ih = jax.random.uniform(ks[3], (4 * hidden_dim,), jnp.float32,
                              -k_lstm, k_lstm)
    b_hh = jax.random.uniform(ks[4], (4 * hidden_dim,), jnp.float32,
                              -k_lstm, k_lstm)
    w_fc = jax.random.uniform(ks[5], (output_dim, hidden_dim), jnp.float32,
                              -k_fc, k_fc)
    b_fc = jax.random.uniform(ks[6], (output_dim,), jnp.float32, -k_fc, k_fc)
    return {
        "embedding": emb,
        "w_ih_t": w_ih.T,                       # [E, 4H]
        "w_hh_t": w_hh.T,                       # [H, 4H]
        "b": (b_ih + b_hh)[None, :],            # [1, 4H]
        "w_fc_t": w_fc.T,                       # [H, O]
        "b_fc": b_fc[None, :],                  # [1, O]
    }


def reference_forward(token_ids, params):
    """Pure-JAX reference with identical semantics (for silent check)."""
    emb = params["embedding"]
    x = jnp.take(emb, token_ids, axis=0)        # [B, T, E]
    B, T, E = x.shape
    H = params["w_hh_t"].shape[0]

    def step(carry, x_t):
        h, c = carry
        gates = (x_t @ params["w_ih_t"] + params["b"]) + h @ params["w_hh_t"]
        i = jax.nn.sigmoid(gates[:, 0 * H:1 * H])
        f = jax.nn.sigmoid(gates[:, 1 * H:2 * H])
        g = jnp.tanh(gates[:, 2 * H:3 * H])
        o = jax.nn.sigmoid(gates[:, 3 * H:4 * H])
        c = f * c + i * g
        h = o * jnp.tanh(c)
        return (h, c), h

    h0 = jnp.zeros((B, H), jnp.float32)
    c0 = jnp.zeros((B, H), jnp.float32)
    _, hs = jax.lax.scan(step, (h0, c0), jnp.transpose(x, (1, 0, 2)))
    hs = jnp.transpose(hs, (1, 0, 2))           # [B, T, H]
    return hs @ params["w_fc_t"] + params["b_fc"]


if __name__ == "__main__":
    # Small, TPU-friendly shapes consistent with the module (Embedding ->
    # LSTM(batch_first) -> Linear).  Batch/seq deliberately exercise the
    # padding and multi-chunk (grid > 1) paths.
    vocab_size = 50
    embed_dim = 128
    hidden_dim = 128
    output_dim = 10
    batch = 6
    seq = 20

    key = jax.random.PRNGKey(0)
    k_param, k_ids = jax.random.split(key)
    params = make_params(k_param, vocab_size, embed_dim, hidden_dim, output_dim)
    token_ids = jax.random.randint(k_ids, (batch, seq), 0, vocab_size,
                                   dtype=jnp.int32)

    out = lstm_forward(token_ids, params, time_chunk=8)
    out = jax.block_until_ready(out)

    ref = jax.block_until_ready(reference_forward(token_ids, params))
    np.testing.assert_allclose(np.asarray(out), np.asarray(ref),
                               rtol=1e-4, atol=1e-4)

    print("KERNEL_OK")
</pallas_src>

<mosaic_0001>
module attributes {stable_mosaic.version = 11 : i64} {
  func.func @lstm_kernel(%arg0: i32, %arg1: memref<8x8x128xf32, #tpu.memory_space<vmem>>, %arg2: memref<128x512xf32, #tpu.memory_space<vmem>>, %arg3: memref<128x512xf32, #tpu.memory_space<vmem>>, %arg4: memref<1x512xf32, #tpu.memory_space<vmem>>, %arg5: memref<128x128xf32, #tpu.memory_space<vmem>>, %arg6: memref<1x128xf32, #tpu.memory_space<vmem>>, %arg7: memref<8x8x128xf32, #tpu.memory_space<vmem>>, %arg8: memref<8x128xf32, #tpu.memory_space<vmem>>, %arg9: memref<8x128xf32, #tpu.memory_space<vmem>>, %arg10: memref<8x8x512xf32, #tpu.memory_space<vmem>>, %arg11: memref<8x8x128xf32, #tpu.memory_space<vmem>>) attributes {dimension_semantics = [#tpu.dimension_semantics<arbitrary>], iteration_bounds = array<i64: 3>, scalar_prefetch = 0 : i64, scratch_operands = 4 : i64, tpu.core_type = #tpu.core_type<tc>, window_params = [{transform_indices = @transform_0, window_bounds = array<i64: 8, 8, 128>}, {pipeline_mode = #tpu.pipeline_mode<synchronous>, transform_indices = @transform_1, window_bounds = array<i64: 128, 512>}, {pipeline_mode = #tpu.pipeline_mode<synchronous>, transform_indices = @transform_2, window_bounds = array<i64: 128, 512>}, {pipeline_mode = #tpu.pipeline_mode<synchronous>, transform_indices = @transform_3, window_bounds = array<i64: 1, 512>}, {pipeline_mode = #tpu.pipeline_mode<synchronous>, transform_indices = @transform_4, window_bounds = array<i64: 128, 128>}, {pipeline_mode = #tpu.pipeline_mode<synchronous>, transform_indices = @transform_5, window_bounds = array<i64: 1, 128>}, {transform_indices = @transform_6, window_bounds = array<i64: 8, 8, 128>}]} {
    %c0_i32 = arith.constant 0 : i32
    %0 = arith.cmpi eq, %arg0, %c0_i32 : i32
    %1 = arith.extui %0 : i1 to i32
    %c0_i32_0 = arith.constant 0 : i32
    %2 = arith.cmpi ne, %1, %c0_i32_0 : i32
    scf.if %2 {
      %cst_152 = arith.constant 0.000000e+00 : f32
      %326 = vector.broadcast %cst_152 : f32 to vector<8x128xf32>
      %c0_153 = arith.constant 0 : index
      %c0_154 = arith.constant 0 : index
      %327 = vector.load %arg8[%c0_153, %c0_154] : memref<8x128xf32, #tpu.memory_space<vmem>>, vector<8x128xf32>
      tpu.vector_store %arg8[%c0_153, %c0_154], %326 {strides = array<i32>} : memref<8x128xf32, #tpu.memory_space<vmem>>, vector<8x128xf32>,
      %cst_155 = arith.constant 0.000000e+00 : f32
      %328 = vector.broadcast %cst_155 : f32 to vector<8x128xf32>
      %c0_156 = arith.constant 0 : index
      %c0_157 = arith.constant 0 : index
      %329 = vector.load %arg9[%c0_156, %c0_157] : memref<8x128xf32, #tpu.memory_space<vmem>>, vector<8x128xf32>
      tpu.vector_store %arg9[%c0_156, %c0_157], %328 {strides = array<i32>} : memref<8x128xf32, #tpu.memory_space<vmem>>, vector<8x128xf32>,
    } else {
    }
    %c0 = arith.constant 0 : index
    %c0_1 = arith.constant 0 : index
    %c0_2 = arith.constant 0 : index
    %3 = vector.load %arg1[%c0, %c0_1, %c0_2] : memref<8x8x128xf32, #tpu.memory_space<vmem>>, vector<8x8x128xf32>
    %4 = vector.shape_cast %3 : vector<8x8x128xf32> to vector<64x128xf32>
    %c0_3 = arith.constant 0 : index
    %c0_4 = arith.constant 0 : index
    %5 = vector.load %arg2[%c0_3, %c0_4] : memref<128x512xf32, #tpu.memory_space<vmem>>, vector<128x512xf32>
    %cst = arith.constant dense<0.000000e+00> : vector<64x512xf32>
    %6 = tpu.matmul %4, %5, %cst {dimension_numbers = #tpu.dot_dimension_numbers<[1], [0], [0], [1], [0, 0, 1, 1], [], []>} : vector<64x128xf32>, vector<128x512xf32>, vector<64x512xf32> -> vector<64x512xf32>
    %c0_5 = arith.constant 0 : index
    %c0_6 = arith.constant 0 : index
    %7 = vector.load %arg4[%c0_5, %c0_6] : memref<1x512xf32, #tpu.memory_space<vmem>>, vector<1x512xf32>
    %8 = vector.broadcast %7 : vector<1x512xf32> to vector<64x512xf32>
    %9 = arith.addf %6, %8 : vector<64x512xf32>
    %10 = vector.shape_cast %9 : vector<64x512xf32> to vector<8x8x512xf32>
    %c0_7 = arith.constant 0 : index
    %c0_8 = arith.constant 0 : index
    %c0_9 = arith.constant 0 : index
    %11 = vector.load %arg10[%c0_7, %c0_8, %c0_9] : memref<8x8x512xf32, #tpu.memory_space<vmem>>, vector<8x8x512xf32>
    tpu.vector_store %arg10[%c0_7, %c0_8, %c0_9], %10 {strides = array<i32>} : memref<8x8x512xf32, #tpu.memory_space<vmem>>, vector<8x8x512xf32>,
    %c0_10 = arith.constant 0 : index
    %c0_11 = arith.constant 0 : index
    %12 = vector.load %arg3[%c0_10, %c0_11] : memref<128x512xf32, #tpu.memory_space<vmem>>, vector<128x512xf32>
    %c0_i32_12 = arith.constant 0 : i32
    %c0_13 = arith.constant 0 : index
    %c0_14 = arith.constant 0 : index
    %13 = vector.load %arg8[%c0_13, %c0_14] : memref<8x128xf32, #tpu.memory_space<vmem>>, vector<8x128xf32>
    %c0_15 = arith.constant 0 : index
    %c0_16 = arith.constant 0 : index
    %14 = vector.load %arg9[%c0_15, %c0_16] : memref<8x128xf32, #tpu.memory_space<vmem>>, vector<8x128xf32>
    %15 = arith.index_cast %c0_i32_12 : i32 to index
    %c0_17 = arith.constant 0 : index
    %c0_18 = arith.constant 0 : index
    %16 = vector.load %arg10[%15, %c0_17, %c0_18] : memref<8x8x512xf32, #tpu.memory_space<vmem>>, vector<1x8x512xf32>
    %17 = vector.shape_cast %16 : vector<1x8x512xf32> to vector<8x512xf32>
    %cst_19 = arith.constant dense<0.000000e+00> : vector<8x512xf32>
    %18 = tpu.matmul %13, %12, %cst_19 {dimension_numbers = #tpu.dot_dimension_numbers<[1], [0], [0], [1], [0, 0, 1, 1], [], []>} : vector<8x128xf32>, vector<128x512xf32>, vector<8x512xf32> -> vector<8x512xf32>
    %19 = arith.addf %17, %18 : vector<8x512xf32>
    %20 = vector.extract_strided_slice %19 {offsets = [0, 0], sizes = [8, 128], strides = [1, 1]} : vector<8x512xf32> to vector<8x128xf32>
    %21 = arith.negf %20 : vector<8x128xf32>
    %22 = math.exp %21 : vector<8x128xf32>
    %cst_20 = arith.constant 1.000000e+00 : f32
    %23 = vector.broadcast %cst_20 : f32 to vector<8x128xf32>
    %24 = arith.addf %23, %22 : vector<8x128xf32>
    %25 = arith.divf %23, %24 : vector<8x128xf32>
    %26 = vector.extract_strided_slice %19 {offsets = [0, 128], sizes = [8, 128], strides = [1, 1]} : vector<8x512xf32> to vector<8x128xf32>
    %27 = arith.negf %26 : vector<8x128xf32>
    %28 = math.exp %27 : vector<8x128xf32>
    %cst_21 = arith.constant 1.000000e+00 : f32
    %29 = vector.broadcast %cst_21 : f32 to vector<8x128xf32>
    %30 = arith.addf %29, %28 : vector<8x128xf32>
    %31 = arith.divf %29, %30 : vector<8x128xf32>
    %32 = vector.extract_strided_slice %19 {offsets = [0, 256], sizes = [8, 128], strides = [1, 1]} : vector<8x512xf32> to vector<8x128xf32>
    %33 = math.tanh %32 : vector<8x128xf32>
    %34 = vector.extract_strided_slice %19 {offsets = [0, 384], sizes = [8, 128], strides = [1, 1]} : vector<8x512xf32> to vector<8x128xf32>
    %35 = arith.negf %34 : vector<8x128xf32>
    %36 = math.exp %35 : vector<8x128xf32>
    %cst_22 = arith.constant 1.000000e+00 : f32
    %37 = vector.broadcast %cst_22 : f32 to vector<8x128xf32>
    %38 = arith.addf %37, %36 : vector<8x128xf32>
    %39 = arith.divf %37, %38 : vector<8x128xf32>
    %40 = arith.mulf %31, %14 : vector<8x128xf32>
    %41 = arith.mulf %25, %33 : vector<8x128xf32>
    %42 = arith.addf %40, %41 : vector<8x128xf32>
    %43 = math.tanh %42 : vector<8x128xf32>
    %44 = arith.mulf %39, %43 : vector<8x128xf32>
    %c0_23 = arith.constant 0 : index
    %c0_24 = arith.constant 0 : index
    %45 = vector.load %arg9[%c0_23, %c0_24] : memref<8x128xf32, #tpu.memory_space<vmem>>, vector<8x128xf32>
    tpu.vector_store %arg9[%c0_23, %c0_24], %42 {strides = array<i32>} : memref<8x128xf32, #tpu.memory_space<vmem>>, vector<8x128xf32>,
    %c0_25 = arith.constant 0 : index
    %c0_26 = arith.constant 0 : index
    %46 = vector.load %arg8[%c0_25, %c0_26] : memref<8x128xf32, #tpu.memory_space<vmem>>, vector<8x128xf32>
    tpu.vector_store %arg8[%c0_25, %c0_26], %44 {strides = array<i32>} : memref<8x128xf32, #tpu.memory_space<vmem>>, vector<8x128xf32>,
    %47 = arith.index_cast %c0_i32_12 : i32 to index
    %c0_27 = arith.constant 0 : index
    %c0_28 = arith.constant 0 : index
    %48 = vector.load %arg11[%47, %c0_27, %c0_28] : memref<8x8x128xf32, #tpu.memory_space<vmem>>, vector<1x8x128xf32>
    %49 = vector.shape_cast %48 : vector<1x8x128xf32> to vector<8x128xf32>
    %50 = vector.shape_cast %44 : vector<8x128xf32> to vector<1x8x128xf32>
    tpu.vector_store %arg11[%47, %c0_27, %c0_28], %50 {strides = array<i32>} : memref<8x8x128xf32, #tpu.memory_space<vmem>>, vector<1x8x128xf32>,
    %c1_i32 = arith.constant 1 : i32
    %c0_29 = arith.constant 0 : index
    %c0_30 = arith.constant 0 : index
    %51 = vector.load %arg8[%c0_29, %c0_30] : memref<8x128xf32, #tpu.memory_space<vmem>>, vector<8x128xf32>
    %c0_31 = arith.constant 0 : index
    %c0_32 = arith.constant 0 : index
    %52 = vector.load %arg9[%c0_31, %c0_32] : memref<8x128xf32, #tpu.memory_space<vmem>>, vector<8x128xf32>
    %53 = arith.index_cast %c1_i32 : i32 to index
    %c0_33 = arith.constant 0 : index
    %c0_34 = arith.constant 0 : index
    %54 = vector.load %arg10[%53, %c0_33, %c0_34] : memref<8x8x512xf32, #tpu.memory_space<vmem>>, vector<1x8x512xf32>
    %55 = vector.shape_cast %54 : vector<1x8x512xf32> to vector<8x512xf32>
    %cst_35 = arith.constant dense<0.000000e+00> : vector<8x512xf32>
    %56 = tpu.matmul %51, %12, %cst_35 {dimension_numbers = #tpu.dot_dimension_numbers<[1], [0], [0], [1], [0, 0, 1, 1], [], []>} : vector<8x128xf32>, vector<128x512xf32>, vector<8x512xf32> -> vector<8x512xf32>
    %57 = arith.addf %55, %56 : vector<8x512xf32>
    %58 = vector.extract_strided_slice %57 {offsets = [0, 0], sizes = [8, 128], strides = [1, 1]} : vector<8x512xf32> to vector<8x128xf32>
    %59 = arith.negf %58 : vector<8x128xf32>
    %60 = math.exp %59 : vector<8x128xf32>
    %cst_36 = arith.constant 1.000000e+00 : f32
    %61 = vector.broadcast %cst_36 : f32 to vector<8x128xf32>
    %62 = arith.addf %61, %60 : vector<8x128xf32>
    %63 = arith.divf %61, %62 : vector<8x128xf32>
    %64 = vector.extract_strided_slice %57 {offsets = [0, 128], sizes = [8, 128], strides = [1, 1]} : vector<8x512xf32> to vector<8x128xf32>
    %65 = arith.negf %64 : vector<8x128xf32>
    %66 = math.exp %65 : vector<8x128xf32>
    %cst_37 = arith.constant 1.000000e+00 : f32
    %67 = vector.broadcast %cst_37 : f32 to vector<8x128xf32>
    %68 = arith.addf %67, %66 : vector<8x128xf32>
    %69 = arith.divf %67, %68 : vector<8x128xf32>
    %70 = vector.extract_strided_slice %57 {offsets = [0, 256], sizes = [8, 128], strides = [1, 1]} : vector<8x512xf32> to vector<8x128xf32>
    %71 = math.tanh %70 : vector<8x128xf32>
    %72 = vector.extract_strided_slice %57 {offsets = [0, 384], sizes = [8, 128], strides = [1, 1]} : vector<8x512xf32> to vector<8x128xf32>
    %73 = arith.negf %72 : vector<8x128xf32>
    %74 = math.exp %73 : vector<8x128xf32>
    %cst_38 = arith.constant 1.000000e+00 : f32
    %75 = vector.broadcast %cst_38 : f32 to vector<8x128xf32>
    %76 = arith.addf %75, %74 : vector<8x128xf32>
    %77 = arith.divf %75, %76 : vector<8x128xf32>
    %78 = arith.mulf %69, %52 : vector<8x128xf32>
    %79 = arith.mulf %63, %71 : vector<8x128xf32>
    %80 = arith.addf %78, %79 : vector<8x128xf32>
    %81 = math.tanh %80 : vector<8x128xf32>
    %82 = arith.mulf %77, %81 : vector<8x128xf32>
    %c0_39 = arith.constant 0 : index
    %c0_40 = arith.constant 0 : index
    %83 = vector.load %arg9[%c0_39, %c0_40] : memref<8x128xf32, #tpu.memory_space<vmem>>, vector<8x128xf32>
    tpu.vector_store %arg9[%c0_39, %c0_40], %80 {strides = array<i32>} : memref<8x128xf32, #tpu.memory_space<vmem>>, vector<8x128xf32>,
    %c0_41 = arith.constant 0 : index
    %c0_42 = arith.constant 0 : index
    %84 = vector.load %arg8[%c0_41, %c0_42] : memref<8x128xf32, #tpu.memory_space<vmem>>, vector<8x128xf32>
    tpu.vector_store %arg8[%c0_41, %c0_42], %82 {strides = array<i32>} : memref<8x128xf32, #tpu.memory_space<vmem>>, vector<8x128xf32>,
    %85 = arith.index_cast %c1_i32 : i32 to index
    %c0_43 = arith.constant 0 : index
    %c0_44 = arith.constant 0 : index
    %86 = vector.load %arg11[%85, %c0_43, %c0_44] : memref<8x8x128xf32, #tpu.memory_space<vmem>>, vector<1x8x128xf32>
    %87 = vector.shape_cast %86 : vector<1x8x128xf32> to vector<8x128xf32>
    %88 = vector.shape_cast %82 : vector<8x128xf32> to vector<1x8x128xf32>
    tpu.vector_store %arg11[%85, %c0_43, %c0_44], %88 {strides = array<i32>} : memref<8x8x128xf32, #tpu.memory_space<vmem>>, vector<1x8x128xf32>,
    %c2_i32 = arith.constant 2 : i32
    %c0_45 = arith.constant 0 : index
    %c0_46 = arith.constant 0 : index
    %89 = vector.load %arg8[%c0_45, %c0_46] : memref<8x128xf32, #tpu.memory_space<vmem>>, vector<8x128xf32>
    %c0_47 = arith.constant 0 : index
    %c0_48 = arith.constant 0 : index
    %90 = vector.load %arg9[%c0_47, %c0_48] : memref<8x128xf32, #tpu.memory_space<vmem>>, vector<8x128xf32>
    %91 = arith.index_cast %c2_i32 : i32 to index
    %c0_49 = arith.constant 0 : index
    %c0_50 = arith.constant 0 : index
    %92 = vector.load %arg10[%91, %c0_49, %c0_50] : memref<8x8x512xf32, #tpu.memory_space<vmem>>, vector<1x8x512xf32>
    %93 = vector.shape_cast %92 : vector<1x8x512xf32> to vector<8x512xf32>
    %cst_51 = arith.constant dense<0.000000e+00> : vector<8x512xf32>
    %94 = tpu.matmul %89, %12, %cst_51 {dimension_numbers = #tpu.dot_dimension_numbers<[1], [0], [0], [1], [0, 0, 1, 1], [], []>} : vector<8x128xf32>, vector<128x512xf32>, vector<8x512xf32> -> vector<8x512xf32>
    %95 = arith.addf %93, %94 : vector<8x512xf32>
    %96 = vector.extract_strided_slice %95 {offsets = [0, 0], sizes = [8, 128], strides = [1, 1]} : vector<8x512xf32> to vector<8x128xf32>
    %97 = arith.negf %96 : vector<8x128xf32>
    %98 = math.exp %97 : vector<8x128xf32>
    %cst_52 = arith.constant 1.000000e+00 : f32
    %99 = vector.broadcast %cst_52 : f32 to vector<8x128xf32>
    %100 = arith.addf %99, %98 : vector<8x128xf32>
    %101 = arith.divf %99, %100 : vector<8x128xf32>
    %102 = vector.extract_strided_slice %95 {offsets = [0, 128], sizes = [8, 128], strides = [1, 1]} : vector<8x512xf32> to vector<8x128xf32>
    %103 = arith.negf %102 : vector<8x128xf32>
    %104 = math.exp %103 : vector<8x128xf32>
    %cst_53 = arith.constant 1.000000e+00 : f32
    %105 = vector.broadcast %cst_53 : f32 to vector<8x128xf32>
    %106 = arith.addf %105, %104 : vector<8x128xf32>
    %107 = arith.divf %105, %106 : vector<8x128xf32>
    %108 = vector.extract_strided_slice %95 {offsets = [0, 256], sizes = [8, 128], strides = [1, 1]} : vector<8x512xf32> to vector<8x128xf32>
    %109 = math.tanh %108 : vector<8x128xf32>
    %110 = vector.extract_strided_slice %95 {offsets = [0, 384], sizes = [8, 128], strides = [1, 1]} : vector<8x512xf32> to vector<8x128xf32>
    %111 = arith.negf %110 : vector<8x128xf32>
    %112 = math.exp %111 : vector<8x128xf32>
    %cst_54 = arith.constant 1.000000e+00 : f32
    %113 = vector.broadcast %cst_54 : f32 to vector<8x128xf32>
    %114 = arith.addf %113, %112 : vector<8x128xf32>
    %115 = arith.divf %113, %114 : vector<8x128xf32>
    %116 = arith.mulf %107, %90 : vector<8x128xf32>
    %117 = arith.mulf %101, %109 : vector<8x128xf32>
    %118 = arith.addf %116, %117 : vector<8x128xf32>
    %119 = math.tanh %118 : vector<8x128xf32>
    %120 = arith.mulf %115, %119 : vector<8x128xf32>
    %c0_55 = arith.constant 0 : index
    %c0_56 = arith.constant 0 : index
    %121 = vector.load %arg9[%c0_55, %c0_56] : memref<8x128xf32, #tpu.memory_space<vmem>>, vector<8x128xf32>
    tpu.vector_store %arg9[%c0_55, %c0_56], %118 {strides = array<i32>} : memref<8x128xf32, #tpu.memory_space<vmem>>, vector<8x128xf32>,
    %c0_57 = arith.constant 0 : index
    %c0_58 = arith.constant 0 : index
    %122 = vector.load %arg8[%c0_57, %c0_58] : memref<8x128xf32, #tpu.memory_space<vmem>>, vector<8x128xf32>
    tpu.vector_store %arg8[%c0_57, %c0_58], %120 {strides = array<i32>} : memref<8x128xf32, #tpu.memory_space<vmem>>, vector<8x128xf32>,
    %123 = arith.index_cast %c2_i32 : i32 to index
    %c0_59 = arith.constant 0 : index
    %c0_60 = arith.constant 0 : index
    %124 = vector.load %arg11[%123, %c0_59, %c0_60] : memref<8x8x128xf32, #tpu.memory_space<vmem>>, vector<1x8x128xf32>
    %125 = vector.shape_cast %124 : vector<1x8x128xf32> to vector<8x128xf32>
    %126 = vector.shape_cast %120 : vector<8x128xf32> to vector<1x8x128xf32>
    tpu.vector_store %arg11[%123, %c0_59, %c0_60], %126 {strides = array<i32>} : memref<8x8x128xf32, #tpu.memory_space<vmem>>, vector<1x8x128xf32>,
    %c3_i32 = arith.constant 3 : i32
    %c0_61 = arith.constant 0 : index
    %c0_62 = arith.constant 0 : index
    %127 = vector.load %arg8[%c0_61, %c0_62] : memref<8x128xf32, #tpu.memory_space<vmem>>, vector<8x128xf32>
    %c0_63 = arith.constant 0 : index
    %c0_64 = arith.constant 0 : index
    %128 = vector.load %arg9[%c0_63, %c0_64] : memref<8x128xf32, #tpu.memory_space<vmem>>, vector<8x128xf32>
    %129 = arith.index_cast %c3_i32 : i32 to index
    %c0_65 = arith.constant 0 : index
    %c0_66 = arith.constant 0 : index
    %130 = vector.load %arg10[%129, %c0_65, %c0_66] : memref<8x8x512xf32, #tpu.memory_space<vmem>>, vector<1x8x512xf32>
    %131 = vector.shape_cast %130 : vector<1x8x512xf32> to vector<8x512xf32>
    %cst_67 = arith.constant dense<0.000000e+00> : vector<8x512xf32>
    %132 = tpu.matmul %127, %12, %cst_67 {dimension_numbers = #tpu.dot_dimension_numbers<[1], [0], [0], [1], [0, 0, 1, 1], [], []>} : vector<8x128xf32>, vector<128x512xf32>, vector<8x512xf32> -> vector<8x512xf32>
    %133 = arith.addf %131, %132 : vector<8x512xf32>
    %134 = vector.extract_strided_slice %133 {offsets = [0, 0], sizes = [8, 128], strides = [1, 1]} : vector<8x512xf32> to vector<8x128xf32>
    %135 = arith.negf %134 : vector<8x128xf32>
    %136 = math.exp %135 : vector<8x128xf32>
    %cst_68 = arith.constant 1.000000e+00 : f32
    %137 = vector.broadcast %cst_68 : f32 to vector<8x128xf32>
    %138 = arith.addf %137, %136 : vector<8x128xf32>
    %139 = arith.divf %137, %138 : vector<8x128xf32>
    %140 = vector.extract_strided_slice %133 {offsets = [0, 128], sizes = [8, 128], strides = [1, 1]} : vector<8x512xf32> to vector<8x128xf32>
    %141 = arith.negf %140 : vector<8x128xf32>
    %142 = math.exp %141 : vector<8x128xf32>
    %cst_69 = arith.constant 1.000000e+00 : f32
    %143 = vector.broadcast %cst_69 : f32 to vector<8x128xf32>
    %144 = arith.addf %143, %142 : vector<8x128xf32>
    %145 = arith.divf %143, %144 : vector<8x128xf32>
    %146 = vector.extract_strided_slice %133 {offsets = [0, 256], sizes = [8, 128], strides = [1, 1]} : vector<8x512xf32> to vector<8x128xf32>
    %147 = math.tanh %146 : vector<8x128xf32>
    %148 = vector.extract_strided_slice %133 {offsets = [0, 384], sizes = [8, 128], strides = [1, 1]} : vector<8x512xf32> to vector<8x128xf32>
    %149 = arith.negf %148 : vector<8x128xf32>
    %150 = math.exp %149 : vector<8x128xf32>
    %cst_70 = arith.constant 1.000000e+00 : f32
    %151 = vector.broadcast %cst_70 : f32 to vector<8x128xf32>
    %152 = arith.addf %151, %150 : vector<8x128xf32>
    %153 = arith.divf %151, %152 : vector<8x128xf32>
    %154 = arith.mulf %145, %128 : vector<8x128xf32>
    %155 = arith.mulf %139, %147 : vector<8x128xf32>
    %156 = arith.addf %154, %155 : vector<8x128xf32>
    %157 = math.tanh %156 : vector<8x128xf32>
    %158 = arith.mulf %153, %157 : vector<8x128xf32>
    %c0_71 = arith.constant 0 : index
    %c0_72 = arith.constant 0 : index
    %159 = vector.load %arg9[%c0_71, %c0_72] : memref<8x128xf32, #tpu.memory_space<vmem>>, vector<8x128xf32>
    tpu.vector_store %arg9[%c0_71, %c0_72], %156 {strides = array<i32>} : memref<8x128xf32, #tpu.memory_space<vmem>>, vector<8x128xf32>,
    %c0_73 = arith.constant 0 : index
    %c0_74 = arith.constant 0 : index
    %160 = vector.load %arg8[%c0_73, %c0_74] : memref<8x128xf32, #tpu.memory_space<vmem>>, vector<8x128xf32>
    tpu.vector_store %arg8[%c0_73, %c0_74], %158 {strides = array<i32>} : memref<8x128xf32, #tpu.memory_space<vmem>>, vector<8x128xf32>,
    %161 = arith.index_cast %c3_i32 : i32 to index
    %c0_75 = arith.constant 0 : index
    %c0_76 = arith.constant 0 : index
    %162 = vector.load %arg11[%161, %c0_75, %c0_76] : memref<8x8x128xf32, #tpu.memory_space<vmem>>, vector<1x8x128xf32>
    %163 = vector.shape_cast %162 : vector<1x8x128xf32> to vector<8x128xf32>
    %164 = vector.shape_cast %158 : vector<8x128xf32> to vector<1x8x128xf32>
    tpu.vector_store %arg11[%161, %c0_75, %c0_76], %164 {strides = array<i32>} : memref<8x8x128xf32, #tpu.memory_space<vmem>>, vector<1x8x128xf32>,
    %c4_i32 = arith.constant 4 : i32
    %c0_77 = arith.constant 0 : index
    %c0_78 = arith.constant 0 : index
    %165 = vector.load %arg8[%c0_77, %c0_78] : memref<8x128xf32, #tpu.memory_space<vmem>>, vector<8x128xf32>
    %c0_79 = arith.constant 0 : index
    %c0_80 = arith.constant 0 : index
    %166 = vector.load %arg9[%c0_79, %c0_80] : memref<8x128xf32, #tpu.memory_space<vmem>>, vector<8x128xf32>
    %167 = arith.index_cast %c4_i32 : i32 to index
    %c0_81 = arith.constant 0 : index
    %c0_82 = arith.constant 0 : index
    %168 = vector.load %arg10[%167, %c0_81, %c0_82] : memref<8x8x512xf32, #tpu.memory_space<vmem>>, vector<1x8x512xf32>
    %169 = vector.shape_cast %168 : vector<1x8x512xf32> to vector<8x512xf32>
    %cst_83 = arith.constant dense<0.000000e+00> : vector<8x512xf32>
    %170 = tpu.matmul %165, %12, %cst_83 {dimension_numbers = #tpu.dot_dimension_numbers<[1], [0], [0], [1], [0, 0, 1, 1], [], []>} : vector<8x128xf32>, vector<128x512xf32>, vector<8x512xf32> -> vector<8x512xf32>
    %171 = arith.addf %169, %170 : vector<8x512xf32>
    %172 = vector.extract_strided_slice %171 {offsets = [0, 0], sizes = [8, 128], strides = [1, 1]} : vector<8x512xf32> to vector<8x128xf32>
    %173 = arith.negf %172 : vector<8x128xf32>
    %174 = math.exp %173 : vector<8x128xf32>
    %cst_84 = arith.constant 1.000000e+00 : f32
    %175 = vector.broadcast %cst_84 : f32 to vector<8x128xf32>
    %176 = arith.addf %175, %174 : vector<8x128xf32>
    %177 = arith.divf %175, %176 : vector<8x128xf32>
    %178 = vector.extract_strided_slice %171 {offsets = [0, 128], sizes = [8, 128], strides = [1, 1]} : vector<8x512xf32> to vector<8x128xf32>
    %179 = arith.negf %178 : vector<8x128xf32>
    %180 = math.exp %179 : vector<8x128xf32>
    %cst_85 = arith.constant 1.000000e+00 : f32
    %181 = vector.broadcast %cst_85 : f32 to vector<8x128xf32>
    %182 = arith.addf %181, %180 : vector<8x128xf32>
    %183 = arith.divf %181, %182 : vector<8x128xf32>
    %184 = vector.extract_strided_slice %171 {offsets = [0, 256], sizes = [8, 128], strides = [1, 1]} : vector<8x512xf32> to vector<8x128xf32>
    %185 = math.tanh %184 : vector<8x128xf32>
    %186 = vector.extract_strided_slice %171 {offsets = [0, 384], sizes = [8, 128], strides = [1, 1]} : vector<8x512xf32> to vector<8x128xf32>
    %187 = arith.negf %186 : vector<8x128xf32>
    %188 = math.exp %187 : vector<8x128xf32>
    %cst_86 = arith.constant 1.000000e+00 : f32
    %189 = vector.broadcast %cst_86 : f32 to vector<8x128xf32>
    %190 = arith.addf %189, %188 : vector<8x128xf32>
    %191 = arith.divf %189, %190 : vector<8x128xf32>
    %192 = arith.mulf %183, %166 : vector<8x128xf32>
    %193 = arith.mulf %177, %185 : vector<8x128xf32>
    %194 = arith.addf %192, %193 : vector<8x128xf32>
    %195 = math.tanh %194 : vector<8x128xf32>
    %196 = arith.mulf %191, %195 : vector<8x128xf32>
    %c0_87 = arith.constant 0 : index
    %c0_88 = arith.constant 0 : index
    %197 = vector.load %arg9[%c0_87, %c0_88] : memref<8x128xf32, #tpu.memory_space<vmem>>, vector<8x128xf32>
    tpu.vector_store %arg9[%c0_87, %c0_88], %194 {strides = array<i32>} : memref<8x128xf32, #tpu.memory_space<vmem>>, vector<8x128xf32>,
    %c0_89 = arith.constant 0 : index
    %c0_90 = arith.constant 0 : index
    %198 = vector.load %arg8[%c0_89, %c0_90] : memref<8x128xf32, #tpu.memory_space<vmem>>, vector<8x128xf32>
    tpu.vector_store %arg8[%c0_89, %c0_90], %196 {strides = array<i32>} : memref<8x128xf32, #tpu.memory_space<vmem>>, vector<8x128xf32>,
    %199 = arith.index_cast %c4_i32 : i32 to index
    %c0_91 = arith.constant 0 : index
    %c0_92 = arith.constant 0 : index
    %200 = vector.load %arg11[%199, %c0_91, %c0_92] : memref<8x8x128xf32, #tpu.memory_space<vmem>>, vector<1x8x128xf32>
    %201 = vector.shape_cast %200 : vector<1x8x128xf32> to vector<8x128xf32>
    %202 = vector.shape_cast %196 : vector<8x128xf32> to vector<1x8x128xf32>
    tpu.vector_store %arg11[%199, %c0_91, %c0_92], %202 {strides = array<i32>} : memref<8x8x128xf32, #tpu.memory_space<vmem>>, vector<1x8x128xf32>,
    %c5_i32 = arith.constant 5 : i32
    %c0_93 = arith.constant 0 : index
    %c0_94 = arith.constant 0 : index
    %203 = vector.load %arg8[%c0_93, %c0_94] : memref<8x128xf32, #tpu.memory_space<vmem>>, vector<8x128xf32>
    %c0_95 = arith.constant 0 : index
    %c0_96 = arith.constant 0 : index
    %204 = vector.load %arg9[%c0_95, %c0_96] : memref<8x128xf32, #tpu.memory_space<vmem>>, vector<8x128xf32>
    %205 = arith.index_cast %c5_i32 : i32 to index
    %c0_97 = arith.constant 0 : index
    %c0_98 = arith.constant 0 : index
    %206 = vector.load %arg10[%205, %c0_97, %c0_98] : memref<8x8x512xf32, #tpu.memory_space<vmem>>, vector<1x8x512xf32>
    %207 = vector.shape_cast %206 : vector<1x8x512xf32> to vector<8x512xf32>
    %cst_99 = arith.constant dense<0.000000e+00> : vector<8x512xf32>
    %208 = tpu.matmul %203, %12, %cst_99 {dimension_numbers = #tpu.dot_dimension_numbers<[1], [0], [0], [1], [0, 0, 1, 1], [], []>} : vector<8x128xf32>, vector<128x512xf32>, vector<8x512xf32> -> vector<8x512xf32>
    %209 = arith.addf %207, %208 : vector<8x512xf32>
    %210 = vector.extract_strided_slice %209 {offsets = [0, 0], sizes = [8, 128], strides = [1, 1]} : vector<8x512xf32> to vector<8x128xf32>
    %211 = arith.negf %210 : vector<8x128xf32>
    %212 = math.exp %211 : vector<8x128xf32>
    %cst_100 = arith.constant 1.000000e+00 : f32
    %213 = vector.broadcast %cst_100 : f32 to vector<8x128xf32>
    %214 = arith.addf %213, %212 : vector<8x128xf32>
    %215 = arith.divf %213, %214 : vector<8x128xf32>
    %216 = vector.extract_strided_slice %209 {offsets = [0, 128], sizes = [8, 128], strides = [1, 1]} : vector<8x512xf32> to vector<8x128xf32>
    %217 = arith.negf %216 : vector<8x128xf32>
    %218 = math.exp %217 : vector<8x128xf32>
    %cst_101 = arith.constant 1.000000e+00 : f32
    %219 = vector.broadcast %cst_101 : f32 to vector<8x128xf32>
    %220 = arith.addf %219, %218 : vector<8x128xf32>
    %221 = arith.divf %219, %220 : vector<8x128xf32>
    %222 = vector.extract_strided_slice %209 {offsets = [0, 256], sizes = [8, 128], strides = [1, 1]} : vector<8x512xf32> to vector<8x128xf32>
    %223 = math.tanh %222 : vector<8x128xf32>
    %224 = vector.extract_strided_slice %209 {offsets = [0, 384], sizes = [8, 128], strides = [1, 1]} : vector<8x512xf32> to vector<8x128xf32>
    %225 = arith.negf %224 : vector<8x128xf32>
    %226 = math.exp %225 : vector<8x128xf32>
    %cst_102 = arith.constant 1.000000e+00 : f32
    %227 = vector.broadcast %cst_102 : f32 to vector<8x128xf32>
    %228 = arith.addf %227, %226 : vector<8x128xf32>
    %229 = arith.divf %227, %228 : vector<8x128xf32>
    %230 = arith.mulf %221, %204 : vector<8x128xf32>
    %231 = arith.mulf %215, %223 : vector<8x128xf32>
    %232 = arith.addf %230, %231 : vector<8x128xf32>
    %233 = math.tanh %232 : vector<8x128xf32>
    %234 = arith.mulf %229, %233 : vector<8x128xf32>
    %c0_103 = arith.constant 0 : index
    %c0_104 = arith.constant 0 : index
    %235 = vector.load %arg9[%c0_103, %c0_104] : memref<8x128xf32, #tpu.memory_space<vmem>>, vector<8x128xf32>
    tpu.vector_store %arg9[%c0_103, %c0_104], %232 {strides = array<i32>} : memref<8x128xf32, #tpu.memory_space<vmem>>, vector<8x128xf32>,
    %c0_105 = arith.constant 0 : index
    %c0_106 = arith.constant 0 : index
    %236 = vector.load %arg8[%c0_105, %c0_106] : memref<8x128xf32, #tpu.memory_space<vmem>>, vector<8x128xf32>
    tpu.vector_store %arg8[%c0_105, %c0_106], %234 {strides = array<i32>} : memref<8x128xf32, #tpu.memory_space<vmem>>, vector<8x128xf32>,
    %237 = arith.index_cast %c5_i32 : i32 to index
    %c0_107 = arith.constant 0 : index
    %c0_108 = arith.constant 0 : index
    %238 = vector.load %arg11[%237, %c0_107, %c0_108] : memref<8x8x128xf32, #tpu.memory_space<vmem>>, vector<1x8x128xf32>
    %239 = vector.shape_cast %238 : vector<1x8x128xf32> to vector<8x128xf32>
    %240 = vector.shape_cast %234 : vector<8x128xf32> to vector<1x8x128xf32>
    tpu.vector_store %arg11[%237, %c0_107, %c0_108], %240 {strides = array<i32>} : memref<8x8x128xf32, #tpu.memory_space<vmem>>, vector<1x8x128xf32>,
    %c6_i32 = arith.constant 6 : i32
    %c0_109 = arith.constant 0 : index
    %c0_110 = arith.constant 0 : index
    %241 = vector.load %arg8[%c0_109, %c0_110] : memref<8x128xf32, #tpu.memory_space<vmem>>, vector<8x128xf32>
    %c0_111 = arith.constant 0 : index
    %c0_112 = arith.constant 0 : index
    %242 = vector.load %arg9[%c0_111, %c0_112] : memref<8x128xf32, #tpu.memory_space<vmem>>, vector<8x128xf32>
    %243 = arith.index_cast %c6_i32 : i32 to index
    %c0_113 = arith.constant 0 : index
    %c0_114 = arith.constant 0 : index
    %244 = vector.load %arg10[%243, %c0_113, %c0_114] : memref<8x8x512xf32, #tpu.memory_space<vmem>>, vector<1x8x512xf32>
    %245 = vector.shape_cast %244 : vector<1x8x512xf32> to vector<8x512xf32>
    %cst_115 = arith.constant dense<0.000000e+00> : vector<8x512xf32>
    %246 = tpu.matmul %241, %12, %cst_115 {dimension_numbers = #tpu.dot_dimension_numbers<[1], [0], [0], [1], [0, 0, 1, 1], [], []>} : vector<8x128xf32>, vector<128x512xf32>, vector<8x512xf32> -> vector<8x512xf32>
    %247 = arith.addf %245, %246 : vector<8x512xf32>
    %248 = vector.extract_strided_slice %247 {offsets = [0, 0], sizes = [8, 128], strides = [1, 1]} : vector<8x512xf32> to vector<8x128xf32>
    %249 = arith.negf %248 : vector<8x128xf32>
    %250 = math.exp %249 : vector<8x128xf32>
    %cst_116 = arith.constant 1.000000e+00 : f32
    %251 = vector.broadcast %cst_116 : f32 to vector<8x128xf32>
    %252 = arith.addf %251, %250 : vector<8x128xf32>
    %253 = arith.divf %251, %252 : vector<8x128xf32>
    %254 = vector.extract_strided_slice %247 {offsets = [0, 128], sizes = [8, 128], strides = [1, 1]} : vector<8x512xf32> to vector<8x128xf32>
    %255 = arith.negf %254 : vector<8x128xf32>
    %256 = math.exp %255 : vector<8x128xf32>
    %cst_117 = arith.constant 1.000000e+00 : f32
    %257 = vector.broadcast %cst_117 : f32 to vector<8x128xf32>
    %258 = arith.addf %257, %256 : vector<8x128xf32>
    %259 = arith.divf %257, %258 : vector<8x128xf32>
    %260 = vector.extract_strided_slice %247 {offsets = [0, 256], sizes = [8, 128], strides = [1, 1]} : vector<8x512xf32> to vector<8x128xf32>
    %261 = math.tanh %260 : vector<8x128xf32>
    %262 = vector.extract_strided_slice %247 {offsets = [0, 384], sizes = [8, 128], strides = [1, 1]} : vector<8x512xf32> to vector<8x128xf32>
    %263 = arith.negf %262 : vector<8x128xf32>
    %264 = math.exp %263 : vector<8x128xf32>
    %cst_118 = arith.constant 1.000000e+00 : f32
    %265 = vector.broadcast %cst_118 : f32 to vector<8x128xf32>
    %266 = arith.addf %265, %264 : vector<8x128xf32>
    %267 = arith.divf %265, %266 : vector<8x128xf32>
    %268 = arith.mulf %259, %242 : vector<8x128xf32>
    %269 = arith.mulf %253, %261 : vector<8x128xf32>
    %270 = arith.addf %268, %269 : vector<8x128xf32>
    %271 = math.tanh %270 : vector<8x128xf32>
    %272 = arith.mulf %267, %271 : vector<8x128xf32>
    %c0_119 = arith.constant 0 : index
    %c0_120 = arith.constant 0 : index
    %273 = vector.load %arg9[%c0_119, %c0_120] : memref<8x128xf32, #tpu.memory_space<vmem>>, vector<8x128xf32>
    tpu.vector_store %arg9[%c0_119, %c0_120], %270 {strides = array<i32>} : memref<8x128xf32, #tpu.memory_space<vmem>>, vector<8x128xf32>,
    %c0_121 = arith.constant 0 : index
    %c0_122 = arith.constant 0 : index
    %274 = vector.load %arg8[%c0_121, %c0_122] : memref<8x128xf32, #tpu.memory_space<vmem>>, vector<8x128xf32>
    tpu.vector_store %arg8[%c0_121, %c0_122], %272 {strides = array<i32>} : memref<8x128xf32, #tpu.memory_space<vmem>>, vector<8x128xf32>,
    %275 = arith.index_cast %c6_i32 : i32 to index
    %c0_123 = arith.constant 0 : index
    %c0_124 = arith.constant 0 : index
    %276 = vector.load %arg11[%275, %c0_123, %c0_124] : memref<8x8x128xf32, #tpu.memory_space<vmem>>, vector<1x8x128xf32>
    %277 = vector.shape_cast %276 : vector<1x8x128xf32> to vector<8x128xf32>
    %278 = vector.shape_cast %272 : vector<8x128xf32> to vector<1x8x128xf32>
    tpu.vector_store %arg11[%275, %c0_123, %c0_124], %278 {strides = array<i32>} : memref<8x8x128xf32, #tpu.memory_space<vmem>>, vector<1x8x128xf32>,
    %c7_i32 = arith.constant 7 : i32
    %c0_125 = arith.constant 0 : index
    %c0_126 = arith.constant 0 : index
    %279 = vector.load %arg8[%c0_125, %c0_126] : memref<8x128xf32, #tpu.memory_space<vmem>>, vector<8x128xf32>
    %c0_127 = arith.constant 0 : index
    %c0_128 = arith.constant 0 : index
    %280 = vector.load %arg9[%c0_127, %c0_128] : memref<8x128xf32, #tpu.memory_space<vmem>>, vector<8x128xf32>
    %281 = arith.index_cast %c7_i32 : i32 to index
    %c0_129 = arith.constant 0 : index
    %c0_130 = arith.constant 0 : index
    %282 = vector.load %arg10[%281, %c0_129, %c0_130] : memref<8x8x512xf32, #tpu.memory_space<vmem>>, vector<1x8x512xf32>
    %283 = vector.shape_cast %282 : vector<1x8x512xf32> to vector<8x512xf32>
    %cst_131 = arith.constant dense<0.000000e+00> : vector<8x512xf32>
    %284 = tpu.matmul %279, %12, %cst_131 {dimension_numbers = #tpu.dot_dimension_numbers<[1], [0], [0], [1], [0, 0, 1, 1], [], []>} : vector<8x128xf32>, vector<128x512xf32>, vector<8x512xf32> -> vector<8x512xf32>
    %285 = arith.addf %283, %284 : vector<8x512xf32>
    %286 = vector.extract_strided_slice %285 {offsets = [0, 0], sizes = [8, 128], strides = [1, 1]} : vector<8x512xf32> to vector<8x128xf32>
    %287 = arith.negf %286 : vector<8x128xf32>
    %288 = math.exp %287 : vector<8x128xf32>
    %cst_132 = arith.constant 1.000000e+00 : f32
    %289 = vector.broadcast %cst_132 : f32 to vector<8x128xf32>
    %290 = arith.addf %289, %288 : vector<8x128xf32>
    %291 = arith.divf %289, %290 : vector<8x128xf32>
    %292 = vector.extract_strided_slice %285 {offsets = [0, 128], sizes = [8, 128], strides = [1, 1]} : vector<8x512xf32> to vector<8x128xf32>
    %293 = arith.negf %292 : vector<8x128xf32>
    %294 = math.exp %293 : vector<8x128xf32>
    %cst_133 = arith.constant 1.000000e+00 : f32
    %295 = vector.broadcast %cst_133 : f32 to vector<8x128xf32>
    %296 = arith.addf %295, %294 : vector<8x128xf32>
    %297 = arith.divf %295, %296 : vector<8x128xf32>
    %298 = vector.extract_strided_slice %285 {offsets = [0, 256], sizes = [8, 128], strides = [1, 1]} : vector<8x512xf32> to vector<8x128xf32>
    %299 = math.tanh %298 : vector<8x128xf32>
    %300 = vector.extract_strided_slice %285 {offsets = [0, 384], sizes = [8, 128], strides = [1, 1]} : vector<8x512xf32> to vector<8x128xf32>
    %301 = arith.negf %300 : vector<8x128xf32>
    %302 = math.exp %301 : vector<8x128xf32>
    %cst_134 = arith.constant 1.000000e+00 : f32
    %303 = vector.broadcast %cst_134 : f32 to vector<8x128xf32>
    %304 = arith.addf %303, %302 : vector<8x128xf32>
    %305 = arith.divf %303, %304 : vector<8x128xf32>
    %306 = arith.mulf %297, %280 : vector<8x128xf32>
    %307 = arith.mulf %291, %299 : vector<8x128xf32>
    %308 = arith.addf %306, %307 : vector<8x128xf32>
    %309 = math.tanh %308 : vector<8x128xf32>
    %310 = arith.mulf %305, %309 : vector<8x128xf32>
    %c0_135 = arith.constant 0 : index
    %c0_136 = arith.constant 0 : index
    %311 = vector.load %arg9[%c0_135, %c0_136] : memref<8x128xf32, #tpu.memory_space<vmem>>, vector<8x128xf32>
    tpu.vector_store %arg9[%c0_135, %c0_136], %308 {strides = array<i32>} : memref<8x128xf32, #tpu.memory_space<vmem>>, vector<8x128xf32>,
    %c0_137 = arith.constant 0 : index
    %c0_138 = arith.constant 0 : index
    %312 = vector.load %arg8[%c0_137, %c0_138] : memref<8x128xf32, #tpu.memory_space<vmem>>, vector<8x128xf32>
    tpu.vector_store %arg8[%c0_137, %c0_138], %310 {strides = array<i32>} : memref<8x128xf32, #tpu.memory_space<vmem>>, vector<8x128xf32>,
    %313 = arith.index_cast %c7_i32 : i32 to index
    %c0_139 = arith.constant 0 : index
    %c0_140 = arith.constant 0 : index
    %314 = vector.load %arg11[%313, %c0_139, %c0_140] : memref<8x8x128xf32, #tpu.memory_space<vmem>>, vector<1x8x128xf32>
    %315 = vector.shape_cast %314 : vector<1x8x128xf32> to vector<8x128xf32>
    %316 = vector.shape_cast %310 : vector<8x128xf32> to vector<1x8x128xf32>
    tpu.vector_store %arg11[%313, %c0_139, %c0_140], %316 {strides = array<i32>} : memref<8x8x128xf32, #tpu.memory_space<vmem>>, vector<1x8x128xf32>,
    %c8_i32 = arith.constant 8 : i32
    %c0_141 = arith.constant 0 : index
    %c0_142 = arith.constant 0 : index
    %c0_143 = arith.constant 0 : index
    %317 = vector.load %arg11[%c0_141, %c0_142, %c0_143] : memref<8x8x128xf32, #tpu.memory_space<vmem>>, vector<8x8x128xf32>
    %318 = vector.shape_cast %317 : vector<8x8x128xf32> to vector<64x128xf32>
    %c0_144 = arith.constant 0 : index
    %c0_145 = arith.constant 0 : index
    %319 = vector.load %arg5[%c0_144, %c0_145] : memref<128x128xf32, #tpu.memory_space<vmem>>, vector<128x128xf32>
    %cst_146 = arith.constant dense<0.000000e+00> : vector<64x128xf32>
    %320 = tpu.matmul %318, %319, %cst_146 {dimension_numbers = #tpu.dot_dimension_numbers<[1], [0], [0], [1], [0, 0, 1, 1], [], []>} : vector<64x128xf32>, vector<128x128xf32>, vector<64x128xf32> -> vector<64x128xf32>
    %c0_147 = arith.constant 0 : index
    %c0_148 = arith.constant 0 : index
    %321 = vector.load %arg6[%c0_147, %c0_148] : memref<1x128xf32, #tpu.memory_space<vmem>>, vector<1x128xf32>
    %322 = vector.broadcast %321 : vector<1x128xf32> to vector<64x128xf32>
    %323 = arith.addf %320, %322 : vector<64x128xf32>
    %324 = vector.shape_cast %323 : vector<64x128xf32> to vector<8x8x128xf32>
    %c0_149 = arith.constant 0 : index
    %c0_150 = arith.constant 0 : index
    %c0_151 = arith.constant 0 : index
    %325 = vector.load %arg7[%c0_149, %c0_150, %c0_151] : memref<8x8x128xf32, #tpu.memory_space<vmem>>, vector<8x8x128xf32>
    tpu.vector_store %arg7[%c0_149, %c0_150, %c0_151], %324 {strides = array<i32>} : memref<8x8x128xf32, #tpu.memory_space<vmem>>, vector<8x8x128xf32>,
    return
  }
  func.func @transform_0(%arg0: i32) -> (i32, i32, i32) {
    %c0_i32 = arith.constant 0 : i32
    %c0_i32_0 = arith.constant 0 : i32
    %c0_i32_1 = arith.constant 0 : i32
    return %arg0, %c0_i32, %c0_i32_0 : i32, i32, i32
  }
  func.func @transform_1(%arg0: i32) -> (i32, i32) {
    %c0_i32 = arith.constant 0 : i32
    %c0_i32_0 = arith.constant 0 : i32
    %c0_i32_1 = arith.constant 0 : i32
    return %c0_i32, %c0_i32_0 : i32, i32
  }
  func.func @transform_2(%arg0: i32) -> (i32, i32) {
    %c0_i32 = arith.constant 0 : i32
    %c0_i32_0 = arith.constant 0 : i32
    %c0_i32_1 = arith.constant 0 : i32
    return %c0_i32, %c0_i32_0 : i32, i32
  }
  func.func @transform_3(%arg0: i32) -> (i32, i32) {
    %c0_i32 = arith.constant 0 : i32
    %c0_i32_0 = arith.constant 0 : i32
    %c0_i32_1 = arith.constant 0 : i32
    return %c0_i32, %c0_i32_0 : i32, i32
  }
  func.func @transform_4(%arg0: i32) -> (i32, i32) {
    %c0_i32 = arith.constant 0 : i32
    %c0_i32_0 = arith.constant 0 : i32
    %c0_i32_1 = arith.constant 0 : i32
    return %c0_i32, %c0_i32_0 : i32, i32
  }
  func.func @transform_5(%arg0: i32) -> (i32, i32) {
    %c0_i32 = arith.constant 0 : i32
    %c0_i32_0 = arith.constant 0 : i32
    %c0_i32_1 = arith.constant 0 : i32
    return %c0_i32, %c0_i32_0 : i32, i32
  }
  func.func @transform_6(%arg0: i32) -> (i32, i32, i32) {
    %c0_i32 = arith.constant 0 : i32
    %c0_i32_0 = arith.constant 0 : i32
    %c0_i32_1 = arith.constant 0 : i32
    return %arg0, %c0_i32, %c0_i32_0 : i32, i32, i32
  }
}

</mosaic_0001>

<llo_original>
// kernel: tpu_custom_call.1
$region0: #{tpu_custom_call.1}
  #allocation0 [shape = 'u32[]', space=smem, size = 0x4, offset = 0x4, fixed_abs, tag = 'smem constant byte address 0x4 - core index']
  #allocation1 [shape = 'u32[144,128]{1,0:T(1,128)}', space=vmem, size = 0x12000, scoped, tag = 'internal scratch']
  #allocation2 [shape = 'f32[8,128]{1,0:T(8,128)}', space=vmem, size = 0x1000, scoped, tag = 'scratch operand']
  #allocation3 [shape = 'f32[8,128]{1,0:T(8,128)}', space=vmem, size = 0x1000, scoped, tag = 'scratch operand']
  #allocation4 [shape = 'f32[8,8,512]{2,1,0:T(8,128)}', space=vmem, size = 0x20000, scoped, tag = 'scratch operand']
  #allocation5 [shape = 'f32[8,8,128]{2,1,0:T(8,128)}', space=vmem, size = 0x8000, scoped, tag = 'scratch operand']
  %s0 = inlined_call_operand.hbm [shape: f32[24,8,128], index: 0, kind: input, shape index: {}]
  %s1 = inlined_call_operand.hbm [shape: f32[128,512], index: 1, kind: input, shape index: {}]
  %s2 = inlined_call_operand.hbm [shape: f32[128,512], index: 2, kind: input, shape index: {}]
  %s3 = inlined_call_operand.vmem [shape: f32[1,512], index: 3, kind: input, shape index: {}]
  %s4 = inlined_call_operand.hbm [shape: f32[128,128], index: 4, kind: input, shape index: {}]
  %s5 = inlined_call_operand.vmem [shape: f32[1,128], index: 5, kind: input, shape index: {}]
  %s6 = inlined_call_operand.hbm [shape: f32[24,8,128], index: 6, kind: output, shape index: {}]
  %s7 = sld [smem:[#allocation0]]
  $region77: #{tpu_custom_call.1} parent=0
    _
  %s9 = ssub.s32 1, %s7
  %s10 = scalar_select 0, %s9, %s7
  $region1: #{tpu_custom_call.1} parent=0
    #allocation6 [shape = 'u8[65536]{0}', space=vmem, size = 0x10000, scoped, tag = 'input window, operand 0']
    #allocation7 [shape = 's32[2]{0}', space=sflag, size = 0x8, scoped, tag = 'scoped memory for tpu_custom_call.1']
    #allocation8 [shape = 's32[2]{0}', space=sflag, size = 0x8, scoped, tag = 'scoped memory for tpu_custom_call.1']
    #allocation9 [shape = 'u8[262144]{0}', space=vmem, size = 0x40000, scoped, tag = 'input window, operand 1, single buffered']
    #allocation10 [shape = 's32[1]{0}', space=sflag, size = 0x4, scoped, tag = 'scoped memory for tpu_custom_call.1']
    #allocation11 [shape = 'u8[262144]{0}', space=vmem, size = 0x40000, scoped, tag = 'input window, operand 2, single buffered']
    #allocation12 [shape = 'u8[65536]{0}', space=vmem, size = 0x10000, scoped, tag = 'input window, operand 4, single buffered']
    #allocation13 [shape = 's32[1]{0}', space=sflag, size = 0x4, scoped, tag = 'scoped memory for tpu_custom_call.1']
    #allocation14 [shape = 'u8[65536]{0}', space=vmem, size = 0x10000, scoped, tag = 'output window, operand 0']
    %11 = vsyncpa [#allocation7], 0
    %s12 = scalar_lea.sflag [#allocation7], 1
    %13 = vsyncpa %s12, 0
    %14 = vsyncpa [#allocation10], 0
    %15 = vsyncpa [#allocation13], 0
    %16 = vsyncpa [#allocation8], 0
    %s17 = scalar_lea.sflag [#allocation8], 1
    %18 = vsyncpa %s17, 0
    loop: start=0, step=1, limit=5
    $region2: #{tpu_custom_call.1} parent=1 // loop_pre_header
      _
    $region3: #{tpu_custom_call.1} parent=1 // loop_header
      %s20 = sphi 0, %s24
      %p21 = scmp.ge.s32.totalorder %s20, 5
      %s30 = sphi 0, %s32
      %s33 = sphi 0, %s30
      %s34 = sphi 0, %s33
      %s50 = sphi 0, %s34
      %s54 = sphi 0, %s54
      %s56 = sphi 0, %s54
      %s57 = sphi 0, %s56
      %s71 = sphi 0, %s57
      %s75 = sphi 0, %s75
      %s77 = sphi 0, %s75
      %s78 = sphi 0, %s77
      %s92 = sphi 0, %s78
      %s96 = sphi 0, %s96
      %s98 = sphi 0, %s96
      %s99 = sphi 0, %s98
      %s113 = sphi 0, %s99
      %s117 = sphi 0, %s117
      %s119 = sphi 0, %s117
      %s120 = sphi 0, %s119
      %s134 = sphi 0, %s120
      %s138 = sphi 0, %s138
      %s140 = sphi 0, %s138
      %s141 = sphi 0, %s140
      %s155 = sphi 0, %s141
      %s161 = sphi 0, %s163
      %s164 = sphi 0, %s161
      %s165 = sphi 0, %s164
      %s181 = sphi 0, %s165
    $region4: #{tpu_custom_call.1} parent=1 // loop_header_branch
      %23 = sbr.rel (%p21) target = $region8
    $region5: #{tpu_custom_call.1} parent=1 // loop_body
      %s25 = ssub.s32 %s20, 1
      %s26 = ssub.s32 %s20, 2
      %s27 = sadd.s32 %s20, 1
      %s28 = ssub.s32 %s20, %s27
      %p29 = scmp.eq.s32.totalorder %s28, 0
      %s31 = sadd.s32 %s30, 1
      %s32 = scalar_select %p29, %s30, %s31
      %p35 = pneg %p29
      %p36 = scmp.eq.s32.totalorder %s20, 2
      %p37 = por %p35, %p36
      %p38 = scmp.ne.s32.totalorder %s30, %s33
      %p39 = scmp.eq.s32.totalorder %s20, 0
      %p40 = por %p38, %p39
      %p41 = scmp.ne.s32.totalorder %s30, %s33
      %p42 = scmp.eq.s32.totalorder %s25, 2
      %p43 = por %p41, %p42
      %p44 = scmp.ne.s32.totalorder %s33, %s34
      %p45 = scmp.eq.s32.totalorder %s25, 0
      %p46 = por %p44, %p45
      %p47 = scmp.ne.s32.totalorder %s33, %s34
      %p48 = scmp.eq.s32.totalorder %s26, 2
      %p49 = por %p47, %p48
      %p51 = scmp.ne.s32.totalorder %s34, %s50
      %p52 = scmp.eq.s32.totalorder %s26, 0
      %p53 = por %p51, %p52
      %s55 = sadd.s32 %s54, 1
      %p58 = scmp.eq.s32.totalorder %s20, 2
      %p59 = scmp.ne.s32.totalorder %s54, %s56
      %p60 = scmp.eq.s32.totalorder %s20, 0
      %p61 = por %p59, %p60
      %p62 = scmp.ne.s32.totalorder %s54, %s56
      %p63 = scmp.eq.s32.totalorder %s25, 2
      %p64 = por %p62, %p63
      %p65 = scmp.ne.s32.totalorder %s56, %s57
      %p66 = scmp.eq.s32.totalorder %s25, 0
      %p67 = por %p65, %p66
      %p68 = scmp.ne.s32.totalorder %s56, %s57
      %p69 = scmp.eq.s32.totalorder %s26, 2
      %p70 = por %p68, %p69
      %p72 = scmp.ne.s32.totalorder %s57, %s71
      %p73 = scmp.eq.s32.totalorder %s26, 0
      %p74 = por %p72, %p73
      %s76 = sadd.s32 %s75, 1
      %p79 = scmp.eq.s32.totalorder %s20, 2
      %p80 = scmp.ne.s32.totalorder %s75, %s77
      %p81 = scmp.eq.s32.totalorder %s20, 0
      %p82 = por %p80, %p81
      %p83 = scmp.ne.s32.totalorder %s75, %s77
      %p84 = scmp.eq.s32.totalorder %s25, 2
      %p85 = por %p83, %p84
      %p86 = scmp.ne.s32.totalorder %s77, %s78
      %p87 = scmp.eq.s32.totalorder %s25, 0
      %p88 = por %p86, %p87
      %p89 = scmp.ne.s32.totalorder %s77, %s78
      %p90 = scmp.eq.s32.totalorder %s26, 2
      %p91 = por %p89, %p90
      %p93 = scmp.ne.s32.totalorder %s78, %s92
      %p94 = scmp.eq.s32.totalorder %s26, 0
      %p95 = por %p93, %p94
      %s97 = sadd.s32 %s96, 1
      %p100 = scmp.eq.s32.totalorder %s20, 2
      %p101 = scmp.ne.s32.totalorder %s96, %s98
      %p102 = scmp.eq.s32.totalorder %s20, 0
      %p103 = por %p101, %p102
      %p104 = scmp.ne.s32.totalorder %s96, %s98
      %p105 = scmp.eq.s32.totalorder %s25, 2
      %p106 = por %p104, %p105
      %p107 = scmp.ne.s32.totalorder %s98, %s99
      %p108 = scmp.eq.s32.totalorder %s25, 0
      %p109 = por %p107, %p108
      %p110 = scmp.ne.s32.totalorder %s98, %s99
      %p111 = scmp.eq.s32.totalorder %s26, 2
      %p112 = por %p110, %p111
      %p114 = scmp.ne.s32.totalorder %s99, %s113
      %p115 = scmp.eq.s32.totalorder %s26, 0
      %p116 = por %p114, %p115
      %s118 = sadd.s32 %s117, 1
      %p121 = scmp.eq.s32.totalorder %s20, 2
      %p122 = scmp.ne.s32.totalorder %s117, %s119
      %p123 = scmp.eq.s32.totalorder %s20, 0
      %p124 = por %p122, %p123
      %p125 = scmp.ne.s32.totalorder %s117, %s119
      %p126 = scmp.eq.s32.totalorder %s25, 2
      %p127 = por %p125, %p126
      %p128 = scmp.ne.s32.totalorder %s119, %s120
      %p129 = scmp.eq.s32.totalorder %s25, 0
      %p130 = por %p128, %p129
      %p131 = scmp.ne.s32.totalorder %s119, %s120
      %p132 = scmp.eq.s32.totalorder %s26, 2
      %p133 = por %p131, %p132
      %p135 = scmp.ne.s32.totalorder %s120, %s134
      %p136 = scmp.eq.s32.totalorder %s26, 0
      %p137 = por %p135, %p136
      %s139 = sadd.s32 %s138, 1
      %p142 = scmp.eq.s32.totalorder %s20, 2
      %p143 = scmp.ne.s32.totalorder %s138, %s140
      %p144 = scmp.eq.s32.totalorder %s20, 0
      %p145 = por %p143, %p144
      %p146 = scmp.ne.s32.totalorder %s138, %s140
      %p147 = scmp.eq.s32.totalorder %s25, 2
      %p148 = por %p146, %p147
      %p149 = scmp.ne.s32.totalorder %s140, %s141
      %p150 = scmp.eq.s32.totalorder %s25, 0
      %p151 = por %p149, %p150
      %p152 = scmp.ne.s32.totalorder %s140, %s141
      %p153 = scmp.eq.s32.totalorder %s26, 2
      %p154 = por %p152, %p153
      %p156 = scmp.ne.s32.totalorder %s141, %s155
      %p157 = scmp.eq.s32.totalorder %s26, 0
      %p158 = por %p156, %p157
      %s159 = ssub.s32 %s20, %s27
      %p160 = scmp.eq.s32.totalorder %s159, 0
      %s162 = sadd.s32 %s161, 1
      %s163 = scalar_select %p160, %s161, %s162
      %p166 = pneg %p160
      %p167 = scmp.eq.s32.totalorder %s20, 2
      %p168 = por %p166, %p167
      %p169 = scmp.ne.s32.totalorder %s161, %s164
      %p170 = scmp.eq.s32.totalorder %s20, 0
      %p171 = por %p169, %p170
      %p172 = scmp.ne.s32.totalorder %s161, %s164
      %p173 = scmp.eq.s32.totalorder %s25, 2
      %p174 = por %p172, %p173
      %p175 = scmp.ne.s32.totalorder %s164, %s165
      %p176 = scmp.eq.s32.totalorder %s25, 0
      %p177 = por %p175, %p176
      %p178 = scmp.ne.s32.totalorder %s164, %s165
      %p179 = scmp.eq.s32.totalorder %s26, 2
      %p180 = por %p178, %p179
      %p182 = scmp.ne.s32.totalorder %s165, %s181
      %p183 = scmp.eq.s32.totalorder %s26, 0
      %p184 = por %p182, %p183
      %p185 = scmp.le.s32.totalorder 1, %s20
      %p186 = scmp.lt.s32.totalorder %s20, 4
      %p187 = pnand %p185, %p186
      %p188 = pneg %p187
      // Predicated region
      $region9: #{tpu_custom_call.1} parent=5 // pred_check
        _
      $region10: #{tpu_custom_call.1} parent=5 // pred_check_branch
        %190 = sbr.rel (%p187) target = $region12
      $region11: #{tpu_custom_call.1} parent=5 // pred_region
        %s191 = ssub.s32 %s20, 1
        // Predicated region
        $region13: #{tpu_custom_call.1} parent=11 // pred_check
          %p192 = pneg %p67
        $region14: #{tpu_custom_call.1} parent=11 // pred_check_branch
          %194 = sbr.rel (%p192) target = $region16
        $region15: #{tpu_custom_call.1} parent=11 // pred_region
          %s196 = ssub.s32 8192, 8192
          %197 = vsyncadd [#allocation10], %s196
          %s198 = sshll.u32 [#allocation9], 4
          %s199 = int_to_ptr.vmem [resolvable:$true] %s198
          %204 = dma.hbm_to_vmem [thread:$0]  %s1, 8192, %s199, [#allocation10], 512, 512, 32
        $region16: #{tpu_custom_call.1} parent=11 // pred_fallthru
          _
        // Predicated region
        $region17: #{tpu_custom_call.1} parent=11 // pred_check
          %p205 = pneg %p88
        $region18: #{tpu_custom_call.1} parent=11 // pred_check_branch
          %207 = sbr.rel (%p205) target = $region20
        $region19: #{tpu_custom_call.1} parent=11 // pred_region
          %s209 = ssub.s32 8192, 8192
          %210 = vsyncadd [#allocation10], %s209
          %s211 = sshll.u32 [#allocation11], 4
          %s212 = int_to_ptr.vmem [resolvable:$true] %s211
          %217 = dma.hbm_to_vmem [thread:$0]  %s2, 8192, %s212, [#allocation10], 512, 512, 32
        $region20: #{tpu_custom_call.1} parent=11 // pred_fallthru
          _
        // Predicated region
        $region21: #{tpu_custom_call.1} parent=11 // pred_check
          %p218 = pneg %p109
        $region22: #{tpu_custom_call.1} parent=11 // pred_check_branch
          %220 = sbr.rel (%p218) target = $region24
        $region23: #{tpu_custom_call.1} parent=11 // pred_region
          _
        $region24: #{tpu_custom_call.1} parent=11 // pred_fallthru
          _
        // Predicated region
        $region25: #{tpu_custom_call.1} parent=11 // pred_check
          %p221 = pneg %p130
        $region26: #{tpu_custom_call.1} parent=11 // pred_check_branch
          %223 = sbr.rel (%p221) target = $region28
        $region27: #{tpu_custom_call.1} parent=11 // pred_region
          %s225 = ssub.s32 2048, 2048
          %226 = vsyncadd [#allocation13], %s225
          %s227 = sshll.u32 [#allocation12], 4
          %s228 = int_to_ptr.vmem [resolvable:$true] %s227
          %233 = dma.hbm_to_vmem [thread:$0]  %s4, 2048, %s228, [#allocation13], 128, 128, 8
        $region28: #{tpu_custom_call.1} parent=11 // pred_fallthru
          _
        // Predicated region
        $region29: #{tpu_custom_call.1} parent=11 // pred_check
          %p234 = pneg %p151
        $region30: #{tpu_custom_call.1} parent=11 // pred_check_branch
          %236 = sbr.rel (%p234) target = $region32
        $region31: #{tpu_custom_call.1} parent=11 // pred_region
          _
        $region32: #{tpu_custom_call.1} parent=11 // pred_fallthru
          _
      $region12: #{tpu_custom_call.1} parent=5 // pred_fallthru
        _
      %p237 = scmp.lt.s32.totalorder %s20, 3
      // Predicated region
      $region33: #{tpu_custom_call.1} parent=5 // pred_check
        %p238 = pneg %p237
      $region34: #{tpu_custom_call.1} parent=5 // pred_check_branch
        %240 = sbr.rel (%p238) target = $region36
      $region35: #{tpu_custom_call.1} parent=5 // pred_region
        // Predicated region
        $region37: #{tpu_custom_call.1} parent=35 // pred_check
          %p241 = pneg %p40
        $region38: #{tpu_custom_call.1} parent=35 // pred_check_branch
          %243 = sbr.rel (%p241) target = $region40
        $region39: #{tpu_custom_call.1} parent=35 // pred_region
          %s244 = sand.u32 %s30, 1
          %s245 = scalar_lea.sflag [#allocation7], %s244
          %s246 = sand.u32 %s30, 1
          %s247 = smul.addr %s246, 64
          %s248 = scalar_lea.vmem [#allocation6], %s247
          %s249 = smul.u32 8, %s20
          %s251 = ssub.s32 1024, 1024
          %252 = vsyncadd %s245, %s251
          %s253 = smul.addr %s249, 128
          %s254 = scalar_lea.hbm %s0, %s253
          %s255 = sshll.u32 %s248, 4
          %s256 = int_to_ptr.vmem [resolvable:$true] %s255
          %261 = dma.hbm_to_vmem [thread:$0]  %s254, 1024, %s256, %s245, 128, 128, 8
        $region40: #{tpu_custom_call.1} parent=35 // pred_fallthru
          _
      $region36: #{tpu_custom_call.1} parent=5 // pred_fallthru
        _
      %p262 = scmp.le.s32.totalorder 1, %s20
      %p263 = scmp.lt.s32.totalorder %s20, 4
      %p264 = pnand %p262, %p263
      %p265 = pneg %p264
      // Predicated region
      $region41: #{tpu_custom_call.1} parent=5 // pred_check
        _
      $region42: #{tpu_custom_call.1} parent=5 // pred_check_branch
        %267 = sbr.rel (%p264) target = $region44
      $region43: #{tpu_custom_call.1} parent=5 // pred_region
        %s268 = ssub.s32 %s20, 1
        %s269 = sand.u32 %s33, 1
        %s270 = scalar_lea.sflag [#allocation7], %s269
        %s271 = sand.u32 %s33, 1
        %s272 = smul.addr %s271, 64
        %s273 = scalar_lea.vmem [#allocation6], %s272
        // Predicated region
        $region45: #{tpu_custom_call.1} parent=43 // pred_check
          %p274 = pneg %p46
        $region46: #{tpu_custom_call.1} parent=43 // pred_check_branch
          %276 = sbr.rel (%p274) target = $region48
        $region47: #{tpu_custom_call.1} parent=43 // pred_region
          %277 = dma.done %s270, 1024
        $region48: #{tpu_custom_call.1} parent=43 // pred_fallthru
          _
        // Predicated region
        $region49: #{tpu_custom_call.1} parent=43 // pred_check
          %p278 = pneg %p67
        $region50: #{tpu_custom_call.1} parent=43 // pred_check_branch
          %280 = sbr.rel (%p278) target = $region52
        $region51: #{tpu_custom_call.1} parent=43 // pred_region
          %281 = dma.done [#allocation10], 8192
        $region52: #{tpu_custom_call.1} parent=43 // pred_fallthru
          _
        // Predicated region
        $region53: #{tpu_custom_call.1} parent=43 // pred_check
          %p282 = pneg %p88
        $region54: #{tpu_custom_call.1} parent=43 // pred_check_branch
          %284 = sbr.rel (%p282) target = $region56
        $region55: #{tpu_custom_call.1} parent=43 // pred_region
          %285 = dma.done [#allocation10], 8192
        $region56: #{tpu_custom_call.1} parent=43 // pred_fallthru
          _
        // Predicated region
        $region57: #{tpu_custom_call.1} parent=43 // pred_check
          %p286 = pneg %p130
        $region58: #{tpu_custom_call.1} parent=43 // pred_check_branch
          %288 = sbr.rel (%p286) target = $region60
        $region59: #{tpu_custom_call.1} parent=43 // pred_region
          %289 = dma.done [#allocation13], 2048
        $region60: #{tpu_custom_call.1} parent=43 // pred_fallthru
          _
        %s290 = sand.u32 %s33, 1
        %s291 = scalar_lea.sflag [#allocation7], %s290
        %s292 = sand.u32 %s33, 1
        %s293 = smul.addr %s292, 64
        %s294 = scalar_lea.vmem [#allocation6], %s293
        %p295 = pneg %p46
        %p296 = pneg %p43
        %p297 = pneg %p67
        %p298 = pneg %p64
        %p299 = pneg %p88
        %p300 = pneg %p85
        %p301 = pneg %p109
        %p302 = pneg %p106
        %p303 = pneg %p130
        %p304 = pneg %p127
        %p305 = pneg %p151
        %p306 = pneg %p148
        %p307 = pneg %p177
        %p308 = pneg %p174
        %s309 = sand.u32 %s164, 1
        %s310 = scalar_lea.sflag [#allocation8], %s309
        %s311 = sand.u32 %s164, 1
        %s312 = smul.addr %s311, 64
        %s313 = scalar_lea.vmem [#allocation14], %s312
        %s314 = smul.u32 8, %s25
        %s315 = smul.u32 8, %s25
        %p316 = scmp.eq.s32.totalorder %s25, 0
        // Predicated region
        $region61: #{tpu_custom_call.1} parent=43 // pred_check
          %p317 = pneg %p316
        $region62: #{tpu_custom_call.1} parent=43 // pred_check_branch
          %319 = sbr.rel (%p317) target = $region64
        $region63: #{tpu_custom_call.1} parent=43 // pred_region
          %320 = vst [vmem:[#allocation2] sm:$0xff] 0.0
          %321 = vst [vmem:[#allocation3] sm:$0xff] 0.0
        $region64: #{tpu_custom_call.1} parent=43 // pred_fallthru
          _
        %v322 = vld [vmem:[%s273] sm:$0xff]
        %v323 = vld [vmem:[%s273 + $0x8] sm:$0xff]
        %v324 = vld [vmem:[%s273 + $0x10] sm:$0xff]
        %v325 = vld [vmem:[%s273 + $0x18] sm:$0xff]
        %v326 = vld [vmem:[%s273 + $0x20] sm:$0xff]
        %v327 = vld [vmem:[%s273 + $0x28] sm:$0xff]
        %v328 = vld [vmem:[%s273 + $0x30] sm:$0xff]
        %v329 = vld [vmem:[%s273 + $0x38] sm:$0xff]
        %v330 = vld [vmem:[#allocation9] sm:$0xff]
        %v331 = vld [vmem:[#allocation9 + $0x8] sm:$0xff]
        %v332 = vld [vmem:[#allocation9 + $0x10] sm:$0xff]
        %v333 = vld [vmem:[#allocation9 + $0x18] sm:$0xff]
        %v334 = vld [vmem:[#allocation9 + $0x20] sm:$0xff]
        %v335 = vld [vmem:[#allocation9 + $0x28] sm:$0xff]
        %v336 = vld [vmem:[#allocation9 + $0x30] sm:$0xff]
        %v337 = vld [vmem:[#allocation9 + $0x38] sm:$0xff]
        %v338 = vld [vmem:[#allocation9 + $0x40] sm:$0xff]
        %v339 = vld [vmem:[#allocation9 + $0x48] sm:$0xff]
        %v340 = vld [vmem:[#allocation9 + $0x50] sm:$0xff]
        %v341 = vld [vmem:[#allocation9 + $0x58] sm:$0xff]
        %v342 = vld [vmem:[#allocation9 + $0x60] sm:$0xff]
        %v343 = vld [vmem:[#allocation9 + $0x68] sm:$0xff]
        %v344 = vld [vmem:[#allocation9 + $0x70] sm:$0xff]
        %v345 = vld [vmem:[#allocation9 + $0x78] sm:$0xff]
        %v346 = vld [vmem:[#allocation9 + $0x80] sm:$0xff]
        %v347 = vld [vmem:[#allocation9 + $0x88] sm:$0xff]
        %v348 = vld [vmem:[#allocation9 + $0x90] sm:$0xff]
        %v349 = vld [vmem:[#allocation9 + $0x98] sm:$0xff]
        %v350 = vld [vmem:[#allocation9 + $0xa0] sm:$0xff]
        %v351 = vld [vmem:[#allocation9 + $0xa8] sm:$0xff]
        %v352 = vld [vmem:[#allocation9 + $0xb0] sm:$0xff]
        %v353 = vld [vmem:[#allocation9 + $0xb8] sm:$0xff]
        %v354 = vld [vmem:[#allocation9 + $0xc0] sm:$0xff]
        %v355 = vld [vmem:[#allocation9 + $0xc8] sm:$0xff]
        %v356 = vld [vmem:[#allocation9 + $0xd0] sm:$0xff]
        %v357 = vld [vmem:[#allocation9 + $0xd8] sm:$0xff]
        %v358 = vld [vmem:[#allocation9 + $0xe0] sm:$0xff]
        %v359 = vld [vmem:[#allocation9 + $0xe8] sm:$0xff]
        %v360 = vld [vmem:[#allocation9 + $0xf0] sm:$0xff]
        %v361 = vld [vmem:[#allocation9 + $0xf8] sm:$0xff]
        %v362 = vld [vmem:[#allocation9 + $0x100] sm:$0xff]
        %v363 = vld [vmem:[#allocation9 + $0x108] sm:$0xff]
        %v364 = vld [vmem:[#allocation9 + $0x110] sm:$0xff]
        %v365 = vld [vmem:[#allocation9 + $0x118] sm:$0xff]
        %v366 = vld [vmem:[#allocation9 + $0x120] sm:$0xff]
        %v367 = vld [vmem:[#allocation9 + $0x128] sm:$0xff]
        %v368 = vld [vmem:[#allocation9 + $0x130] sm:$0xff]
        %v369 = vld [vmem:[#allocation9 + $0x138] sm:$0xff]
        %v370 = vld [vmem:[#allocation9 + $0x140] sm:$0xff]
        %v371 = vld [vmem:[#allocation9 + $0x148] sm:$0xff]
        %v372 = vld [vmem:[#allocation9 + $0x150] sm:$0xff]
        %v373 = vld [vmem:[#allocation9 + $0x158] sm:$0xff]
        %v374 = vld [vmem:[#allocation9 + $0x160] sm:$0xff]
        %v375 = vld [vmem:[#allocation9 + $0x168] sm:$0xff]
        %v376 = vld [vmem:[#allocation9 + $0x170] sm:$0xff]
        %v377 = vld [vmem:[#allocation9 + $0x178] sm:$0xff]
        %v378 = vld [vmem:[#allocation9 + $0x180] sm:$0xff]
        %v379 = vld [vmem:[#allocation9 + $0x188] sm:$0xff]
        %v380 = vld [vmem:[#allocation9 + $0x190] sm:$0xff]
        %v381 = vld [vmem:[#allocation9 + $0x198] sm:$0xff]
        %v382 = vld [vmem:[#allocation9 + $0x1a0] sm:$0xff]
        %v383 = vld [vmem:[#allocation9 + $0x1a8] sm:$0xff]
        %v384 = vld [vmem:[#allocation9 + $0x1b0] sm:$0xff]
        %v385 = vld [vmem:[#allocation9 + $0x1b8] sm:$0xff]
        %v386 = vld [vmem:[#allocation9 + $0x1c0] sm:$0xff]
        %v387 = vld [vmem:[#allocation9 + $0x1c8] sm:$0xff]
        %v388 = vld [vmem:[#allocation9 + $0x1d0] sm:$0xff]
        %v389 = vld [vmem:[#allocation9 + $0x1d8] sm:$0xff]
        %v390 = vld [vmem:[#allocation9 + $0x1e0] sm:$0xff]
        %v391 = vld [vmem:[#allocation9 + $0x1e8] sm:$0xff]
        %v392 = vld [vmem:[#allocation9 + $0x1f0] sm:$0xff]
        %v393 = vld [vmem:[#allocation9 + $0x1f8] sm:$0xff]
        %v394 = vld [vmem:[%s3] sm:$0xf]
        %v396 = vlaneseq
        %v397 = vshrl.u32 %v396, 7
        %v398 = vsub.s32 0, %v397
        %v399 = vrot.slane %v394, %v398
        %v400 = vlaneseq
        %v401 = vshrl.u32 %v400, 7
        %v402 = vsub.s32 1, %v401
        %v403 = vrot.slane %v394, %v402
        %v404 = vlaneseq
        %v405 = vshrl.u32 %v404, 7
        %v406 = vsub.s32 2, %v405
        %v407 = vrot.slane %v394, %v406
        %v408 = vlaneseq
        %v409 = vshrl.u32 %v408, 7
        %v410 = vsub.s32 3, %v409
        %v411 = vrot.slane %v394, %v410
        %416 = vmatprep.subr.mxu0 %v391
        %417 = vmatpush1.msra.mxu0 %v390
        %418 = vmatprep.subr.mxu0 %v387
        %419 = vmatpush1.msra.mxu0 %v386
        %420 = vmatprep.subr.mxu0 %v383
        %421 = vmatpush1.msra.mxu0 %v382
        %422 = vmatprep.subr.mxu0 %v379
        %423 = vmatpush1.msra.mxu0 %v378
        %424 = vmatprep.subr.mxu0 %v375
        %425 = vmatpush1.msra.mxu0 %v374
        %426 = vmatprep.subr.mxu0 %v371
        %427 = vmatpush1.msra.mxu0 %v370
        %428 = vmatprep.subr.mxu0 %v367
        %429 = vmatpush1.msra.mxu0 %v366
        %430 = vmatprep.subr.mxu0 %v363
        %431 = vmatpush1.msra.mxu0 %v362
        %432 = vmatprep.subr.mxu0 %v359
        %433 = vmatpush1.msra.mxu0 %v358
        %434 = vmatprep.subr.mxu0 %v355
        %435 = vmatpush1.msra.mxu0 %v354
        %436 = vmatprep.subr.mxu0 %v351
        %437 = vmatpush1.msra.mxu0 %v350
        %438 = vmatprep.subr.mxu0 %v347
        %439 = vmatpush1.msra.mxu0 %v346
        %440 = vmatprep.subr.mxu0 %v343
        %441 = vmatpush1.msra.mxu0 %v342
        %442 = vmatprep.subr.mxu0 %v339
        %443 = vmatpush1.msra.mxu0 %v338
        %444 = vmatprep.subr.mxu0 %v335
        %445 = vmatpush1.msra.mxu0 %v334
        %446 = vmatprep.subr.mxu0 %v331
        %447 = vmatpush1.msra.mxu0 %v330
        %448 = vmatprep.subr.mxu0 0.0
        %449 = vmatpush2.msra.mxu0 0.0
        %450 = vmatprep.subr.mxu0 0.0
        %451 = vmatpush2.msra.mxu0 0.0
        %452 = vmatprep.subr.mxu0 0.0
        %453 = vmatpush2.msra.mxu0 0.0
        %454 = vmatprep.subr.mxu0 0.0
        %455 = vmatpush2.msra.mxu0 0.0
        %456 = vmatprep.subr.mxu0 0.0
        %457 = vmatpush2.msra.mxu0 0.0
        %458 = vmatprep.subr.mxu0 0.0
        %459 = vmatpush2.msra.mxu0 0.0
        %460 = vmatprep.subr.mxu0 0.0
        %461 = vmatpush2.msra.mxu0 0.0
        %462 = vmatprep.subr.mxu0 0.0
        %463 = vmatpush2.msra.mxu0 0.0
        %464 = vmatprep.subr.mxu0 0.0
        %465 = vmatpush2.msra.mxu0 0.0
        %466 = vmatprep.subr.mxu0 0.0
        %467 = vmatpush2.msra.mxu0 0.0
        %468 = vmatprep.subr.mxu0 0.0
        %469 = vmatpush2.msra.mxu0 0.0
        %470 = vmatprep.subr.mxu0 0.0
        %471 = vmatpush2.msra.mxu0 0.0
        %472 = vmatprep.subr.mxu0 0.0
        %473 = vmatpush2.msra.mxu0 0.0
        %474 = vmatprep.subr.mxu0 0.0
        %475 = vmatpush2.msra.mxu0 0.0
        %476 = vmatprep.subr.mxu0 0.0
        %477 = vmatpush2.msra.mxu0 0.0
        %478 = vmatprep.subr.mxu0 0.0
        %479 = vmatpush2.msra.mxu0 0.0
        %480 = vmatprep.mubr.f32.mxu0 0.0
        %481 = vmatmul.mubr.f32.gmra.mxu0 %v322
        %v482 = vpop.f32.mrf.mxu0
        %v483 = vadd.f32 %v399, %v482
        %v484 = vpop.f32.mrf.mxu0
        %v485 = vadd.f32 %v403, %v484
        %486 = vmatprep.mubr.f32.mxu0 0.0
        %487 = vmatmul.mubr.f32.gmra.mxu0 %v323
        %v488 = vpop.f32.mrf.mxu0
        %v489 = vadd.f32 %v399, %v488
        %v490 = vpop.f32.mrf.mxu0
        %v491 = vadd.f32 %v403, %v490
        %492 = vmatprep.mubr.f32.mxu0 0.0
        %493 = vmatmul.mubr.f32.gmra.mxu0 %v324
        %v494 = vpop.f32.mrf.mxu0
        %v495 = vadd.f32 %v399, %v494
        %v496 = vpop.f32.mrf.mxu0
        %v497 = vadd.f32 %v403, %v496
        %498 = vmatprep.mubr.f32.mxu0 0.0
        %499 = vmatmul.mubr.f32.gmra.mxu0 %v325
        %v500 = vpop.f32.mrf.mxu0
        %v501 = vadd.f32 %v399, %v500
        %v502 = vpop.f32.mrf.mxu0
        %v503 = vadd.f32 %v403, %v502
        %504 = vmatprep.mubr.f32.mxu0 0.0
        %505 = vmatmul.mubr.f32.gmra.mxu0 %v326
        %v506 = vpop.f32.mrf.mxu0
        %v507 = vadd.f32 %v399, %v506
        %v508 = vpop.f32.mrf.mxu0
        %v509 = vadd.f32 %v403, %v508
        %510 = vmatprep.mubr.f32.mxu0 0.0
        %511 = vmatmul.mubr.f32.gmra.mxu0 %v327
        %v512 = vpop.f32.mrf.mxu0
        %v513 = vadd.f32 %v399, %v512
        %v514 = vpop.f32.mrf.mxu0
        %v515 = vadd.f32 %v403, %v514
        %516 = vmatprep.mubr.f32.mxu0 0.0
        %517 = vmatmul.mubr.f32.gmra.mxu0 %v328
        %v518 = vpop.f32.mrf.mxu0
        %v519 = vadd.f32 %v399, %v518
        %v520 = vpop.f32.mrf.mxu0
        %v521 = vadd.f32 %v403, %v520
        %522 = vmatprep.mubr.f32.mxu0 0.0
        %523 = vmatmul.mubr.f32.gmra.mxu0 %v329
        %v524 = vpop.f32.mrf.mxu0
        %v525 = vadd.f32 %v399, %v524
        %v526 = vpop.f32.mrf.mxu0
        %v527 = vadd.f32 %v403, %v526
        %528 = vdwg.mxu0
        %529 = vmatprep.subr.mxu0 %v393
        %530 = vmatpush1.msra.mxu0 %v392
        %531 = vmatprep.subr.mxu0 %v389
        %532 = vmatpush1.msra.mxu0 %v388
        %533 = vmatprep.subr.mxu0 %v385
        %534 = vmatpush1.msra.mxu0 %v384
        %535 = vmatprep.subr.mxu0 %v381
        %536 = vmatpush1.msra.mxu0 %v380
        %537 = vmatprep.subr.mxu0 %v377
        %538 = vmatpush1.msra.mxu0 %v376
        %539 = vmatprep.subr.mxu0 %v373
        %540 = vmatpush1.msra.mxu0 %v372
        %541 = vmatprep.subr.mxu0 %v369
        %542 = vmatpush1.msra.mxu0 %v368
        %543 = vmatprep.subr.mxu0 %v365
        %544 = vmatpush1.msra.mxu0 %v364
        %545 = vmatprep.subr.mxu0 %v361
        %546 = vmatpush1.msra.mxu0 %v360
        %547 = vmatprep.subr.mxu0 %v357
        %548 = vmatpush1.msra.mxu0 %v356
        %549 = vmatprep.subr.mxu0 %v353
        %550 = vmatpush1.msra.mxu0 %v352
        %551 = vmatprep.subr.mxu0 %v349
        %552 = vmatpush1.msra.mxu0 %v348
        %553 = vmatprep.subr.mxu0 %v345
        %554 = vmatpush1.msra.mxu0 %v344
        %555 = vmatprep.subr.mxu0 %v341
        %556 = vmatpush1.msra.mxu0 %v340
        %557 = vmatprep.subr.mxu0 %v337
        %558 = vmatpush1.msra.mxu0 %v336
        %559 = vmatprep.subr.mxu0 %v333
        %560 = vmatpush1.msra.mxu0 %v332
        %561 = vmatprep.subr.mxu0 0.0
        %562 = vmatpush2.msra.mxu0 0.0
        %563 = vmatprep.subr.mxu0 0.0
        %564 = vmatpush2.msra.mxu0 0.0
        %565 = vmatprep.subr.mxu0 0.0
        %566 = vmatpush2.msra.mxu0 0.0
        %567 = vmatprep.subr.mxu0 0.0
        %568 = vmatpush2.msra.mxu0 0.0
        %569 = vmatprep.subr.mxu0 0.0
        %570 = vmatpush2.msra.mxu0 0.0
        %571 = vmatprep.subr.mxu0 0.0
        %572 = vmatpush2.msra.mxu0 0.0
        %573 = vmatprep.subr.mxu0 0.0
        %574 = vmatpush2.msra.mxu0 0.0
        %575 = vmatprep.subr.mxu0 0.0
        %576 = vmatpush2.msra.mxu0 0.0
        %577 = vmatprep.subr.mxu0 0.0
        %578 = vmatpush2.msra.mxu0 0.0
        %579 = vmatprep.subr.mxu0 0.0
        %580 = vmatpush2.msra.mxu0 0.0
        %581 = vmatprep.subr.mxu0 0.0
        %582 = vmatpush2.msra.mxu0 0.0
        %583 = vmatprep.subr.mxu0 0.0
        %584 = vmatpush2.msra.mxu0 0.0
        %585 = vmatprep.subr.mxu0 0.0
        %586 = vmatpush2.msra.mxu0 0.0
        %587 = vmatprep.subr.mxu0 0.0
        %588 = vmatpush2.msra.mxu0 0.0
        %589 = vmatprep.subr.mxu0 0.0
        %590 = vmatpush2.msra.mxu0 0.0
        %591 = vmatprep.subr.mxu0 0.0
        %592 = vmatpush2.msra.mxu0 0.0
        %593 = vmatprep.mubr.f32.mxu0 0.0
        %594 = vmatmul.mubr.f32.gmra.mxu0 %v322
        %v595 = vpop.f32.mrf.mxu0
        %v596 = vadd.f32 %v407, %v595
        %v597 = vpop.f32.mrf.mxu0
        %v598 = vadd.f32 %v411, %v597
        %599 = vmatprep.mubr.f32.mxu0 0.0
        %600 = vmatmul.mubr.f32.gmra.mxu0 %v323
        %v601 = vpop.f32.mrf.mxu0
        %v602 = vadd.f32 %v407, %v601
        %v603 = vpop.f32.mrf.mxu0
        %v604 = vadd.f32 %v411, %v603
        %605 = vmatprep.mubr.f32.mxu0 0.0
        %606 = vmatmul.mubr.f32.gmra.mxu0 %v324
        %v607 = vpop.f32.mrf.mxu0
        %v608 = vadd.f32 %v407, %v607
        %v609 = vpop.f32.mrf.mxu0
        %v610 = vadd.f32 %v411, %v609
        %611 = vmatprep.mubr.f32.mxu0 0.0
        %612 = vmatmul.mubr.f32.gmra.mxu0 %v325
        %v613 = vpop.f32.mrf.mxu0
        %v614 = vadd.f32 %v407, %v613
        %v615 = vpop.f32.mrf.mxu0
        %v616 = vadd.f32 %v411, %v615
        %617 = vmatprep.mubr.f32.mxu0 0.0
        %618 = vmatmul.mubr.f32.gmra.mxu0 %v326
        %v619 = vpop.f32.mrf.mxu0
        %v620 = vadd.f32 %v407, %v619
        %v621 = vpop.f32.mrf.mxu0
        %v622 = vadd.f32 %v411, %v621
        %623 = vmatprep.mubr.f32.mxu0 0.0
        %624 = vmatmul.mubr.f32.gmra.mxu0 %v327
        %v625 = vpop.f32.mrf.mxu0
        %v626 = vadd.f32 %v407, %v625
        %v627 = vpop.f32.mrf.mxu0
        %v628 = vadd.f32 %v411, %v627
        %629 = vmatprep.mubr.f32.mxu0 0.0
        %630 = vmatmul.mubr.f32.gmra.mxu0 %v328
        %v631 = vpop.f32.mrf.mxu0
        %v632 = vadd.f32 %v407, %v631
        %v633 = vpop.f32.mrf.mxu0
        %v634 = vadd.f32 %v411, %v633
        %635 = vmatprep.mubr.f32.mxu0 0.0
        %636 = vmatmul.mubr.f32.gmra.mxu0 %v329
        %v637 = vpop.f32.mrf.mxu0
        %v638 = vadd.f32 %v407, %v637
        %v639 = vpop.f32.mrf.mxu0
        %v640 = vadd.f32 %v411, %v639
        %641 = vdwg.mxu0
        %642 = vst [vmem:[#allocation4] sm:$0xff] %v483
        %643 = vst [vmem:[#allocation4 + $0x8] sm:$0xff] %v485
        %644 = vst [vmem:[#allocation4 + $0x10] sm:$0xff] %v596
        %645 = vst [vmem:[#allocation4 + $0x18] sm:$0xff] %v598
        %646 = vst [vmem:[#allocation4 + $0x20] sm:$0xff] %v489
        %647 = vst [vmem:[#allocation4 + $0x28] sm:$0xff] %v491
        %648 = vst [vmem:[#allocation4 + $0x30] sm:$0xff] %v602
        %649 = vst [vmem:[#allocation4 + $0x38] sm:$0xff] %v604
        %650 = vst [vmem:[#allocation4 + $0x40] sm:$0xff] %v495
        %651 = vst [vmem:[#allocation4 + $0x48] sm:$0xff] %v497
        %652 = vst [vmem:[#allocation4 + $0x50] sm:$0xff] %v608
        %653 = vst [vmem:[#allocation4 + $0x58] sm:$0xff] %v610
        %654 = vst [vmem:[#allocation4 + $0x60] sm:$0xff] %v501
        %655 = vst [vmem:[#allocation4 + $0x68] sm:$0xff] %v503
        %656 = vst [vmem:[#allocation4 + $0x70] sm:$0xff] %v614
        %657 = vst [vmem:[#allocation4 + $0x78] sm:$0xff] %v616
        %658 = vst [vmem:[#allocation4 + $0x80] sm:$0xff] %v507
        %659 = vst [vmem:[#allocation4 + $0x88] sm:$0xff] %v509
        %660 = vst [vmem:[#allocation4 + $0x90] sm:$0xff] %v620
        %661 = vst [vmem:[#allocation4 + $0x98] sm:$0xff] %v622
        %662 = vst [vmem:[#allocation4 + $0xa0] sm:$0xff] %v513
        %663 = vst [vmem:[#allocation4 + $0xa8] sm:$0xff] %v515
        %664 = vst [vmem:[#allocation4 + $0xb0] sm:$0xff] %v626
        %665 = vst [vmem:[#allocation4 + $0xb8] sm:$0xff] %v628
        %666 = vst [vmem:[#allocation4 + $0xc0] sm:$0xff] %v519
        %667 = vst [vmem:[#allocation4 + $0xc8] sm:$0xff] %v521
        %668 = vst [vmem:[#allocation4 + $0xd0] sm:$0xff] %v632
        %669 = vst [vmem:[#allocation4 + $0xd8] sm:$0xff] %v634
        %670 = vst [vmem:[#allocation4 + $0xe0] sm:$0xff] %v525
        %671 = vst [vmem:[#allocation4 + $0xe8] sm:$0xff] %v527
        %672 = vst [vmem:[#allocation4 + $0xf0] sm:$0xff] %v638
        %673 = vst [vmem:[#allocation4 + $0xf8] sm:$0xff] %v640
        %v674 = vld [vmem:[#allocation11] sm:$0xff]
        %v675 = vld [vmem:[#allocation11 + $0x8] sm:$0xff]
        %v676 = vld [vmem:[#allocation11 + $0x10] sm:$0xff]
        %v677 = vld [vmem:[#allocation11 + $0x18] sm:$0xff]
        %v678 = vld [vmem:[#allocation11 + $0x20] sm:$0xff]
        %v679 = vld [vmem:[#allocation11 + $0x28] sm:$0xff]
        %v680 = vld [vmem:[#allocation11 + $0x30] sm:$0xff]
        %v681 = vld [vmem:[#allocation11 + $0x38] sm:$0xff]
        %v682 = vld [vmem:[#allocation11 + $0x40] sm:$0xff]
        %v683 = vld [vmem:[#allocation11 + $0x48] sm:$0xff]
        %v684 = vld [vmem:[#allocation11 + $0x50] sm:$0xff]
        %v685 = vld [vmem:[#allocation11 + $0x58] sm:$0xff]
        %v686 = vld [vmem:[#allocation11 + $0x60] sm:$0xff]
        %v687 = vld [vmem:[#allocation11 + $0x68] sm:$0xff]
        %v688 = vld [vmem:[#allocation11 + $0x70] sm:$0xff]
        %v689 = vld [vmem:[#allocation11 + $0x78] sm:$0xff]
        %v690 = vld [vmem:[#allocation11 + $0x80] sm:$0xff]
        %v691 = vld [vmem:[#allocation11 + $0x88] sm:$0xff]
        %v692 = vld [vmem:[#allocation11 + $0x90] sm:$0xff]
        %v693 = vld [vmem:[#allocation11 + $0x98] sm:$0xff]
        %v694 = vld [vmem:[#allocation11 + $0xa0] sm:$0xff]
        %v695 = vld [vmem:[#allocation11 + $0xa8] sm:$0xff]
        %v696 = vld [vmem:[#allocation11 + $0xb0] sm:$0xff]
        %v697 = vld [vmem:[#allocation11 + $0xb8] sm:$0xff]
        %v698 = vld [vmem:[#allocation11 + $0xc0] sm:$0xff]
        %v699 = vld [vmem:[#allocation11 + $0xc8] sm:$0xff]
        %v700 = vld [vmem:[#allocation11 + $0xd0] sm:$0xff]
        %v701 = vld [vmem:[#allocation11 + $0xd8] sm:$0xff]
        %v702 = vld [vmem:[#allocation11 + $0xe0] sm:$0xff]
        %v703 = vld [vmem:[#allocation11 + $0xe8] sm:$0xff]
        %v704 = vld [vmem:[#allocation11 + $0xf0] sm:$0xff]
        %v705 = vld [vmem:[#allocation11 + $0xf8] sm:$0xff]
        %v706 = vld [vmem:[#allocation11 + $0x100] sm:$0xff]
        %v707 = vld [vmem:[#allocation11 + $0x108] sm:$0xff]
        %v708 = vld [vmem:[#allocation11 + $0x110] sm:$0xff]
        %v709 = vld [vmem:[#allocation11 + $0x118] sm:$0xff]
        %v710 = vld [vmem:[#allocation11 + $0x120] sm:$0xff]
        %v711 = vld [vmem:[#allocation11 + $0x128] sm:$0xff]
        %v712 = vld [vmem:[#allocation11 + $0x130] sm:$0xff]
        %v713 = vld [vmem:[#allocation11 + $0x138] sm:$0xff]
        %v714 = vld [vmem:[#allocation11 + $0x140] sm:$0xff]
        %v715 = vld [vmem:[#allocation11 + $0x148] sm:$0xff]
        %v716 = vld [vmem:[#allocation11 + $0x150] sm:$0xff]
        %v717 = vld [vmem:[#allocation11 + $0x158] sm:$0xff]
        %v718 = vld [vmem:[#allocation11 + $0x160] sm:$0xff]
        %v719 = vld [vmem:[#allocation11 + $0x168] sm:$0xff]
        %v720 = vld [vmem:[#allocation11 + $0x170] sm:$0xff]
        %v721 = vld [vmem:[#allocation11 + $0x178] sm:$0xff]
        %v722 = vld [vmem:[#allocation11 + $0x180] sm:$0xff]
        %v723 = vld [vmem:[#allocation11 + $0x188] sm:$0xff]
        %v724 = vld [vmem:[#allocation11 + $0x190] sm:$0xff]
        %v725 = vld [vmem:[#allocation11 + $0x198] sm:$0xff]
        %v726 = vld [vmem:[#allocation11 + $0x1a0] sm:$0xff]
        %v727 = vld [vmem:[#allocation11 + $0x1a8] sm:$0xff]
        %v728 = vld [vmem:[#allocation11 + $0x1b0] sm:$0xff]
        %v729 = vld [vmem:[#allocation11 + $0x1b8] sm:$0xff]
        %v730 = vld [vmem:[#allocation11 + $0x1c0] sm:$0xff]
        %v731 = vld [vmem:[#allocation11 + $0x1c8] sm:$0xff]
        %v732 = vld [vmem:[#allocation11 + $0x1d0] sm:$0xff]
        %v733 = vld [vmem:[#allocation11 + $0x1d8] sm:$0xff]
        %v734 = vld [vmem:[#allocation11 + $0x1e0] sm:$0xff]
        %v735 = vld [vmem:[#allocation11 + $0x1e8] sm:$0xff]
        %v736 = vld [vmem:[#allocation11 + $0x1f0] sm:$0xff]
        %v737 = vld [vmem:[#allocation11 + $0x1f8] sm:$0xff]
        %v738 = vld [vmem:[#allocation2] sm:$0xff]
        %v739 = vld [vmem:[#allocation3] sm:$0xff]
        %v740 = vld [vmem:[#allocation4] sm:$0xff]
        %v741 = vld [vmem:[#allocation4 + $0x8] sm:$0xff]
        %v742 = vld [vmem:[#allocation4 + $0x10] sm:$0xff]
        %v743 = vld [vmem:[#allocation4 + $0x18] sm:$0xff]
        %744 = vmatprep.subr.mxu0 %v735
        %745 = vmatpush1.msra.mxu0 %v734
        %746 = vmatprep.subr.mxu0 %v731
        %747 = vmatpush1.msra.mxu0 %v730
        %748 = vmatprep.subr.mxu0 %v727
        %749 = vmatpush1.msra.mxu0 %v726
        %750 = vmatprep.subr.mxu0 %v723
        %751 = vmatpush1.msra.mxu0 %v722
        %752 = vmatprep.subr.mxu0 %v719
        %753 = vmatpush1.msra.mxu0 %v718
        %754 = vmatprep.subr.mxu0 %v715
        %755 = vmatpush1.msra.mxu0 %v714
        %756 = vmatprep.subr.mxu0 %v711
        %757 = vmatpush1.msra.mxu0 %v710
        %758 = vmatprep.subr.mxu0 %v707
        %759 = vmatpush1.msra.mxu0 %v706
        %760 = vmatprep.subr.mxu0 %v703
        %761 = vmatpush1.msra.mxu0 %v702
        %762 = vmatprep.subr.mxu0 %v699
        %763 = vmatpush1.msra.mxu0 %v698
        %764 = vmatprep.subr.mxu0 %v695
        %765 = vmatpush1.msra.mxu0 %v694
        %766 = vmatprep.subr.mxu0 %v691
        %767 = vmatpush1.msra.mxu0 %v690
        %768 = vmatprep.subr.mxu0 %v687
        %769 = vmatpush1.msra.mxu0 %v686
        %770 = vmatprep.subr.mxu0 %v683
        %771 = vmatpush1.msra.mxu0 %v682
        %772 = vmatprep.subr.mxu0 %v679
        %773 = vmatpush1.msra.mxu0 %v678
        %774 = vmatprep.subr.mxu0 %v675
        %775 = vmatpush1.msra.mxu0 %v674
        %776 = vmatprep.subr.mxu0 0.0
        %777 = vmatpush2.msra.mxu0 0.0
        %778 = vmatprep.subr.mxu0 0.0
        %779 = vmatpush2.msra.mxu0 0.0
        %780 = vmatprep.subr.mxu0 0.0
        %781 = vmatpush2.msra.mxu0 0.0
        %782 = vmatprep.subr.mxu0 0.0
        %783 = vmatpush2.msra.mxu0 0.0
        %784 = vmatprep.subr.mxu0 0.0
        %785 = vmatpush2.msra.mxu0 0.0
        %786 = vmatprep.subr.mxu0 0.0
        %787 = vmatpush2.msra.mxu0 0.0
        %788 = vmatprep.subr.mxu0 0.0
        %789 = vmatpush2.msra.mxu0 0.0
        %790 = vmatprep.subr.mxu0 0.0
        %791 = vmatpush2.msra.mxu0 0.0
        %792 = vmatprep.subr.mxu0 0.0
        %793 = vmatpush2.msra.mxu0 0.0
        %794 = vmatprep.subr.mxu0 0.0
        %795 = vmatpush2.msra.mxu0 0.0
        %796 = vmatprep.subr.mxu0 0.0
        %797 = vmatpush2.msra.mxu0 0.0
        %798 = vmatprep.subr.mxu0 0.0
        %799 = vmatpush2.msra.mxu0 0.0
        %800 = vmatprep.subr.mxu0 0.0
        %801 = vmatpush2.msra.mxu0 0.0
        %802 = vmatprep.subr.mxu0 0.0
        %803 = vmatpush2.msra.mxu0 0.0
        %804 = vmatprep.subr.mxu0 0.0
        %805 = vmatpush2.msra.mxu0 0.0
        %806 = vmatprep.subr.mxu0 0.0
        %807 = vmatpush2.msra.mxu0 0.0
        %808 = vmatprep.mubr.f32.mxu0 0.0
        %809 = vmatmul.mubr.f32.gmra.mxu0 %v738
        %v810 = vpop.f32.mrf.mxu0
        %v811 = vadd.f32 0.0, %v810
        %v812 = vpop.f32.mrf.mxu0
        %v813 = vadd.f32 0.0, %v812
        %814 = vdwg.mxu0
        %815 = vmatprep.subr.mxu0 %v737
        %816 = vmatpush1.msra.mxu0 %v736
        %817 = vmatprep.subr.mxu0 %v733
        %818 = vmatpush1.msra.mxu0 %v732
        %819 = vmatprep.subr.mxu0 %v729
        %820 = vmatpush1.msra.mxu0 %v728
        %821 = vmatprep.subr.mxu0 %v725
        %822 = vmatpush1.msra.mxu0 %v724
        %823 = vmatprep.subr.mxu0 %v721
        %824 = vmatpush1.msra.mxu0 %v720
        %825 = vmatprep.subr.mxu0 %v717
        %826 = vmatpush1.msra.mxu0 %v716
        %827 = vmatprep.subr.mxu0 %v713
        %828 = vmatpush1.msra.mxu0 %v712
        %829 = vmatprep.subr.mxu0 %v709
        %830 = vmatpush1.msra.mxu0 %v708
        %831 = vmatprep.subr.mxu0 %v705
        %832 = vmatpush1.msra.mxu0 %v704
        %833 = vmatprep.subr.mxu0 %v701
        %834 = vmatpush1.msra.mxu0 %v700
        %835 = vmatprep.subr.mxu0 %v697
        %836 = vmatpush1.msra.mxu0 %v696
        %837 = vmatprep.subr.mxu0 %v693
        %838 = vmatpush1.msra.mxu0 %v692
        %839 = vmatprep.subr.mxu0 %v689
        %840 = vmatpush1.msra.mxu0 %v688
        %841 = vmatprep.subr.mxu0 %v685
        %842 = vmatpush1.msra.mxu0 %v684
        %843 = vmatprep.subr.mxu0 %v681
        %844 = vmatpush1.msra.mxu0 %v680
        %845 = vmatprep.subr.mxu0 %v677
        %846 = vmatpush1.msra.mxu0 %v676
        %847 = vmatprep.subr.mxu0 0.0
        %848 = vmatpush2.msra.mxu0 0.0
        %849 = vmatprep.subr.mxu0 0.0
        %850 = vmatpush2.msra.mxu0 0.0
        %851 = vmatprep.subr.mxu0 0.0
        %852 = vmatpush2.msra.mxu0 0.0
        %853 = vmatprep.subr.mxu0 0.0
        %854 = vmatpush2.msra.mxu0 0.0
        %855 = vmatprep.subr.mxu0 0.0
        %856 = vmatpush2.msra.mxu0 0.0
        %857 = vmatprep.subr.mxu0 0.0
        %858 = vmatpush2.msra.mxu0 0.0
        %859 = vmatprep.subr.mxu0 0.0
        %860 = vmatpush2.msra.mxu0 0.0
        %861 = vmatprep.subr.mxu0 0.0
        %862 = vmatpush2.msra.mxu0 0.0
        %863 = vmatprep.subr.mxu0 0.0
        %864 = vmatpush2.msra.mxu0 0.0
        %865 = vmatprep.subr.mxu0 0.0
        %866 = vmatpush2.msra.mxu0 0.0
        %867 = vmatprep.subr.mxu0 0.0
        %868 = vmatpush2.msra.mxu0 0.0
        %869 = vmatprep.subr.mxu0 0.0
        %870 = vmatpush2.msra.mxu0 0.0
        %871 = vmatprep.subr.mxu0 0.0
        %872 = vmatpush2.msra.mxu0 0.0
        %873 = vmatprep.subr.mxu0 0.0
        %874 = vmatpush2.msra.mxu0 0.0
        %875 = vmatprep.subr.mxu0 0.0
        %876 = vmatpush2.msra.mxu0 0.0
        %877 = vmatprep.subr.mxu0 0.0
        %878 = vmatpush2.msra.mxu0 0.0
        %879 = vmatprep.mubr.f32.mxu0 0.0
        %880 = vmatmul.mubr.f32.gmra.mxu0 %v738
        %v881 = vpop.f32.mrf.mxu0
        %v882 = vadd.f32 0.0, %v881
        %v883 = vpop.f32.mrf.mxu0
        %v884 = vadd.f32 0.0, %v883
        %885 = vdwg.mxu0
        %v886 = vadd.f32 %v740, %v811
        %v887 = vadd.f32 %v741, %v813
        %v888 = vadd.f32 %v742, %v882
        %v889 = vadd.f32 %v743, %v884
        %v890 = vxor.u32 %v886, 2147483648
        %v891 = vmul.f32 %v890, 1.442695
        %v892 = vpow.pop %v891
        %v893 = vadd.f32 %v892, 1.0
        %v894 = vrcp.pop %v893
        %v895 = vmul.f32 1.0, %v894
        %v896 = vxor.u32 %v887, 2147483648
        %v897 = vmul.f32 %v896, 1.442695
        %v898 = vpow.pop %v897
        %v899 = vadd.f32 %v898, 1.0
        %v900 = vrcp.pop %v899
        %v901 = vmul.f32 1.0, %v900
        %v902 = vtanh.pop %v888
        %v903 = vxor.u32 %v889, 2147483648
        %v904 = vmul.f32 %v903, 1.442695
        %v905 = vpow.pop %v904
        %v906 = vadd.f32 %v905, 1.0
        %v907 = vrcp.pop %v906
        %v908 = vmul.f32 1.0, %v907
        %v909 = vmul.f32 %v901, %v739
        %v910 = vmul.f32 %v895, %v902
        %v911 = vadd.f32 %v909, %v910
        %v912 = vtanh.pop %v911
        %v913 = vmul.f32 %v908, %v912
        %914 = vst [vmem:[#allocation3] sm:$0xff] %v911
        %915 = vst [vmem:[#allocation2] sm:$0xff] %v913
        %916 = vst [vmem:[#allocation5] sm:$0xff] %v913
        %v917 = vld [vmem:[#allocation2] sm:$0xff]
        %v918 = vld [vmem:[#allocation3] sm:$0xff]
        %s919 = scalar_lea.vmem [#allocation4], 32
        %v920 = vld [vmem:[%s919] sm:$0xff]
        %v921 = vld [vmem:[%s919 + $0x8] sm:$0xff]
        %v922 = vld [vmem:[%s919 + $0x10] sm:$0xff]
        %v923 = vld [vmem:[%s919 + $0x18] sm:$0xff]
        %924 = vmatprep.subr.mxu0 %v735
        %925 = vmatpush1.msra.mxu0 %v734
        %926 = vmatprep.subr.mxu0 %v731
        %927 = vmatpush1.msra.mxu0 %v730
        %928 = vmatprep.subr.mxu0 %v727
        %929 = vmatpush1.msra.mxu0 %v726
        %930 = vmatprep.subr.mxu0 %v723
        %931 = vmatpush1.msra.mxu0 %v722
        %932 = vmatprep.subr.mxu0 %v719
        %933 = vmatpush1.msra.mxu0 %v718
        %934 = vmatprep.subr.mxu0 %v715
        %935 = vmatpush1.msra.mxu0 %v714
        %936 = vmatprep.subr.mxu0 %v711
        %937 = vmatpush1.msra.mxu0 %v710
        %938 = vmatprep.subr.mxu0 %v707
        %939 = vmatpush1.msra.mxu0 %v706
        %940 = vmatprep.subr.mxu0 %v703
        %941 = vmatpush1.msra.mxu0 %v702
        %942 = vmatprep.subr.mxu0 %v699
        %943 = vmatpush1.msra.mxu0 %v698
        %944 = vmatprep.subr.mxu0 %v695
        %945 = vmatpush1.msra.mxu0 %v694
        %946 = vmatprep.subr.mxu0 %v691
        %947 = vmatpush1.msra.mxu0 %v690
        %948 = vmatprep.subr.mxu0 %v687
        %949 = vmatpush1.msra.mxu0 %v686
        %950 = vmatprep.subr.mxu0 %v683
        %951 = vmatpush1.msra.mxu0 %v682
        %952 = vmatprep.subr.mxu0 %v679
        %953 = vmatpush1.msra.mxu0 %v678
        %954 = vmatprep.subr.mxu0 %v675
        %955 = vmatpush1.msra.mxu0 %v674
        %956 = vmatprep.subr.mxu0 0.0
        %957 = vmatpush2.msra.mxu0 0.0
        %958 = vmatprep.subr.mxu0 0.0
        %959 = vmatpush2.msra.mxu0 0.0
        %960 = vmatprep.subr.mxu0 0.0
        %961 = vmatpush2.msra.mxu0 0.0
        %962 = vmatprep.subr.mxu0 0.0
        %963 = vmatpush2.msra.mxu0 0.0
        %964 = vmatprep.subr.mxu0 0.0
        %965 = vmatpush2.msra.mxu0 0.0
        %966 = vmatprep.subr.mxu0 0.0
        %967 = vmatpush2.msra.mxu0 0.0
        %968 = vmatprep.subr.mxu0 0.0
        %969 = vmatpush2.msra.mxu0 0.0
        %970 = vmatprep.subr.mxu0 0.0
        %971 = vmatpush2.msra.mxu0 0.0
        %972 = vmatprep.subr.mxu0 0.0
        %973 = vmatpush2.msra.mxu0 0.0
        %974 = vmatprep.subr.mxu0 0.0
        %975 = vmatpush2.msra.mxu0 0.0
        %976 = vmatprep.subr.mxu0 0.0
        %977 = vmatpush2.msra.mxu0 0.0
        %978 = vmatprep.subr.mxu0 0.0
        %979 = vmatpush2.msra.mxu0 0.0
        %980 = vmatprep.subr.mxu0 0.0
        %981 = vmatpush2.msra.mxu0 0.0
        %982 = vmatprep.subr.mxu0 0.0
        %983 = vmatpush2.msra.mxu0 0.0
        %984 = vmatprep.subr.mxu0 0.0
        %985 = vmatpush2.msra.mxu0 0.0
        %986 = vmatprep.subr.mxu0 0.0
        %987 = vmatpush2.msra.mxu0 0.0
        %988 = vmatprep.mubr.f32.mxu0 0.0
        %989 = vmatmul.mubr.f32.gmra.mxu0 %v917
        %v990 = vpop.f32.mrf.mxu0
        %v991 = vadd.f32 0.0, %v990
        %v992 = vpop.f32.mrf.mxu0
        %v993 = vadd.f32 0.0, %v992
        %994 = vdwg.mxu0
        %995 = vmatprep.subr.mxu0 %v737
        %996 = vmatpush1.msra.mxu0 %v736
        %997 = vmatprep.subr.mxu0 %v733
        %998 = vmatpush1.msra.mxu0 %v732
        %999 = vmatprep.subr.mxu0 %v729
        %1000 = vmatpush1.msra.mxu0 %v728
        %1001 = vmatprep.subr.mxu0 %v725
        %1002 = vmatpush1.msra.mxu0 %v724
        %1003 = vmatprep.subr.mxu0 %v721
        %1004 = vmatpush1.msra.mxu0 %v720
        %1005 = vmatprep.subr.mxu0 %v717
        %1006 = vmatpush1.msra.mxu0 %v716
        %1007 = vmatprep.subr.mxu0 %v713
        %1008 = vmatpush1.msra.mxu0 %v712
        %1009 = vmatprep.subr.mxu0 %v709
        %1010 = vmatpush1.msra.mxu0 %v708
        %1011 = vmatprep.subr.mxu0 %v705
        %1012 = vmatpush1.msra.mxu0 %v704
        %1013 = vmatprep.subr.mxu0 %v701
        %1014 = vmatpush1.msra.mxu0 %v700
        %1015 = vmatprep.subr.mxu0 %v697
        %1016 = vmatpush1.msra.mxu0 %v696
        %1017 = vmatprep.subr.mxu0 %v693
        %1018 = vmatpush1.msra.mxu0 %v692
        %1019 = vmatprep.subr.mxu0 %v689
        %1020 = vmatpush1.msra.mxu0 %v688
        %1021 = vmatprep.subr.mxu0 %v685
        %1022 = vmatpush1.msra.mxu0 %v684
        %1023 = vmatprep.subr.mxu0 %v681
        %1024 = vmatpush1.msra.mxu0 %v680
        %1025 = vmatprep.subr.mxu0 %v677
        %1026 = vmatpush1.msra.mxu0 %v676
        %1027 = vmatprep.subr.mxu0 0.0
        %1028 = vmatpush2.msra.mxu0 0.0
        %1029 = vmatprep.subr.mxu0 0.0
        %1030 = vmatpush2.msra.mxu0 0.0
        %1031 = vmatprep.subr.mxu0 0.0
        %1032 = vmatpush2.msra.mxu0 0.0
        %1033 = vmatprep.subr.mxu0 0.0
        %1034 = vmatpush2.msra.mxu0 0.0
        %1035 = vmatprep.subr.mxu0 0.0
        %1036 = vmatpush2.msra.mxu0 0.0
        %1037 = vmatprep.subr.mxu0 0.0
        %1038 = vmatpush2.msra.mxu0 0.0
        %1039 = vmatprep.subr.mxu0 0.0
        %1040 = vmatpush2.msra.mxu0 0.0
        %1041 = vmatprep.subr.mxu0 0.0
        %1042 = vmatpush2.msra.mxu0 0.0
        %1043 = vmatprep.subr.mxu0 0.0
        %1044 = vmatpush2.msra.mxu0 0.0
        %1045 = vmatprep.subr.mxu0 0.0
        %1046 = vmatpush2.msra.mxu0 0.0
        %1047 = vmatprep.subr.mxu0 0.0
        %1048 = vmatpush2.msra.mxu0 0.0
        %1049 = vmatprep.subr.mxu0 0.0
        %1050 = vmatpush2.msra.mxu0 0.0
        %1051 = vmatprep.subr.mxu0 0.0
        %1052 = vmatpush2.msra.mxu0 0.0
        %1053 = vmatprep.subr.mxu0 0.0
        %1054 = vmatpush2.msra.mxu0 0.0
        %1055 = vmatprep.subr.mxu0 0.0
        %1056 = vmatpush2.msra.mxu0 0.0
        %1057 = vmatprep.subr.mxu0 0.0
        %1058 = vmatpush2.msra.mxu0 0.0
        %1059 = vmatprep.mubr.f32.mxu0 0.0
        %1060 = vmatmul.mubr.f32.gmra.mxu0 %v917
        %v1061 = vpop.f32.mrf.mxu0
        %v1062 = vadd.f32 0.0, %v1061
        %v1063 = vpop.f32.mrf.mxu0
        %v1064 = vadd.f32 0.0, %v1063
        %1065 = vdwg.mxu0
        %v1066 = vadd.f32 %v920, %v991
        %v1067 = vadd.f32 %v921, %v993
        %v1068 = vadd.f32 %v922, %v1062
        %v1069 = vadd.f32 %v923, %v1064
        %v1070 = vxor.u32 %v1066, 2147483648
        %v1071 = vmul.f32 %v1070, 1.442695
        %v1072 = vpow.pop %v1071
        %v1073 = vadd.f32 %v1072, 1.0
        %v1074 = vrcp.pop %v1073
        %v1075 = vmul.f32 1.0, %v1074
        %v1076 = vxor.u32 %v1067, 2147483648
        %v1077 = vmul.f32 %v1076, 1.442695
        %v1078 = vpow.pop %v1077
        %v1079 = vadd.f32 %v1078, 1.0
        %v1080 = vrcp.pop %v1079
        %v1081 = vmul.f32 1.0, %v1080
        %v1082 = vtanh.pop %v1068
        %v1083 = vxor.u32 %v1069, 2147483648
        %v1084 = vmul.f32 %v1083, 1.442695
        %v1085 = vpow.pop %v1084
        %v1086 = vadd.f32 %v1085, 1.0
        %v1087 = vrcp.pop %v1086
        %v1088 = vmul.f32 1.0, %v1087
        %v1089 = vmul.f32 %v1081, %v918
        %v1090 = vmul.f32 %v1075, %v1082
        %v1091 = vadd.f32 %v1089, %v1090
        %v1092 = vtanh.pop %v1091
        %v1093 = vmul.f32 %v1088, %v1092
        %1094 = vst [vmem:[#allocation3] sm:$0xff] %v1091
        %1095 = vst [vmem:[#allocation2] sm:$0xff] %v1093
        %s1096 = scalar_lea.vmem [#allocation5], 8
        %1097 = vst [vmem:[%s1096] sm:$0xff] %v1093
        %v1098 = vld [vmem:[#allocation2] sm:$0xff]
        %v1099 = vld [vmem:[#allocation3] sm:$0xff]
        %s1100 = scalar_lea.vmem [#allocation4], 64
        %v1101 = vld [vmem:[%s1100] sm:$0xff]
        %v1102 = vld [vmem:[%s1100 + $0x8] sm:$0xff]
        %v1103 = vld [vmem:[%s1100 + $0x10] sm:$0xff]
        %v1104 = vld [vmem:[%s1100 + $0x18] sm:$0xff]
        %1105 = vmatprep.subr.mxu0 %v735
        %1106 = vmatpush1.msra.mxu0 %v734
        %1107 = vmatprep.subr.mxu0 %v731
        %1108 = vmatpush1.msra.mxu0 %v730
        %1109 = vmatprep.subr.mxu0 %v727
        %1110 = vmatpush1.msra.mxu0 %v726
        %1111 = vmatprep.subr.mxu0 %v723
        %1112 = vmatpush1.msra.mxu0 %v722
        %1113 = vmatprep.subr.mxu0 %v719
        %1114 = vmatpush1.msra.mxu0 %v718
        %1115 = vmatprep.subr.mxu0 %v715
        %1116 = vmatpush1.msra.mxu0 %v714
        %1117 = vmatprep.subr.mxu0 %v711
        %1118 = vmatpush1.msra.mxu0 %v710
        %1119 = vmatprep.subr.mxu0 %v707
        %1120 = vmatpush1.msra.mxu0 %v706
        %1121 = vmatprep.subr.mxu0 %v703
        %1122 = vmatpush1.msra.mxu0 %v702
        %1123 = vmatprep.subr.mxu0 %v699
        %1124 = vmatpush1.msra.mxu0 %v698
        %1125 = vmatprep.subr.mxu0 %v695
        %1126 = vmatpush1.msra.mxu0 %v694
        %1127 = vmatprep.subr.mxu0 %v691
        %1128 = vmatpush1.msra.mxu0 %v690
        %1129 = vmatprep.subr.mxu0 %v687
        %1130 = vmatpush1.msra.mxu0 %v686
        %1131 = vmatprep.subr.mxu0 %v683
        %1132 = vmatpush1.msra.mxu0 %v682
        %1133 = vmatprep.subr.mxu0 %v679
        %1134 = vmatpush1.msra.mxu0 %v678
        %1135 = vmatprep.subr.mxu0 %v675
        %1136 = vmatpush1.msra.mxu0 %v674
        %1137 = vmatprep.subr.mxu0 0.0
        %1138 = vmatpush2.msra.mxu0 0.0
        %1139 = vmatprep.subr.mxu0 0.0
        %1140 = vmatpush2.msra.mxu0 0.0
        %1141 = vmatprep.subr.mxu0 0.0
        %1142 = vmatpush2.msra.mxu0 0.0
        %1143 = vmatprep.subr.mxu0 0.0
        %1144 = vmatpush2.msra.mxu0 0.0
        %1145 = vmatprep.subr.mxu0 0.0
        %1146 = vmatpush2.msra.mxu0 0.0
        %1147 = vmatprep.subr.mxu0 0.0
        %1148 = vmatpush2.msra.mxu0 0.0
        %1149 = vmatprep.subr.mxu0 0.0
        %1150 = vmatpush2.msra.mxu0 0.0
        %1151 = vmatprep.subr.mxu0 0.0
        %1152 = vmatpush2.msra.mxu0 0.0
        %1153 = vmatprep.subr.mxu0 0.0
        %1154 = vmatpush2.msra.mxu0 0.0
        %1155 = vmatprep.subr.mxu0 0.0
        %1156 = vmatpush2.msra.mxu0 0.0
        %1157 = vmatprep.subr.mxu0 0.0
        %1158 = vmatpush2.msra.mxu0 0.0
        %1159 = vmatprep.subr.mxu0 0.0
        %1160 = vmatpush2.msra.mxu0 0.0
        %1161 = vmatprep.subr.mxu0 0.0
        %1162 = vmatpush2.msra.mxu0 0.0
        %1163 = vmatprep.subr.mxu0 0.0
        %1164 = vmatpush2.msra.mxu0 0.0
        %1165 = vmatprep.subr.mxu0 0.0
        %1166 = vmatpush2.msra.mxu0 0.0
        %1167 = vmatprep.subr.mxu0 0.0
        %1168 = vmatpush2.msra.mxu0 0.0
        %1169 = vmatprep.mubr.f32.mxu0 0.0
        %1170 = vmatmul.mubr.f32.gmra.mxu0 %v1098
        %v1171 = vpop.f32.mrf.mxu0
        %v1172 = vadd.f32 0.0, %v1171
        %v1173 = vpop.f32.mrf.mxu0
        %v1174 = vadd.f32 0.0, %v1173
        %1175 = vdwg.mxu0
        %1176 = vmatprep.subr.mxu0 %v737
        %1177 = vmatpush1.msra.mxu0 %v736
        %1178 = vmatprep.subr.mxu0 %v733
        %1179 = vmatpush1.msra.mxu0 %v732
        %1180 = vmatprep.subr.mxu0 %v729
        %1181 = vmatpush1.msra.mxu0 %v728
        %1182 = vmatprep.subr.mxu0 %v725
        %1183 = vmatpush1.msra.mxu0 %v724
        %1184 = vmatprep.subr.mxu0 %v721
        %1185 = vmatpush1.msra.mxu0 %v720
        %1186 = vmatprep.subr.mxu0 %v717
        %1187 = vmatpush1.msra.mxu0 %v716
        %1188 = vmatprep.subr.mxu0 %v713
        %1189 = vmatpush1.msra.mxu0 %v712
        %1190 = vmatprep.subr.mxu0 %v709
        %1191 = vmatpush1.msra.mxu0 %v708
        %1192 = vmatprep.subr.mxu0 %v705
        %1193 = vmatpush1.msra.mxu0 %v704
        %1194 = vmatprep.subr.mxu0 %v701
        %1195 = vmatpush1.msra.mxu0 %v700
        %1196 = vmatprep.subr.mxu0 %v697
        %1197 = vmatpush1.msra.mxu0 %v696
        %1198 = vmatprep.subr.mxu0 %v693
        %1199 = vmatpush1.msra.mxu0 %v692
        %1200 = vmatprep.subr.mxu0 %v689
        %1201 = vmatpush1.msra.mxu0 %v688
        %1202 = vmatprep.subr.mxu0 %v685
        %1203 = vmatpush1.msra.mxu0 %v684
        %1204 = vmatprep.subr.mxu0 %v681
        %1205 = vmatpush1.msra.mxu0 %v680
        %1206 = vmatprep.subr.mxu0 %v677
        %1207 = vmatpush1.msra.mxu0 %v676
        %1208 = vmatprep.subr.mxu0 0.0
        %1209 = vmatpush2.msra.mxu0 0.0
        %1210 = vmatprep.subr.mxu0 0.0
        %1211 = vmatpush2.msra.mxu0 0.0
        %1212 = vmatprep.subr.mxu0 0.0
        %1213 = vmatpush2.msra.mxu0 0.0
        %1214 = vmatprep.subr.mxu0 0.0
        %1215 = vmatpush2.msra.mxu0 0.0
        %1216 = vmatprep.subr.mxu0 0.0
        %1217 = vmatpush2.msra.mxu0 0.0
        %1218 = vmatprep.subr.mxu0 0.0
        %1219 = vmatpush2.msra.mxu0 0.0
        %1220 = vmatprep.subr.mxu0 0.0
        %1221 = vmatpush2.msra.mxu0 0.0
        %1222 = vmatprep.subr.mxu0 0.0
        %1223 = vmatpush2.msra.mxu0 0.0
        %1224 = vmatprep.subr.mxu0 0.0
        %1225 = vmatpush2.msra.mxu0 0.0
        %1226 = vmatprep.subr.mxu0 0.0
        %1227 = vmatpush2.msra.mxu0 0.0
        %1228 = vmatprep.subr.mxu0 0.0
        %1229 = vmatpush2.msra.mxu0 0.0
        %1230 = vmatprep.subr.mxu0 0.0
        %1231 = vmatpush2.msra.mxu0 0.0
        %1232 = vmatprep.subr.mxu0 0.0
        %1233 = vmatpush2.msra.mxu0 0.0
        %1234 = vmatprep.subr.mxu0 0.0
        %1235 = vmatpush2.msra.mxu0 0.0
        %1236 = vmatprep.subr.mxu0 0.0
        %1237 = vmatpush2.msra.mxu0 0.0
        %1238 = vmatprep.subr.mxu0 0.0
        %1239 = vmatpush2.msra.mxu0 0.0
        %1240 = vmatprep.mubr.f32.mxu0 0.0
        %1241 = vmatmul.mubr.f32.gmra.mxu0 %v1098
        %v1242 = vpop.f32.mrf.mxu0
        %v1243 = vadd.f32 0.0, %v1242
        %v1244 = vpop.f32.mrf.mxu0
        %v1245 = vadd.f32 0.0, %v1244
        %1246 = vdwg.mxu0
        %v1247 = vadd.f32 %v1101, %v1172
        %v1248 = vadd.f32 %v1102, %v1174
        %v1249 = vadd.f32 %v1103, %v1243
        %v1250 = vadd.f32 %v1104, %v1245
        %v1251 = vxor.u32 %v1247, 2147483648
        %v1252 = vmul.f32 %v1251, 1.442695
        %v1253 = vpow.pop %v1252
        %v1254 = vadd.f32 %v1253, 1.0
        %v1255 = vrcp.pop %v1254
        %v1256 = vmul.f32 1.0, %v1255
        %v1257 = vxor.u32 %v1248, 2147483648
        %v1258 = vmul.f32 %v1257, 1.442695
        %v1259 = vpow.pop %v1258
        %v1260 = vadd.f32 %v1259, 1.0
        %v1261 = vrcp.pop %v1260
        %v1262 = vmul.f32 1.0, %v1261
        %v1263 = vtanh.pop %v1249
        %v1264 = vxor.u32 %v1250, 2147483648
        %v1265 = vmul.f32 %v1264, 1.442695
        %v1266 = vpow.pop %v1265
        %v1267 = vadd.f32 %v1266, 1.0
        %v1268 = vrcp.pop %v1267
        %v1269 = vmul.f32 1.0, %v1268
        %v1270 = vmul.f32 %v1262, %v1099
        %v1271 = vmul.f32 %v1256, %v1263
        %v1272 = vadd.f32 %v1270, %v1271
        %v1273 = vtanh.pop %v1272
        %v1274 = vmul.f32 %v1269, %v1273
        %1275 = vst [vmem:[#allocation3] sm:$0xff] %v1272
        %1276 = vst [vmem:[#allocation2] sm:$0xff] %v1274
        %s1277 = scalar_lea.vmem [#allocation5], 16
        %1278 = vst [vmem:[%s1277] sm:$0xff] %v1274
        %v1279 = vld [vmem:[#allocation2] sm:$0xff]
        %v1280 = vld [vmem:[#allocation3] sm:$0xff]
        %s1281 = scalar_lea.vmem [#allocation4], 96
        %v1282 = vld [vmem:[%s1281] sm:$0xff]
        %v1283 = vld [vmem:[%s1281 + $0x8] sm:$0xff]
        %v1284 = vld [vmem:[%s1281 + $0x10] sm:$0xff]
        %v1285 = vld [vmem:[%s1281 + $0x18] sm:$0xff]
        %1286 = vmatprep.subr.mxu0 %v735
        %1287 = vmatpush1.msra.mxu0 %v734
        %1288 = vmatprep.subr.mxu0 %v731
        %1289 = vmatpush1.msra.mxu0 %v730
        %1290 = vmatprep.subr.mxu0 %v727
        %1291 = vmatpush1.msra.mxu0 %v726
        %1292 = vmatprep.subr.mxu0 %v723
        %1293 = vmatpush1.msra.mxu0 %v722
        %1294 = vmatprep.subr.mxu0 %v719
        %1295 = vmatpush1.msra.mxu0 %v718
        %1296 = vmatprep.subr.mxu0 %v715
        %1297 = vmatpush1.msra.mxu0 %v714
        %1298 = vmatprep.subr.mxu0 %v711
        %1299 = vmatpush1.msra.mxu0 %v710
        %1300 = vmatprep.subr.mxu0 %v707
        %1301 = vmatpush1.msra.mxu0 %v706
        %1302 = vmatprep.subr.mxu0 %v703
        %1303 = vmatpush1.msra.mxu0 %v702
        %1304 = vmatprep.subr.mxu0 %v699
        %1305 = vmatpush1.msra.mxu0 %v698
        %1306 = vmatprep.subr.mxu0 %v695
        %1307 = vmatpush1.msra.mxu0 %v694
        %1308 = vmatprep.subr.mxu0 %v691
        %1309 = vmatpush1.msra.mxu0 %v690
        %1310 = vmatprep.subr.mxu0 %v687
        %1311 = vmatpush1.msra.mxu0 %v686
        %1312 = vmatprep.subr.mxu0 %v683
        %1313 = vmatpush1.msra.mxu0 %v682
        %1314 = vmatprep.subr.mxu0 %v679
        %1315 = vmatpush1.msra.mxu0 %v678
        %1316 = vmatprep.subr.mxu0 %v675
        %1317 = vmatpush1.msra.mxu0 %v674
        %1318 = vmatprep.subr.mxu0 0.0
        %1319 = vmatpush2.msra.mxu0 0.0
        %1320 = vmatprep.subr.mxu0 0.0
        %1321 = vmatpush2.msra.mxu0 0.0
        %1322 = vmatprep.subr.mxu0 0.0
        %1323 = vmatpush2.msra.mxu0 0.0
        %1324 = vmatprep.subr.mxu0 0.0
        %1325 = vmatpush2.msra.mxu0 0.0
        %1326 = vmatprep.subr.mxu0 0.0
        %1327 = vmatpush2.msra.mxu0 0.0
        %1328 = vmatprep.subr.mxu0 0.0
        %1329 = vmatpush2.msra.mxu0 0.0
        %1330 = vmatprep.subr.mxu0 0.0
        %1331 = vmatpush2.msra.mxu0 0.0
        %1332 = vmatprep.subr.mxu0 0.0
        %1333 = vmatpush2.msra.mxu0 0.0
        %1334 = vmatprep.subr.mxu0 0.0
        %1335 = vmatpush2.msra.mxu0 0.0
        %1336 = vmatprep.subr.mxu0 0.0
        %1337 = vmatpush2.msra.mxu0 0.0
        %1338 = vmatprep.subr.mxu0 0.0
        %1339 = vmatpush2.msra.mxu0 0.0
        %1340 = vmatprep.subr.mxu0 0.0
        %1341 = vmatpush2.msra.mxu0 0.0
        %1342 = vmatprep.subr.mxu0 0.0
        %1343 = vmatpush2.msra.mxu0 0.0
        %1344 = vmatprep.subr.mxu0 0.0
        %1345 = vmatpush2.msra.mxu0 0.0
        %1346 = vmatprep.subr.mxu0 0.0
        %1347 = vmatpush2.msra.mxu0 0.0
        %1348 = vmatprep.subr.mxu0 0.0
        %1349 = vmatpush2.msra.mxu0 0.0
        %1350 = vmatprep.mubr.f32.mxu0 0.0
        %1351 = vmatmul.mubr.f32.gmra.mxu0 %v1279
        %v1352 = vpop.f32.mrf.mxu0
        %v1353 = vadd.f32 0.0, %v1352
        %v1354 = vpop.f32.mrf.mxu0
        %v1355 = vadd.f32 0.0, %v1354
        %1356 = vdwg.mxu0
        %1357 = vmatprep.subr.mxu0 %v737
        %1358 = vmatpush1.msra.mxu0 %v736
        %1359 = vmatprep.subr.mxu0 %v733
        %1360 = vmatpush1.msra.mxu0 %v732
        %1361 = vmatprep.subr.mxu0 %v729
        %1362 = vmatpush1.msra.mxu0 %v728
        %1363 = vmatprep.subr.mxu0 %v725
        %1364 = vmatpush1.msra.mxu0 %v724
        %1365 = vmatprep.subr.mxu0 %v721
        %1366 = vmatpush1.msra.mxu0 %v720
        %1367 = vmatprep.subr.mxu0 %v717
        %1368 = vmatpush1.msra.mxu0 %v716
        %1369 = vmatprep.subr.mxu0 %v713
        %1370 = vmatpush1.msra.mxu0 %v712
        %1371 = vmatprep.subr.mxu0 %v709
        %1372 = vmatpush1.msra.mxu0 %v708
        %1373 = vmatprep.subr.mxu0 %v705
        %1374 = vmatpush1.msra.mxu0 %v704
        %1375 = vmatprep.subr.mxu0 %v701
        %1376 = vmatpush1.msra.mxu0 %v700
        %1377 = vmatprep.subr.mxu0 %v697
        %1378 = vmatpush1.msra.mxu0 %v696
        %1379 = vmatprep.subr.mxu0 %v693
        %1380 = vmatpush1.msra.mxu0 %v692
        %1381 = vmatprep.subr.mxu0 %v689
        %1382 = vmatpush1.msra.mxu0 %v688
        %1383 = vmatprep.subr.mxu0 %v685
        %1384 = vmatpush1.msra.mxu0 %v684
        %1385 = vmatprep.subr.mxu0 %v681
        %1386 = vmatpush1.msra.mxu0 %v680
        %1387 = vmatprep.subr.mxu0 %v677
        %1388 = vmatpush1.msra.mxu0 %v676
        %1389 = vmatprep.subr.mxu0 0.0
        %1390 = vmatpush2.msra.mxu0 0.0
        %1391 = vmatprep.subr.mxu0 0.0
        %1392 = vmatpush2.msra.mxu0 0.0
        %1393 = vmatprep.subr.mxu0 0.0
        %1394 = vmatpush2.msra.mxu0 0.0
        %1395 = vmatprep.subr.mxu0 0.0
        %1396 = vmatpush2.msra.mxu0 0.0
        %1397 = vmatprep.subr.mxu0 0.0
        %1398 = vmatpush2.msra.mxu0 0.0
        %1399 = vmatprep.subr.mxu0 0.0
        %1400 = vmatpush2.msra.mxu0 0.0
        %1401 = vmatprep.subr.mxu0 0.0
        %1402 = vmatpush2.msra.mxu0 0.0
        %1403 = vmatprep.subr.mxu0 0.0
        %1404 = vmatpush2.msra.mxu0 0.0
        %1405 = vmatprep.subr.mxu0 0.0
        %1406 = vmatpush2.msra.mxu0 0.0
        %1407 = vmatprep.subr.mxu0 0.0
        %1408 = vmatpush2.msra.mxu0 0.0
        %1409 = vmatprep.subr.mxu0 0.0
        %1410 = vmatpush2.msra.mxu0 0.0
        %1411 = vmatprep.subr.mxu0 0.0
        %1412 = vmatpush2.msra.mxu0 0.0
        %1413 = vmatprep.subr.mxu0 0.0
        %1414 = vmatpush2.msra.mxu0 0.0
        %1415 = vmatprep.subr.mxu0 0.0
        %1416 = vmatpush2.msra.mxu0 0.0
        %1417 = vmatprep.subr.mxu0 0.0
        %1418 = vmatpush2.msra.mxu0 0.0
        %1419 = vmatprep.subr.mxu0 0.0
        %1420 = vmatpush2.msra.mxu0 0.0
        %1421 = vmatprep.mubr.f32.mxu0 0.0
        %1422 = vmatmul.mubr.f32.gmra.mxu0 %v1279
        %v1423 = vpop.f32.mrf.mxu0
        %v1424 = vadd.f32 0.0, %v1423
        %v1425 = vpop.f32.mrf.mxu0
        %v1426 = vadd.f32 0.0, %v1425
        %1427 = vdwg.mxu0
        %v1428 = vadd.f32 %v1282, %v1353
        %v1429 = vadd.f32 %v1283, %v1355
        %v1430 = vadd.f32 %v1284, %v1424
        %v1431 = vadd.f32 %v1285, %v1426
        %v1432 = vxor.u32 %v1428, 2147483648
        %v1433 = vmul.f32 %v1432, 1.442695
        %v1434 = vpow.pop %v1433
        %v1435 = vadd.f32 %v1434, 1.0
        %v1436 = vrcp.pop %v1435
        %v1437 = vmul.f32 1.0, %v1436
        %v1438 = vxor.u32 %v1429, 2147483648
        %v1439 = vmul.f32 %v1438, 1.442695
        %v1440 = vpow.pop %v1439
        %v1441 = vadd.f32 %v1440, 1.0
        %v1442 = vrcp.pop %v1441
        %v1443 = vmul.f32 1.0, %v1442
        %v1444 = vtanh.pop %v1430
        %v1445 = vxor.u32 %v1431, 2147483648
        %v1446 = vmul.f32 %v1445, 1.442695
        %v1447 = vpow.pop %v1446
        %v1448 = vadd.f32 %v1447, 1.0
        %v1449 = vrcp.pop %v1448
        %v1450 = vmul.f32 1.0, %v1449
        %v1451 = vmul.f32 %v1443, %v1280
        %v1452 = vmul.f32 %v1437, %v1444
        %v1453 = vadd.f32 %v1451, %v1452
        %v1454 = vtanh.pop %v1453
        %v1455 = vmul.f32 %v1450, %v1454
        %1456 = vst [vmem:[#allocation3] sm:$0xff] %v1453
        %1457 = vst [vmem:[#allocation2] sm:$0xff] %v1455
        %s1458 = scalar_lea.vmem [#allocation5], 24
        %1459 = vst [vmem:[%s1458] sm:$0xff] %v1455
        %v1460 = vld [vmem:[#allocation2] sm:$0xff]
        %v1461 = vld [vmem:[#allocation3] sm:$0xff]
        %s1462 = scalar_lea.vmem [#allocation4], 128
        %v1463 = vld [vmem:[%s1462] sm:$0xff]
        %v1464 = vld [vmem:[%s1462 + $0x8] sm:$0xff]
        %v1465 = vld [vmem:[%s1462 + $0x10] sm:$0xff]
        %v1466 = vld [vmem:[%s1462 + $0x18] sm:$0xff]
        %1467 = vmatprep.subr.mxu0 %v735
        %1468 = vmatpush1.msra.mxu0 %v734
        %1469 = vmatprep.subr.mxu0 %v731
        %1470 = vmatpush1.msra.mxu0 %v730
        %1471 = vmatprep.subr.mxu0 %v727
        %1472 = vmatpush1.msra.mxu0 %v726
        %1473 = vmatprep.subr.mxu0 %v723
        %1474 = vmatpush1.msra.mxu0 %v722
        %1475 = vmatprep.subr.mxu0 %v719
        %1476 = vmatpush1.msra.mxu0 %v718
        %1477 = vmatprep.subr.mxu0 %v715
        %1478 = vmatpush1.msra.mxu0 %v714
        %1479 = vmatprep.subr.mxu0 %v711
        %1480 = vmatpush1.msra.mxu0 %v710
        %1481 = vmatprep.subr.mxu0 %v707
        %1482 = vmatpush1.msra.mxu0 %v706
        %1483 = vmatprep.subr.mxu0 %v703
        %1484 = vmatpush1.msra.mxu0 %v702
        %1485 = vmatprep.subr.mxu0 %v699
        %1486 = vmatpush1.msra.mxu0 %v698
        %1487 = vmatprep.subr.mxu0 %v695
        %1488 = vmatpush1.msra.mxu0 %v694
        %1489 = vmatprep.subr.mxu0 %v691
        %1490 = vmatpush1.msra.mxu0 %v690
        %1491 = vmatprep.subr.mxu0 %v687
        %1492 = vmatpush1.msra.mxu0 %v686
        %1493 = vmatprep.subr.mxu0 %v683
        %1494 = vmatpush1.msra.mxu0 %v682
        %1495 = vmatprep.subr.mxu0 %v679
        %1496 = vmatpush1.msra.mxu0 %v678
        %1497 = vmatprep.subr.mxu0 %v675
        %1498 = vmatpush1.msra.mxu0 %v674
        %1499 = vmatprep.subr.mxu0 0.0
        %1500 = vmatpush2.msra.mxu0 0.0
        %1501 = vmatprep.subr.mxu0 0.0
        %1502 = vmatpush2.msra.mxu0 0.0
        %1503 = vmatprep.subr.mxu0 0.0
        %1504 = vmatpush2.msra.mxu0 0.0
        %1505 = vmatprep.subr.mxu0 0.0
        %1506 = vmatpush2.msra.mxu0 0.0
        %1507 = vmatprep.subr.mxu0 0.0
        %1508 = vmatpush2.msra.mxu0 0.0
        %1509 = vmatprep.subr.mxu0 0.0
        %1510 = vmatpush2.msra.mxu0 0.0
        %1511 = vmatprep.subr.mxu0 0.0
        %1512 = vmatpush2.msra.mxu0 0.0
        %1513 = vmatprep.subr.mxu0 0.0
        %1514 = vmatpush2.msra.mxu0 0.0
        %1515 = vmatprep.subr.mxu0 0.0
        %1516 = vmatpush2.msra.mxu0 0.0
        %1517 = vmatprep.subr.mxu0 0.0
        %1518 = vmatpush2.msra.mxu0 0.0
        %1519 = vmatprep.subr.mxu0 0.0
        %1520 = vmatpush2.msra.mxu0 0.0
        %1521 = vmatprep.subr.mxu0 0.0
        %1522 = vmatpush2.msra.mxu0 0.0
        %1523 = vmatprep.subr.mxu0 0.0
        %1524 = vmatpush2.msra.mxu0 0.0
        %1525 = vmatprep.subr.mxu0 0.0
        %1526 = vmatpush2.msra.mxu0 0.0
        %1527 = vmatprep.subr.mxu0 0.0
        %1528 = vmatpush2.msra.mxu0 0.0
        %1529 = vmatprep.subr.mxu0 0.0
        %1530 = vmatpush2.msra.mxu0 0.0
        %1531 = vmatprep.mubr.f32.mxu0 0.0
        %1532 = vmatmul.mubr.f32.gmra.mxu0 %v1460
        %v1533 = vpop.f32.mrf.mxu0
        %v1534 = vadd.f32 0.0, %v1533
        %v1535 = vpop.f32.mrf.mxu0
        %v1536 = vadd.f32 0.0, %v1535
        %1537 = vdwg.mxu0
        %1538 = vmatprep.subr.mxu0 %v737
        %1539 = vmatpush1.msra.mxu0 %v736
        %1540 = vmatprep.subr.mxu0 %v733
        %1541 = vmatpush1.msra.mxu0 %v732
        %1542 = vmatprep.subr.mxu0 %v729
        %1543 = vmatpush1.msra.mxu0 %v728
        %1544 = vmatprep.subr.mxu0 %v725
        %1545 = vmatpush1.msra.mxu0 %v724
        %1546 = vmatprep.subr.mxu0 %v721
        %1547 = vmatpush1.msra.mxu0 %v720
        %1548 = vmatprep.subr.mxu0 %v717
        %1549 = vmatpush1.msra.mxu0 %v716
        %1550 = vmatprep.subr.mxu0 %v713
        %1551 = vmatpush1.msra.mxu0 %v712
        %1552 = vmatprep.subr.mxu0 %v709
        %1553 = vmatpush1.msra.mxu0 %v708
        %1554 = vmatprep.subr.mxu0 %v705
        %1555 = vmatpush1.msra.mxu0 %v704
        %1556 = vmatprep.subr.mxu0 %v701
        %1557 = vmatpush1.msra.mxu0 %v700
        %1558 = vmatprep.subr.mxu0 %v697
        %1559 = vmatpush1.msra.mxu0 %v696
        %1560 = vmatprep.subr.mxu0 %v693
        %1561 = vmatpush1.msra.mxu0 %v692
        %1562 = vmatprep.subr.mxu0 %v689
        %1563 = vmatpush1.msra.mxu0 %v688
        %1564 = vmatprep.subr.mxu0 %v685
        %1565 = vmatpush1.msra.mxu0 %v684
        %1566 = vmatprep.subr.mxu0 %v681
        %1567 = vmatpush1.msra.mxu0 %v680
        %1568 = vmatprep.subr.mxu0 %v677
        %1569 = vmatpush1.msra.mxu0 %v676
        %1570 = vmatprep.subr.mxu0 0.0
        %1571 = vmatpush2.msra.mxu0 0.0
        %1572 = vmatprep.subr.mxu0 0.0
        %1573 = vmatpush2.msra.mxu0 0.0
        %1574 = vmatprep.subr.mxu0 0.0
        %1575 = vmatpush2.msra.mxu0 0.0
        %1576 = vmatprep.subr.mxu0 0.0
        %1577 = vmatpush2.msra.mxu0 0.0
        %1578 = vmatprep.subr.mxu0 0.0
        %1579 = vmatpush2.msra.mxu0 0.0
        %1580 = vmatprep.subr.mxu0 0.0
        %1581 = vmatpush2.msra.mxu0 0.0
        %1582 = vmatprep.subr.mxu0 0.0
        %1583 = vmatpush2.msra.mxu0 0.0
        %1584 = vmatprep.subr.mxu0 0.0
        %1585 = vmatpush2.msra.mxu0 0.0
        %1586 = vmatprep.subr.mxu0 0.0
        %1587 = vmatpush2.msra.mxu0 0.0
        %1588 = vmatprep.subr.mxu0 0.0
        %1589 = vmatpush2.msra.mxu0 0.0
        %1590 = vmatprep.subr.mxu0 0.0
        %1591 = vmatpush2.msra.mxu0 0.0
        %1592 = vmatprep.subr.mxu0 0.0
        %1593 = vmatpush2.msra.mxu0 0.0
        %1594 = vmatprep.subr.mxu0 0.0
        %1595 = vmatpush2.msra.mxu0 0.0
        %1596 = vmatprep.subr.mxu0 0.0
        %1597 = vmatpush2.msra.mxu0 0.0
        %1598 = vmatprep.subr.mxu0 0.0
        %1599 = vmatpush2.msra.mxu0 0.0
        %1600 = vmatprep.subr.mxu0 0.0
        %1601 = vmatpush2.msra.mxu0 0.0
        %1602 = vmatprep.mubr.f32.mxu0 0.0
        %1603 = vmatmul.mubr.f32.gmra.mxu0 %v1460
        %v1604 = vpop.f32.mrf.mxu0
        %v1605 = vadd.f32 0.0, %v1604
        %v1606 = vpop.f32.mrf.mxu0
        %v1607 = vadd.f32 0.0, %v1606
        %1608 = vdwg.mxu0
        %v1609 = vadd.f32 %v1463, %v1534
        %v1610 = vadd.f32 %v1464, %v1536
        %v1611 = vadd.f32 %v1465, %v1605
        %v1612 = vadd.f32 %v1466, %v1607
        %v1613 = vxor.u32 %v1609, 2147483648
        %v1614 = vmul.f32 %v1613, 1.442695
        %v1615 = vpow.pop %v1614
        %v1616 = vadd.f32 %v1615, 1.0
        %v1617 = vrcp.pop %v1616
        %v1618 = vmul.f32 1.0, %v1617
        %v1619 = vxor.u32 %v1610, 2147483648
        %v1620 = vmul.f32 %v1619, 1.442695
        %v1621 = vpow.pop %v1620
        %v1622 = vadd.f32 %v1621, 1.0
        %v1623 = vrcp.pop %v1622
        %v1624 = vmul.f32 1.0, %v1623
        %v1625 = vtanh.pop %v1611
        %v1626 = vxor.u32 %v1612, 2147483648
        %v1627 = vmul.f32 %v1626, 1.442695
        %v1628 = vpow.pop %v1627
        %v1629 = vadd.f32 %v1628, 1.0
        %v1630 = vrcp.pop %v1629
        %v1631 = vmul.f32 1.0, %v1630
        %v1632 = vmul.f32 %v1624, %v1461
        %v1633 = vmul.f32 %v1618, %v1625
        %v1634 = vadd.f32 %v1632, %v1633
        %v1635 = vtanh.pop %v1634
        %v1636 = vmul.f32 %v1631, %v1635
        %1637 = vst [vmem:[#allocation3] sm:$0xff] %v1634
        %1638 = vst [vmem:[#allocation2] sm:$0xff] %v1636
        %s1639 = scalar_lea.vmem [#allocation5], 32
        %1640 = vst [vmem:[%s1639] sm:$0xff] %v1636
        %v1641 = vld [vmem:[#allocation2] sm:$0xff]
        %v1642 = vld [vmem:[#allocation3] sm:$0xff]
        %s1643 = scalar_lea.vmem [#allocation4], 160
        %v1644 = vld [vmem:[%s1643] sm:$0xff]
        %v1645 = vld [vmem:[%s1643 + $0x8] sm:$0xff]
        %v1646 = vld [vmem:[%s1643 + $0x10] sm:$0xff]
        %v1647 = vld [vmem:[%s1643 + $0x18] sm:$0xff]
        %1648 = vmatprep.subr.mxu0 %v735
        %1649 = vmatpush1.msra.mxu0 %v734
        %1650 = vmatprep.subr.mxu0 %v731
        %1651 = vmatpush1.msra.mxu0 %v730
        %1652 = vmatprep.subr.mxu0 %v727
        %1653 = vmatpush1.msra.mxu0 %v726
        %1654 = vmatprep.subr.mxu0 %v723
        %1655 = vmatpush1.msra.mxu0 %v722
        %1656 = vmatprep.subr.mxu0 %v719
        %1657 = vmatpush1.msra.mxu0 %v718
        %1658 = vmatprep.subr.mxu0 %v715
        %1659 = vmatpush1.msra.mxu0 %v714
        %1660 = vmatprep.subr.mxu0 %v711
        %1661 = vmatpush1.msra.mxu0 %v710
        %1662 = vmatprep.subr.mxu0 %v707
        %1663 = vmatpush1.msra.mxu0 %v706
        %1664 = vmatprep.subr.mxu0 %v703
        %1665 = vmatpush1.msra.mxu0 %v702
        %1666 = vmatprep.subr.mxu0 %v699
        %1667 = vmatpush1.msra.mxu0 %v698
        %1668 = vmatprep.subr.mxu0 %v695
        %1669 = vmatpush1.msra.mxu0 %v694
        %1670 = vmatprep.subr.mxu0 %v691
        %1671 = vmatpush1.msra.mxu0 %v690
        %1672 = vmatprep.subr.mxu0 %v687
        %1673 = vmatpush1.msra.mxu0 %v686
        %1674 = vmatprep.subr.mxu0 %v683
        %1675 = vmatpush1.msra.mxu0 %v682
        %1676 = vmatprep.subr.mxu0 %v679
        %1677 = vmatpush1.msra.mxu0 %v678
        %1678 = vmatprep.subr.mxu0 %v675
        %1679 = vmatpush1.msra.mxu0 %v674
        %1680 = vmatprep.subr.mxu0 0.0
        %1681 = vmatpush2.msra.mxu0 0.0
        %1682 = vmatprep.subr.mxu0 0.0
        %1683 = vmatpush2.msra.mxu0 0.0
        %1684 = vmatprep.subr.mxu0 0.0
        %1685 = vmatpush2.msra.mxu0 0.0
        %1686 = vmatprep.subr.mxu0 0.0
        %1687 = vmatpush2.msra.mxu0 0.0
        %1688 = vmatprep.subr.mxu0 0.0
        %1689 = vmatpush2.msra.mxu0 0.0
        %1690 = vmatprep.subr.mxu0 0.0
        %1691 = vmatpush2.msra.mxu0 0.0
        %1692 = vmatprep.subr.mxu0 0.0
        %1693 = vmatpush2.msra.mxu0 0.0
        %1694 = vmatprep.subr.mxu0 0.0
        %1695 = vmatpush2.msra.mxu0 0.0
        %1696 = vmatprep.subr.mxu0 0.0
        %1697 = vmatpush2.msra.mxu0 0.0
        %1698 = vmatprep.subr.mxu0 0.0
        %1699 = vmatpush2.msra.mxu0 0.0
        %1700 = vmatprep.subr.mxu0 0.0
        %1701 = vmatpush2.msra.mxu0 0.0
        %1702 = vmatprep.subr.mxu0 0.0
        %1703 = vmatpush2.msra.mxu0 0.0
        %1704 = vmatprep.subr.mxu0 0.0
        %1705 = vmatpush2.msra.mxu0 0.0
        %1706 = vmatprep.subr.mxu0 0.0
        %1707 = vmatpush2.msra.mxu0 0.0
        %1708 = vmatprep.subr.mxu0 0.0
        %1709 = vmatpush2.msra.mxu0 0.0
        %1710 = vmatprep.subr.mxu0 0.0
        %1711 = vmatpush2.msra.mxu0 0.0
        %1712 = vmatprep.mubr.f32.mxu0 0.0
        %1713 = vmatmul.mubr.f32.gmra.mxu0 %v1641
        %v1714 = vpop.f32.mrf.mxu0
        %v1715 = vadd.f32 0.0, %v1714
        %v1716 = vpop.f32.mrf.mxu0
        %v1717 = vadd.f32 0.0, %v1716
        %1718 = vdwg.mxu0
        %1719 = vmatprep.subr.mxu0 %v737
        %1720 = vmatpush1.msra.mxu0 %v736
        %1721 = vmatprep.subr.mxu0 %v733
        %1722 = vmatpush1.msra.mxu0 %v732
        %1723 = vmatprep.subr.mxu0 %v729
        %1724 = vmatpush1.msra.mxu0 %v728
        %1725 = vmatprep.subr.mxu0 %v725
        %1726 = vmatpush1.msra.mxu0 %v724
        %1727 = vmatprep.subr.mxu0 %v721
        %1728 = vmatpush1.msra.mxu0 %v720
        %1729 = vmatprep.subr.mxu0 %v717
        %1730 = vmatpush1.msra.mxu0 %v716
        %1731 = vmatprep.subr.mxu0 %v713
        %1732 = vmatpush1.msra.mxu0 %v712
        %1733 = vmatprep.subr.mxu0 %v709
        %1734 = vmatpush1.msra.mxu0 %v708
        %1735 = vmatprep.subr.mxu0 %v705
        %1736 = vmatpush1.msra.mxu0 %v704
        %1737 = vmatprep.subr.mxu0 %v701
        %1738 = vmatpush1.msra.mxu0 %v700
        %1739 = vmatprep.subr.mxu0 %v697
        %1740 = vmatpush1.msra.mxu0 %v696
        %1741 = vmatprep.subr.mxu0 %v693
        %1742 = vmatpush1.msra.mxu0 %v692
        %1743 = vmatprep.subr.mxu0 %v689
        %1744 = vmatpush1.msra.mxu0 %v688
        %1745 = vmatprep.subr.mxu0 %v685
        %1746 = vmatpush1.msra.mxu0 %v684
        %1747 = vmatprep.subr.mxu0 %v681
        %1748 = vmatpush1.msra.mxu0 %v680
        %1749 = vmatprep.subr.mxu0 %v677
        %1750 = vmatpush1.msra.mxu0 %v676
        %1751 = vmatprep.subr.mxu0 0.0
        %1752 = vmatpush2.msra.mxu0 0.0
        %1753 = vmatprep.subr.mxu0 0.0
        %1754 = vmatpush2.msra.mxu0 0.0
        %1755 = vmatprep.subr.mxu0 0.0
        %1756 = vmatpush2.msra.mxu0 0.0
        %1757 = vmatprep.subr.mxu0 0.0
        %1758 = vmatpush2.msra.mxu0 0.0
        %1759 = vmatprep.subr.mxu0 0.0
        %1760 = vmatpush2.msra.mxu0 0.0
        %1761 = vmatprep.subr.mxu0 0.0
        %1762 = vmatpush2.msra.mxu0 0.0
        %1763 = vmatprep.subr.mxu0 0.0
        %1764 = vmatpush2.msra.mxu0 0.0
        %1765 = vmatprep.subr.mxu0 0.0
        %1766 = vmatpush2.msra.mxu0 0.0
        %1767 = vmatprep.subr.mxu0 0.0
        %1768 = vmatpush2.msra.mxu0 0.0
        %1769 = vmatprep.subr.mxu0 0.0
        %1770 = vmatpush2.msra.mxu0 0.0
        %1771 = vmatprep.subr.mxu0 0.0
        %1772 = vmatpush2.msra.mxu0 0.0
        %1773 = vmatprep.subr.mxu0 0.0
        %1774 = vmatpush2.msra.mxu0 0.0
        %1775 = vmatprep.subr.mxu0 0.0
        %1776 = vmatpush2.msra.mxu0 0.0
        %1777 = vmatprep.subr.mxu0 0.0
        %1778 = vmatpush2.msra.mxu0 0.0
        %1779 = vmatprep.subr.mxu0 0.0
        %1780 = vmatpush2.msra.mxu0 0.0
        %1781 = vmatprep.subr.mxu0 0.0
        %1782 = vmatpush2.msra.mxu0 0.0
        %1783 = vmatprep.mubr.f32.mxu0 0.0
        %1784 = vmatmul.mubr.f32.gmra.mxu0 %v1641
        %v1785 = vpop.f32.mrf.mxu0
        %v1786 = vadd.f32 0.0, %v1785
        %v1787 = vpop.f32.mrf.mxu0
        %v1788 = vadd.f32 0.0, %v1787
        %1789 = vdwg.mxu0
        %v1790 = vadd.f32 %v1644, %v1715
        %v1791 = vadd.f32 %v1645, %v1717
        %v1792 = vadd.f32 %v1646, %v1786
        %v1793 = vadd.f32 %v1647, %v1788
        %v1794 = vxor.u32 %v1790, 2147483648
        %v1795 = vmul.f32 %v1794, 1.442695
        %v1796 = vpow.pop %v1795
        %v1797 = vadd.f32 %v1796, 1.0
        %v1798 = vrcp.pop %v1797
        %v1799 = vmul.f32 1.0, %v1798
        %v1800 = vxor.u32 %v1791, 2147483648
        %v1801 = vmul.f32 %v1800, 1.442695
        %v1802 = vpow.pop %v1801
        %v1803 = vadd.f32 %v1802, 1.0
        %v1804 = vrcp.pop %v1803
        %v1805 = vmul.f32 1.0, %v1804
        %v1806 = vtanh.pop %v1792
        %v1807 = vxor.u32 %v1793, 2147483648
        %v1808 = vmul.f32 %v1807, 1.442695
        %v1809 = vpow.pop %v1808
        %v1810 = vadd.f32 %v1809, 1.0
        %v1811 = vrcp.pop %v1810
        %v1812 = vmul.f32 1.0, %v1811
        %v1813 = vmul.f32 %v1805, %v1642
        %v1814 = vmul.f32 %v1799, %v1806
        %v1815 = vadd.f32 %v1813, %v1814
        %v1816 = vtanh.pop %v1815
        %v1817 = vmul.f32 %v1812, %v1816
        %1818 = vst [vmem:[#allocation3] sm:$0xff] %v1815
        %1819 = vst [vmem:[#allocation2] sm:$0xff] %v1817
        %s1820 = scalar_lea.vmem [#allocation5], 40
        %1821 = vst [vmem:[%s1820] sm:$0xff] %v1817
        %v1822 = vld [vmem:[#allocation2] sm:$0xff]
        %v1823 = vld [vmem:[#allocation3] sm:$0xff]
        %s1824 = scalar_lea.vmem [#allocation4], 192
        %v1825 = vld [vmem:[%s1824] sm:$0xff]
        %v1826 = vld [vmem:[%s1824 + $0x8] sm:$0xff]
        %v1827 = vld [vmem:[%s1824 + $0x10] sm:$0xff]
        %v1828 = vld [vmem:[%s1824 + $0x18] sm:$0xff]
        %1829 = vmatprep.subr.mxu0 %v735
        %1830 = vmatpush1.msra.mxu0 %v734
        %1831 = vmatprep.subr.mxu0 %v731
        %1832 = vmatpush1.msra.mxu0 %v730
        %1833 = vmatprep.subr.mxu0 %v727
        %1834 = vmatpush1.msra.mxu0 %v726
        %1835 = vmatprep.subr.mxu0 %v723
        %1836 = vmatpush1.msra.mxu0 %v722
        %1837 = vmatprep.subr.mxu0 %v719
        %1838 = vmatpush1.msra.mxu0 %v718
        %1839 = vmatprep.subr.mxu0 %v715
        %1840 = vmatpush1.msra.mxu0 %v714
        %1841 = vmatprep.subr.mxu0 %v711
        %1842 = vmatpush1.msra.mxu0 %v710
        %1843 = vmatprep.subr.mxu0 %v707
        %1844 = vmatpush1.msra.mxu0 %v706
        %1845 = vmatprep.subr.mxu0 %v703
        %1846 = vmatpush1.msra.mxu0 %v702
        %1847 = vmatprep.subr.mxu0 %v699
        %1848 = vmatpush1.msra.mxu0 %v698
        %1849 = vmatprep.subr.mxu0 %v695
        %1850 = vmatpush1.msra.mxu0 %v694
        %1851 = vmatprep.subr.mxu0 %v691
        %1852 = vmatpush1.msra.mxu0 %v690
        %1853 = vmatprep.subr.mxu0 %v687
        %1854 = vmatpush1.msra.mxu0 %v686
        %1855 = vmatprep.subr.mxu0 %v683
        %1856 = vmatpush1.msra.mxu0 %v682
        %1857 = vmatprep.subr.mxu0 %v679
        %1858 = vmatpush1.msra.mxu0 %v678
        %1859 = vmatprep.subr.mxu0 %v675
        %1860 = vmatpush1.msra.mxu0 %v674
        %1861 = vmatprep.subr.mxu0 0.0
        %1862 = vmatpush2.msra.mxu0 0.0
        %1863 = vmatprep.subr.mxu0 0.0
        %1864 = vmatpush2.msra.mxu0 0.0
        %1865 = vmatprep.subr.mxu0 0.0
        %1866 = vmatpush2.msra.mxu0 0.0
        %1867 = vmatprep.subr.mxu0 0.0
        %1868 = vmatpush2.msra.mxu0 0.0
        %1869 = vmatprep.subr.mxu0 0.0
        %1870 = vmatpush2.msra.mxu0 0.0
        %1871 = vmatprep.subr.mxu0 0.0
        %1872 = vmatpush2.msra.mxu0 0.0
        %1873 = vmatprep.subr.mxu0 0.0
        %1874 = vmatpush2.msra.mxu0 0.0
        %1875 = vmatprep.subr.mxu0 0.0
        %1876 = vmatpush2.msra.mxu0 0.0
        %1877 = vmatprep.subr.mxu0 0.0
        %1878 = vmatpush2.msra.mxu0 0.0
        %1879 = vmatprep.subr.mxu0 0.0
        %1880 = vmatpush2.msra.mxu0 0.0
        %1881 = vmatprep.subr.mxu0 0.0
        %1882 = vmatpush2.msra.mxu0 0.0
        %1883 = vmatprep.subr.mxu0 0.0
        %1884 = vmatpush2.msra.mxu0 0.0
        %1885 = vmatprep.subr.mxu0 0.0
        %1886 = vmatpush2.msra.mxu0 0.0
        %1887 = vmatprep.subr.mxu0 0.0
        %1888 = vmatpush2.msra.mxu0 0.0
        %1889 = vmatprep.subr.mxu0 0.0
        %1890 = vmatpush2.msra.mxu0 0.0
        %1891 = vmatprep.subr.mxu0 0.0
        %1892 = vmatpush2.msra.mxu0 0.0
        %1893 = vmatprep.mubr.f32.mxu0 0.0
        %1894 = vmatmul.mubr.f32.gmra.mxu0 %v1822
        %v1895 = vpop.f32.mrf.mxu0
        %v1896 = vadd.f32 0.0, %v1895
        %v1897 = vpop.f32.mrf.mxu0
        %v1898 = vadd.f32 0.0, %v1897
        %1899 = vdwg.mxu0
        %1900 = vmatprep.subr.mxu0 %v737
        %1901 = vmatpush1.msra.mxu0 %v736
        %1902 = vmatprep.subr.mxu0 %v733
        %1903 = vmatpush1.msra.mxu0 %v732
        %1904 = vmatprep.subr.mxu0 %v729
        %1905 = vmatpush1.msra.mxu0 %v728
        %1906 = vmatprep.subr.mxu0 %v725
        %1907 = vmatpush1.msra.mxu0 %v724
        %1908 = vmatprep.subr.mxu0 %v721
        %1909 = vmatpush1.msra.mxu0 %v720
        %1910 = vmatprep.subr.mxu0 %v717
        %1911 = vmatpush1.msra.mxu0 %v716
        %1912 = vmatprep.subr.mxu0 %v713
        %1913 = vmatpush1.msra.mxu0 %v712
        %1914 = vmatprep.subr.mxu0 %v709
        %1915 = vmatpush1.msra.mxu0 %v708
        %1916 = vmatprep.subr.mxu0 %v705
        %1917 = vmatpush1.msra.mxu0 %v704
        %1918 = vmatprep.subr.mxu0 %v701
        %1919 = vmatpush1.msra.mxu0 %v700
        %1920 = vmatprep.subr.mxu0 %v697
        %1921 = vmatpush1.msra.mxu0 %v696
        %1922 = vmatprep.subr.mxu0 %v693
        %1923 = vmatpush1.msra.mxu0 %v692
        %1924 = vmatprep.subr.mxu0 %v689
        %1925 = vmatpush1.msra.mxu0 %v688
        %1926 = vmatprep.subr.mxu0 %v685
        %1927 = vmatpush1.msra.mxu0 %v684
        %1928 = vmatprep.subr.mxu0 %v681
        %1929 = vmatpush1.msra.mxu0 %v680
        %1930 = vmatprep.subr.mxu0 %v677
        %1931 = vmatpush1.msra.mxu0 %v676
        %1932 = vmatprep.subr.mxu0 0.0
        %1933 = vmatpush2.msra.mxu0 0.0
        %1934 = vmatprep.subr.mxu0 0.0
        %1935 = vmatpush2.msra.mxu0 0.0
        %1936 = vmatprep.subr.mxu0 0.0
        %1937 = vmatpush2.msra.mxu0 0.0
        %1938 = vmatprep.subr.mxu0 0.0
        %1939 = vmatpush2.msra.mxu0 0.0
        %1940 = vmatprep.subr.mxu0 0.0
        %1941 = vmatpush2.msra.mxu0 0.0
        %1942 = vmatprep.subr.mxu0 0.0
        %1943 = vmatpush2.msra.mxu0 0.0
        %1944 = vmatprep.subr.mxu0 0.0
        %1945 = vmatpush2.msra.mxu0 0.0
        %1946 = vmatprep.subr.mxu0 0.0
        %1947 = vmatpush2.msra.mxu0 0.0
        %1948 = vmatprep.subr.mxu0 0.0
        %1949 = vmatpush2.msra.mxu0 0.0
        %1950 = vmatprep.subr.mxu0 0.0
        %1951 = vmatpush2.msra.mxu0 0.0
        %1952 = vmatprep.subr.mxu0 0.0
        %1953 = vmatpush2.msra.mxu0 0.0
        %1954 = vmatprep.subr.mxu0 0.0
        %1955 = vmatpush2.msra.mxu0 0.0
        %1956 = vmatprep.subr.mxu0 0.0
        %1957 = vmatpush2.msra.mxu0 0.0
        %1958 = vmatprep.subr.mxu0 0.0
        %1959 = vmatpush2.msra.mxu0 0.0
        %1960 = vmatprep.subr.mxu0 0.0
        %1961 = vmatpush2.msra.mxu0 0.0
        %1962 = vmatprep.subr.mxu0 0.0
        %1963 = vmatpush2.msra.mxu0 0.0
        %1964 = vmatprep.mubr.f32.mxu0 0.0
        %1965 = vmatmul.mubr.f32.gmra.mxu0 %v1822
        %v1966 = vpop.f32.mrf.mxu0
        %v1967 = vadd.f32 0.0, %v1966
        %v1968 = vpop.f32.mrf.mxu0
        %v1969 = vadd.f32 0.0, %v1968
        %1970 = vdwg.mxu0
        %v1971 = vadd.f32 %v1825, %v1896
        %v1972 = vadd.f32 %v1826, %v1898
        %v1973 = vadd.f32 %v1827, %v1967
        %v1974 = vadd.f32 %v1828, %v1969
        %v1975 = vxor.u32 %v1971, 2147483648
        %v1976 = vmul.f32 %v1975, 1.442695
        %v1977 = vpow.pop %v1976
        %v1978 = vadd.f32 %v1977, 1.0
        %v1979 = vrcp.pop %v1978
        %v1980 = vmul.f32 1.0, %v1979
        %v1981 = vxor.u32 %v1972, 2147483648
        %v1982 = vmul.f32 %v1981, 1.442695
        %v1983 = vpow.pop %v1982
        %v1984 = vadd.f32 %v1983, 1.0
        %v1985 = vrcp.pop %v1984
        %v1986 = vmul.f32 1.0, %v1985
        %v1987 = vtanh.pop %v1973
        %v1988 = vxor.u32 %v1974, 2147483648
        %v1989 = vmul.f32 %v1988, 1.442695
        %v1990 = vpow.pop %v1989
        %v1991 = vadd.f32 %v1990, 1.0
        %v1992 = vrcp.pop %v1991
        %v1993 = vmul.f32 1.0, %v1992
        %v1994 = vmul.f32 %v1986, %v1823
        %v1995 = vmul.f32 %v1980, %v1987
        %v1996 = vadd.f32 %v1994, %v1995
        %v1997 = vtanh.pop %v1996
        %v1998 = vmul.f32 %v1993, %v1997
        %1999 = vst [vmem:[#allocation3] sm:$0xff] %v1996
        %2000 = vst [vmem:[#allocation2] sm:$0xff] %v1998
        %s2001 = scalar_lea.vmem [#allocation5], 48
        %2002 = vst [vmem:[%s2001] sm:$0xff] %v1998
        %v2003 = vld [vmem:[#allocation2] sm:$0xff]
        %v2004 = vld [vmem:[#allocation3] sm:$0xff]
        %s2005 = scalar_lea.vmem [#allocation4], 224
        %v2006 = vld [vmem:[%s2005] sm:$0xff]
        %v2007 = vld [vmem:[%s2005 + $0x8] sm:$0xff]
        %v2008 = vld [vmem:[%s2005 + $0x10] sm:$0xff]
        %v2009 = vld [vmem:[%s2005 + $0x18] sm:$0xff]
        %2010 = vmatprep.subr.mxu0 %v735
        %2011 = vmatpush1.msra.mxu0 %v734
        %2012 = vmatprep.subr.mxu0 %v731
        %2013 = vmatpush1.msra.mxu0 %v730
        %2014 = vmatprep.subr.mxu0 %v727
        %2015 = vmatpush1.msra.mxu0 %v726
        %2016 = vmatprep.subr.mxu0 %v723
        %2017 = vmatpush1.msra.mxu0 %v722
        %2018 = vmatprep.subr.mxu0 %v719
        %2019 = vmatpush1.msra.mxu0 %v718
        %2020 = vmatprep.subr.mxu0 %v715
        %2021 = vmatpush1.msra.mxu0 %v714
        %2022 = vmatprep.subr.mxu0 %v711
        %2023 = vmatpush1.msra.mxu0 %v710
        %2024 = vmatprep.subr.mxu0 %v707
        %2025 = vmatpush1.msra.mxu0 %v706
        %2026 = vmatprep.subr.mxu0 %v703
        %2027 = vmatpush1.msra.mxu0 %v702
        %2028 = vmatprep.subr.mxu0 %v699
        %2029 = vmatpush1.msra.mxu0 %v698
        %2030 = vmatprep.subr.mxu0 %v695
        %2031 = vmatpush1.msra.mxu0 %v694
        %2032 = vmatprep.subr.mxu0 %v691
        %2033 = vmatpush1.msra.mxu0 %v690
        %2034 = vmatprep.subr.mxu0 %v687
        %2035 = vmatpush1.msra.mxu0 %v686
        %2036 = vmatprep.subr.mxu0 %v683
        %2037 = vmatpush1.msra.mxu0 %v682
        %2038 = vmatprep.subr.mxu0 %v679
        %2039 = vmatpush1.msra.mxu0 %v678
        %2040 = vmatprep.subr.mxu0 %v675
        %2041 = vmatpush1.msra.mxu0 %v674
        %2042 = vmatprep.subr.mxu0 0.0
        %2043 = vmatpush2.msra.mxu0 0.0
        %2044 = vmatprep.subr.mxu0 0.0
        %2045 = vmatpush2.msra.mxu0 0.0
        %2046 = vmatprep.subr.mxu0 0.0
        %2047 = vmatpush2.msra.mxu0 0.0
        %2048 = vmatprep.subr.mxu0 0.0
        %2049 = vmatpush2.msra.mxu0 0.0
        %2050 = vmatprep.subr.mxu0 0.0
        %2051 = vmatpush2.msra.mxu0 0.0
        %2052 = vmatprep.subr.mxu0 0.0
        %2053 = vmatpush2.msra.mxu0 0.0
        %2054 = vmatprep.subr.mxu0 0.0
        %2055 = vmatpush2.msra.mxu0 0.0
        %2056 = vmatprep.subr.mxu0 0.0
        %2057 = vmatpush2.msra.mxu0 0.0
        %2058 = vmatprep.subr.mxu0 0.0
        %2059 = vmatpush2.msra.mxu0 0.0
        %2060 = vmatprep.subr.mxu0 0.0
        %2061 = vmatpush2.msra.mxu0 0.0
        %2062 = vmatprep.subr.mxu0 0.0
        %2063 = vmatpush2.msra.mxu0 0.0
        %2064 = vmatprep.subr.mxu0 0.0
        %2065 = vmatpush2.msra.mxu0 0.0
        %2066 = vmatprep.subr.mxu0 0.0
        %2067 = vmatpush2.msra.mxu0 0.0
        %2068 = vmatprep.subr.mxu0 0.0
        %2069 = vmatpush2.msra.mxu0 0.0
        %2070 = vmatprep.subr.mxu0 0.0
        %2071 = vmatpush2.msra.mxu0 0.0
        %2072 = vmatprep.subr.mxu0 0.0
        %2073 = vmatpush2.msra.mxu0 0.0
        %2074 = vmatprep.mubr.f32.mxu0 0.0
        %2075 = vmatmul.mubr.f32.gmra.mxu0 %v2003
        %v2076 = vpop.f32.mrf.mxu0
        %v2077 = vadd.f32 0.0, %v2076
        %v2078 = vpop.f32.mrf.mxu0
        %v2079 = vadd.f32 0.0, %v2078
        %2080 = vdwg.mxu0
        %2081 = vmatprep.subr.mxu0 %v737
        %2082 = vmatpush1.msra.mxu0 %v736
        %2083 = vmatprep.subr.mxu0 %v733
        %2084 = vmatpush1.msra.mxu0 %v732
        %2085 = vmatprep.subr.mxu0 %v729
        %2086 = vmatpush1.msra.mxu0 %v728
        %2087 = vmatprep.subr.mxu0 %v725
        %2088 = vmatpush1.msra.mxu0 %v724
        %2089 = vmatprep.subr.mxu0 %v721
        %2090 = vmatpush1.msra.mxu0 %v720
        %2091 = vmatprep.subr.mxu0 %v717
        %2092 = vmatpush1.msra.mxu0 %v716
        %2093 = vmatprep.subr.mxu0 %v713
        %2094 = vmatpush1.msra.mxu0 %v712
        %2095 = vmatprep.subr.mxu0 %v709
        %2096 = vmatpush1.msra.mxu0 %v708
        %2097 = vmatprep.subr.mxu0 %v705
        %2098 = vmatpush1.msra.mxu0 %v704
        %2099 = vmatprep.subr.mxu0 %v701
        %2100 = vmatpush1.msra.mxu0 %v700
        %2101 = vmatprep.subr.mxu0 %v697
        %2102 = vmatpush1.msra.mxu0 %v696
        %2103 = vmatprep.subr.mxu0 %v693
        %2104 = vmatpush1.msra.mxu0 %v692
        %2105 = vmatprep.subr.mxu0 %v689
        %2106 = vmatpush1.msra.mxu0 %v688
        %2107 = vmatprep.subr.mxu0 %v685
        %2108 = vmatpush1.msra.mxu0 %v684
        %2109 = vmatprep.subr.mxu0 %v681
        %2110 = vmatpush1.msra.mxu0 %v680
        %2111 = vmatprep.subr.mxu0 %v677
        %2112 = vmatpush1.msra.mxu0 %v676
        %2113 = vmatprep.subr.mxu0 0.0
        %2114 = vmatpush2.msra.mxu0 0.0
        %2115 = vmatprep.subr.mxu0 0.0
        %2116 = vmatpush2.msra.mxu0 0.0
        %2117 = vmatprep.subr.mxu0 0.0
        %2118 = vmatpush2.msra.mxu0 0.0
        %2119 = vmatprep.subr.mxu0 0.0
        %2120 = vmatpush2.msra.mxu0 0.0
        %2121 = vmatprep.subr.mxu0 0.0
        %2122 = vmatpush2.msra.mxu0 0.0
        %2123 = vmatprep.subr.mxu0 0.0
        %2124 = vmatpush2.msra.mxu0 0.0
        %2125 = vmatprep.subr.mxu0 0.0
        %2126 = vmatpush2.msra.mxu0 0.0
        %2127 = vmatprep.subr.mxu0 0.0
        %2128 = vmatpush2.msra.mxu0 0.0
        %2129 = vmatprep.subr.mxu0 0.0
        %2130 = vmatpush2.msra.mxu0 0.0
        %2131 = vmatprep.subr.mxu0 0.0
        %2132 = vmatpush2.msra.mxu0 0.0
        %2133 = vmatprep.subr.mxu0 0.0
        %2134 = vmatpush2.msra.mxu0 0.0
        %2135 = vmatprep.subr.mxu0 0.0
        %2136 = vmatpush2.msra.mxu0 0.0
        %2137 = vmatprep.subr.mxu0 0.0
        %2138 = vmatpush2.msra.mxu0 0.0
        %2139 = vmatprep.subr.mxu0 0.0
        %2140 = vmatpush2.msra.mxu0 0.0
        %2141 = vmatprep.subr.mxu0 0.0
        %2142 = vmatpush2.msra.mxu0 0.0
        %2143 = vmatprep.subr.mxu0 0.0
        %2144 = vmatpush2.msra.mxu0 0.0
        %2145 = vmatprep.mubr.f32.mxu0 0.0
        %2146 = vmatmul.mubr.f32.gmra.mxu0 %v2003
        %v2147 = vpop.f32.mrf.mxu0
        %v2148 = vadd.f32 0.0, %v2147
        %v2149 = vpop.f32.mrf.mxu0
        %v2150 = vadd.f32 0.0, %v2149
        %2151 = vdwg.mxu0
        %v2152 = vadd.f32 %v2006, %v2077
        %v2153 = vadd.f32 %v2007, %v2079
        %v2154 = vadd.f32 %v2008, %v2148
        %v2155 = vadd.f32 %v2009, %v2150
        %v2156 = vxor.u32 %v2152, 2147483648
        %v2157 = vmul.f32 %v2156, 1.442695
        %v2158 = vpow.pop %v2157
        %v2159 = vadd.f32 %v2158, 1.0
        %v2160 = vrcp.pop %v2159
        %v2161 = vmul.f32 1.0, %v2160
        %v2162 = vxor.u32 %v2153, 2147483648
        %v2163 = vmul.f32 %v2162, 1.442695
        %v2164 = vpow.pop %v2163
        %v2165 = vadd.f32 %v2164, 1.0
        %v2166 = vrcp.pop %v2165
        %v2167 = vmul.f32 1.0, %v2166
        %v2168 = vtanh.pop %v2154
        %v2169 = vxor.u32 %v2155, 2147483648
        %v2170 = vmul.f32 %v2169, 1.442695
        %v2171 = vpow.pop %v2170
        %v2172 = vadd.f32 %v2171, 1.0
        %v2173 = vrcp.pop %v2172
        %v2174 = vmul.f32 1.0, %v2173
        %v2175 = vmul.f32 %v2167, %v2004
        %v2176 = vmul.f32 %v2161, %v2168
        %v2177 = vadd.f32 %v2175, %v2176
        %v2178 = vtanh.pop %v2177
        %v2179 = vmul.f32 %v2174, %v2178
        %2180 = vst [vmem:[#allocation3] sm:$0xff] %v2177
        %2181 = vst [vmem:[#allocation2] sm:$0xff] %v2179
        %s2182 = scalar_lea.vmem [#allocation5], 56
        %2183 = vst [vmem:[%s2182] sm:$0xff] %v2179
        %v2184 = vld [vmem:[#allocation5] sm:$0xff]
        %v2185 = vld [vmem:[#allocation5 + $0x8] sm:$0xff]
        %v2186 = vld [vmem:[#allocation5 + $0x10] sm:$0xff]
        %v2187 = vld [vmem:[#allocation5 + $0x18] sm:$0xff]
        %v2188 = vld [vmem:[#allocation5 + $0x20] sm:$0xff]
        %v2189 = vld [vmem:[#allocation5 + $0x28] sm:$0xff]
        %v2190 = vld [vmem:[#allocation5 + $0x30] sm:$0xff]
        %v2191 = vld [vmem:[#allocation5 + $0x38] sm:$0xff]
        %v2192 = vld [vmem:[#allocation12] sm:$0xff]
        %v2193 = vld [vmem:[#allocation12 + $0x8] sm:$0xff]
        %v2194 = vld [vmem:[#allocation12 + $0x10] sm:$0xff]
        %v2195 = vld [vmem:[#allocation12 + $0x18] sm:$0xff]
        %v2196 = vld [vmem:[#allocation12 + $0x20] sm:$0xff]
        %v2197 = vld [vmem:[#allocation12 + $0x28] sm:$0xff]
        %v2198 = vld [vmem:[#allocation12 + $0x30] sm:$0xff]
        %v2199 = vld [vmem:[#allocation12 + $0x38] sm:$0xff]
        %v2200 = vld [vmem:[#allocation12 + $0x40] sm:$0xff]
        %v2201 = vld [vmem:[#allocation12 + $0x48] sm:$0xff]
        %v2202 = vld [vmem:[#allocation12 + $0x50] sm:$0xff]
        %v2203 = vld [vmem:[#allocation12 + $0x58] sm:$0xff]
        %v2204 = vld [vmem:[#allocation12 + $0x60] sm:$0xff]
        %v2205 = vld [vmem:[#allocation12 + $0x68] sm:$0xff]
        %v2206 = vld [vmem:[#allocation12 + $0x70] sm:$0xff]
        %v2207 = vld [vmem:[#allocation12 + $0x78] sm:$0xff]
        %v2208 = vld [vmem:[%s5] sm:$0x1]
        %v2210 = vlaneseq
        %v2211 = vshrl.u32 %v2210, 7
        %v2212 = vsub.s32 0, %v2211
        %v2213 = vrot.slane %v2208, %v2212
        %2215 = vmatprep.subr.mxu0 0.0
        %2216 = vmatpush1.msra.mxu0 %v2207
        %2217 = vmatprep.subr.mxu0 0.0
        %2218 = vmatpush1.msra.mxu0 %v2206
        %2219 = vmatprep.subr.mxu0 0.0
        %2220 = vmatpush1.msra.mxu0 %v2205
        %2221 = vmatprep.subr.mxu0 0.0
        %2222 = vmatpush1.msra.mxu0 %v2204
        %2223 = vmatprep.subr.mxu0 0.0
        %2224 = vmatpush1.msra.mxu0 %v2203
        %2225 = vmatprep.subr.mxu0 0.0
        %2226 = vmatpush1.msra.mxu0 %v2202
        %2227 = vmatprep.subr.mxu0 0.0
        %2228 = vmatpush1.msra.mxu0 %v2201
        %2229 = vmatprep.subr.mxu0 0.0
        %2230 = vmatpush1.msra.mxu0 %v2200
        %2231 = vmatprep.subr.mxu0 0.0
        %2232 = vmatpush1.msra.mxu0 %v2199
        %2233 = vmatprep.subr.mxu0 0.0
        %2234 = vmatpush1.msra.mxu0 %v2198
        %2235 = vmatprep.subr.mxu0 0.0
        %2236 = vmatpush1.msra.mxu0 %v2197
        %2237 = vmatprep.subr.mxu0 0.0
        %2238 = vmatpush1.msra.mxu0 %v2196
        %2239 = vmatprep.subr.mxu0 0.0
        %2240 = vmatpush1.msra.mxu0 %v2195
        %2241 = vmatprep.subr.mxu0 0.0
        %2242 = vmatpush1.msra.mxu0 %v2194
        %2243 = vmatprep.subr.mxu0 0.0
        %2244 = vmatpush1.msra.mxu0 %v2193
        %2245 = vmatprep.subr.mxu0 0.0
        %2246 = vmatpush1.msra.mxu0 %v2192
        %2247 = vmatprep.subr.mxu0 0.0
        %2248 = vmatpush2.msra.mxu0 0.0
        %2249 = vmatprep.subr.mxu0 0.0
        %2250 = vmatpush2.msra.mxu0 0.0
        %2251 = vmatprep.subr.mxu0 0.0
        %2252 = vmatpush2.msra.mxu0 0.0
        %2253 = vmatprep.subr.mxu0 0.0
        %2254 = vmatpush2.msra.mxu0 0.0
        %2255 = vmatprep.subr.mxu0 0.0
        %2256 = vmatpush2.msra.mxu0 0.0
        %2257 = vmatprep.subr.mxu0 0.0
        %2258 = vmatpush2.msra.mxu0 0.0
        %2259 = vmatprep.subr.mxu0 0.0
        %2260 = vmatpush2.msra.mxu0 0.0
        %2261 = vmatprep.subr.mxu0 0.0
        %2262 = vmatpush2.msra.mxu0 0.0
        %2263 = vmatprep.subr.mxu0 0.0
        %2264 = vmatpush2.msra.mxu0 0.0
        %2265 = vmatprep.subr.mxu0 0.0
        %2266 = vmatpush2.msra.mxu0 0.0
        %2267 = vmatprep.subr.mxu0 0.0
        %2268 = vmatpush2.msra.mxu0 0.0
        %2269 = vmatprep.subr.mxu0 0.0
        %2270 = vmatpush2.msra.mxu0 0.0
        %2271 = vmatprep.subr.mxu0 0.0
        %2272 = vmatpush2.msra.mxu0 0.0
        %2273 = vmatprep.subr.mxu0 0.0
        %2274 = vmatpush2.msra.mxu0 0.0
        %2275 = vmatprep.subr.mxu0 0.0
        %2276 = vmatpush2.msra.mxu0 0.0
        %2277 = vmatprep.subr.mxu0 0.0
        %2278 = vmatpush2.msra.mxu0 0.0
        %2279 = vmatprep.mubr.f32.mxu0 0.0
        %2280 = vmatmul.mubr.f32.gmra.mxu0 %v2184
        %v2281 = vpop.f32.mrf.mxu0
        %v2282 = vadd.f32 %v2213, %v2281
        %v2283 = vpop.f32.mrf.mxu0
        %2284 = vmatprep.mubr.f32.mxu0 0.0
        %2285 = vmatmul.mubr.f32.gmra.mxu0 %v2185
        %v2286 = vpop.f32.mrf.mxu0
        %v2287 = vadd.f32 %v2213, %v2286
        %v2288 = vpop.f32.mrf.mxu0
        %2289 = vmatprep.mubr.f32.mxu0 0.0
        %2290 = vmatmul.mubr.f32.gmra.mxu0 %v2186
        %v2291 = vpop.f32.mrf.mxu0
        %v2292 = vadd.f32 %v2213, %v2291
        %v2293 = vpop.f32.mrf.mxu0
        %2294 = vmatprep.mubr.f32.mxu0 0.0
        %2295 = vmatmul.mubr.f32.gmra.mxu0 %v2187
        %v2296 = vpop.f32.mrf.mxu0
        %v2297 = vadd.f32 %v2213, %v2296
        %v2298 = vpop.f32.mrf.mxu0
        %2299 = vmatprep.mubr.f32.mxu0 0.0
        %2300 = vmatmul.mubr.f32.gmra.mxu0 %v2188
        %v2301 = vpop.f32.mrf.mxu0
        %v2302 = vadd.f32 %v2213, %v2301
        %v2303 = vpop.f32.mrf.mxu0
        %2304 = vmatprep.mubr.f32.mxu0 0.0
        %2305 = vmatmul.mubr.f32.gmra.mxu0 %v2189
        %v2306 = vpop.f32.mrf.mxu0
        %v2307 = vadd.f32 %v2213, %v2306
        %v2308 = vpop.f32.mrf.mxu0
        %2309 = vmatprep.mubr.f32.mxu0 0.0
        %2310 = vmatmul.mubr.f32.gmra.mxu0 %v2190
        %v2311 = vpop.f32.mrf.mxu0
        %v2312 = vadd.f32 %v2213, %v2311
        %v2313 = vpop.f32.mrf.mxu0
        %2314 = vmatprep.mubr.f32.mxu0 0.0
        %2315 = vmatmul.mubr.f32.gmra.mxu0 %v2191
        %v2316 = vpop.f32.mrf.mxu0
        %v2317 = vadd.f32 %v2213, %v2316
        %v2318 = vpop.f32.mrf.mxu0
        %2319 = vdwg.mxu0
        %2320 = vst [vmem:[%s313] sm:$0xff] %v2282
        %2321 = vst [vmem:[%s313 + $0x8] sm:$0xff] %v2287
        %2322 = vst [vmem:[%s313 + $0x10] sm:$0xff] %v2292
        %2323 = vst [vmem:[%s313 + $0x18] sm:$0xff] %v2297
        %2324 = vst [vmem:[%s313 + $0x20] sm:$0xff] %v2302
        %2325 = vst [vmem:[%s313 + $0x28] sm:$0xff] %v2307
        %2326 = vst [vmem:[%s313 + $0x30] sm:$0xff] %v2312
        %2327 = vst [vmem:[%s313 + $0x38] sm:$0xff] %v2317
        %s2328 = sand.u32 %s164, 1
        %s2329 = scalar_lea.sflag [#allocation8], %s2328
        %s2330 = sand.u32 %s164, 1
        %s2331 = smul.addr %s2330, 64
        %s2332 = scalar_lea.vmem [#allocation14], %s2331
        // Predicated region
        $region65: #{tpu_custom_call.1} parent=43 // pred_check
          %p2333 = pneg %p174
        $region66: #{tpu_custom_call.1} parent=43 // pred_check_branch
          %2335 = sbr.rel (%p2333) target = $region68
        $region67: #{tpu_custom_call.1} parent=43 // pred_region
          %s2336 = smul.u32 8, %s25
          %s2338 = ssub.s32 1024, 1024
          %2339 = vsyncadd %s2329, %s2338
          %s2340 = smul.addr %s2336, 128
          %s2341 = scalar_lea.hbm %s6, %s2340
          %s2342 = sshll.u32 %s2332, 4
          %s2343 = int_to_ptr.vmem [resolvable:$true] %s2342
          %2348 = dma.vmem_to_hbm [thread:$0]  %s2343, 1024, %s2341, %s2329, 128, 128, 8
        $region68: #{tpu_custom_call.1} parent=43 // pred_fallthru
          _
      $region44: #{tpu_custom_call.1} parent=5 // pred_fallthru
        _
      %p2349 = scmp.le.s32.totalorder 2, %s20
      // Predicated region
      $region69: #{tpu_custom_call.1} parent=5 // pred_check
        %p2350 = pneg %p2349
      $region70: #{tpu_custom_call.1} parent=5 // pred_check_branch
        %2352 = sbr.rel (%p2350) target = $region72
      $region71: #{tpu_custom_call.1} parent=5 // pred_region
        %s2353 = ssub.s32 %s20, 2
        // Predicated region
        $region73: #{tpu_custom_call.1} parent=71 // pred_check
          %p2354 = pneg %p180
        $region74: #{tpu_custom_call.1} parent=71 // pred_check_branch
          %2356 = sbr.rel (%p2354) target = $region76
        $region75: #{tpu_custom_call.1} parent=71 // pred_region
          %s2357 = sand.u32 %s165, 1
          %s2358 = scalar_lea.sflag [#allocation8], %s2357
          %s2359 = sand.u32 %s165, 1
          %s2360 = smul.addr %s2359, 64
          %s2361 = scalar_lea.vmem [#allocation14], %s2360
          %2362 = dma.done %s2358, 1024
        $region76: #{tpu_custom_call.1} parent=71 // pred_fallthru
          _
      $region72: #{tpu_custom_call.1} parent=5 // pred_fallthru
        _
    $region6: #{tpu_custom_call.1} parent=1 // loop_footer
      %s24 = sadd.s32 1, %s20
    $region7: #{tpu_custom_call.1} parent=1 // loop_footer_branch
      %19 = sbr.rel target = $region3
    $region8: #{tpu_custom_call.1} parent=1 // loop_exit
      _
    %2363 = vsyncpa [#allocation7], 1
    %s2364 = scalar_lea.sflag [#allocation7], 1
    %2365 = vsyncpa %s2364, 1
    %2366 = vsyncpa [#allocation10], 1
    %2367 = vsyncpa [#allocation13], 1
    %2368 = vsyncpa [#allocation8], 1
    %s2369 = scalar_lea.sflag [#allocation8], 1
    %2370 = vsyncpa %s2369, 1

</llo_original>
